<compile_context>
chip_gen: v7x
topology: tpu7x:2x2x1
jax: 0.10.0
libtpu: 0.0.40
codegen_flags: <defaults>
</compile_context>

<pallas_src>
import functools

import jax
import jax.numpy as jnp
from jax.experimental import pallas as pl
from jax.experimental.pallas import tpu as pltpu


def _round_up(x, m):
    return ((x + m - 1) // m) * m


# ----------------------------------------------------------------------------
# Pallas kernels
# ----------------------------------------------------------------------------
def _matmul_bias_kernel(a_ref, w_ref, b_ref, o_ref, *, relu):
    # (TM, K) @ (K, N) on the MXU with f32 accumulation; bias + ReLU in f32.
    acc = jnp.dot(a_ref[...], w_ref[...], preferred_element_type=jnp.float32)
    acc = acc + b_ref[...]                      # b_ref: (1, N) f32, broadcast
    if relu:
        acc = jnp.maximum(acc, 0.0)
    o_ref[...] = acc.astype(o_ref.dtype)


def matmul_bias(a, w, b2, *, relu, out_dtype, tm=256):
    """a: (M, K), w: (K, N) with N % 128 == 0, b2: (1, N) f32 -> (M, N)."""
    M, K = a.shape
    K2, N = w.shape
    assert K == K2 and N % 128 == 0 and b2.shape == (1, N)
    a = a.astype(w.dtype)                       # bf16 MXU path

    tm_eff = min(tm, _round_up(M, 8))
    Mp = _round_up(M, tm_eff)
    if Mp != M:
        a = jnp.pad(a, ((0, Mp - M), (0, 0)))

    out = pl.pallas_call(
        functools.partial(_matmul_bias_kernel, relu=relu),
        out_shape=jax.ShapeDtypeStruct((Mp, N), out_dtype),
        grid=(Mp // tm_eff,),
        in_specs=[
            pl.BlockSpec((tm_eff, K), lambda i: (i, 0)),  # streamed A tiles
            pl.BlockSpec((K, N), lambda i: (0, 0)),       # resident weight
            pl.BlockSpec((1, N), lambda i: (0, 0)),       # resident bias
        ],
        out_specs=pl.BlockSpec((tm_eff, N), lambda i: (i, 0)),
        compiler_params=pltpu.CompilerParams(
            dimension_semantics=("parallel",)),
    )(a, w, b2)
    return out[:M] if Mp != M else out


def _pool2x2_kernel(x_ref, o_ref, *, w, w2, c):
    # x_ref: (tb, 2*W*C) -- two consecutive image rows per block row, lane
    # order (row_pair, width, channel) with C a multiple of 128.
    x = x_ref[...]
    wc = w * c
    # Vertical max: contiguous lane halves, no relayout.
    m = jnp.maximum(x[:, :wc], x[:, wc:])                      # (tb, W*C)
    # Horizontal max: adjacent 128-lane-aligned channel blocks; each store is
    # a full-width (tb, C) lane-dense write.
    for k in range(w2):
        lo = (2 * k) * c
        o_ref[:, k * c:(k + 1) * c] = jnp.maximum(
            m[:, lo:lo + c], m[:, lo + c:lo + 2 * c])


def max_pool_2x2_nhwc(x, *, tb=256):
    """x: (N, H, W, C), H/W even, C % 128 == 0 -> (N, H//2, W//2, C)."""
    n, h, w, c = x.shape
    h2, w2 = h // 2, w // 2
    rows = n * h2
    x2 = x.reshape(rows, 2 * w * c)             # contiguous reshape (no copy)

    tb_eff = min(tb, _round_up(rows, 8))
    rp = _round_up(rows, tb_eff)
    if rp != rows:
        x2 = jnp.pad(x2, ((0, rp - rows), (0, 0)))

    out = pl.pallas_call(
        functools.partial(_pool2x2_kernel, w=w, w2=w2, c=c),
        out_shape=jax.ShapeDtypeStruct((rp, w2 * c), x.dtype),
        grid=(rp // tb_eff,),
        in_specs=[pl.BlockSpec((tb_eff, 2 * w * c), lambda i: (i, 0))],
        out_specs=pl.BlockSpec((tb_eff, w2 * c), lambda i: (i, 0)),
        compiler_params=pltpu.CompilerParams(
            dimension_semantics=("parallel",)),
    )(x2)
    if rp != rows:
        out = out[:rows]
    return out.reshape(n, h2, w2, c)


# ----------------------------------------------------------------------------
# Conv-as-matmul glue (NHWC, stride 1, valid padding)
# ----------------------------------------------------------------------------
def im2col_nhwc(x, kh, kw):
    """x: (N, H, W, C) -> (N*Ho*Wo, kh*kw*C); column order (kh, kw, C)."""
    n, h, w, c = x.shape
    ho, wo = h - kh + 1, w - kw + 1
    cols = [x[:, i:i + ho, j:j + wo, :] for i in range(kh) for j in range(kw)]
    cols = jnp.concatenate(cols, axis=-1)        # (N, Ho, Wo, kh*kw*C)
    return cols.reshape(n * ho * wo, kh * kw * c), (n, ho, wo)


# ----------------------------------------------------------------------------
# Parameters
# ----------------------------------------------------------------------------
def init_params(key):
    ks = jax.random.split(key, 8)

    def u(k, shape, fan_in):
        bound = 1.0 / jnp.sqrt(fan_in)
        return jax.random.uniform(k, shape, jnp.float32, -bound, bound)

    return {
        "conv1_w": u(ks[0], (20, 1, 5, 5), 1 * 5 * 5),
        "conv1_b": u(ks[1], (20,), 1 * 5 * 5),
        "conv2_w": u(ks[2], (50, 20, 5, 5), 20 * 5 * 5),
        "conv2_b": u(ks[3], (50,), 20 * 5 * 5),
        "fc1_w": u(ks[4], (500, 800), 800),   # PyTorch Linear: (out, in)
        "fc1_b": u(ks[5], (500,), 800),
        "fc2_w": u(ks[6], (10, 500), 500),
        "fc2_b": u(ks[7], (10,), 500),
    }


C_PAD = 128      # lane-padded conv output channels (20 -> 128, 50 -> 128)
FC1_N = 512      # 500 -> 512
FC2_N = 128      # 10  -> 128


def prepare_params(params, compute_dtype=jnp.bfloat16):
    """One-time weight relayout: transpose to (K, N), zero-pad lane dims to
    multiples of 128, cast to bf16.  Biases stay f32 (f32 epilogue)."""
    # conv1: OIHW (20,1,5,5) -> (kh,kw,C,O) -> (25, 20) -> (25, 128)
    c1 = params["conv1_w"].transpose(2, 3, 1, 0).reshape(25, 20)
    c1 = jnp.pad(c1, ((0, 0), (0, C_PAD - 20))).astype(compute_dtype)
    c1b = jnp.pad(params["conv1_b"], (0, C_PAD - 20)).reshape(1, C_PAD)

    # conv2: OIHW (50,20,5,5) -> (kh,kw,C,O) -> (500, 50) -> (500, 128)
    c2 = params["conv2_w"].transpose(2, 3, 1, 0).reshape(500, 50)
    c2 = jnp.pad(c2, ((0, 0), (0, C_PAD - 50))).astype(compute_dtype)
    c2b = jnp.pad(params["conv2_b"], (0, C_PAD - 50)).reshape(1, C_PAD)

    # fc1: (500, 800) with features in PyTorch (c, h, w) order.  Re-order to
    # the NHWC flatten order (h, w, c) and zero-pad c 50 -> 128 so the pooled
    # (N, 4, 4, 128) activation flattens directly (no slice / transpose).
    f1 = params["fc1_w"].reshape(500, 50, 4, 4).transpose(0, 2, 3, 1)
    f1 = jnp.pad(f1, ((0, 0), (0, 0), (0, 0), (0, C_PAD - 50)))
    f1 = f1.reshape(500, 4 * 4 * C_PAD).T                     # (2048, 500)
    f1 = jnp.pad(f1, ((0, 0), (0, FC1_N - 500))).astype(compute_dtype)
    f1b = jnp.pad(params["fc1_b"], (0, FC1_N - 500)).reshape(1, FC1_N)

    # fc2: (10, 500) -> (500, 10) -> pad K 500->512 (fc1 pad cols are exactly
    # zero) and N 10->128.
    f2 = jnp.pad(params["fc2_w"].T, ((0, FC1_N - 500), (0, FC2_N - 10)))
    f2 = f2.astype(compute_dtype)
    f2b = jnp.pad(params["fc2_b"], (0, FC2_N - 10)).reshape(1, FC2_N)

    return {
        "conv1_w": c1, "conv1_b": c1b,
        "conv2_w": c2, "conv2_b": c2b,
        "fc1_w": f1, "fc1_b": f1b,
        "fc2_w": f2, "fc2_b": f2b,
    }


# ----------------------------------------------------------------------------
# LeNet5 forward
# ----------------------------------------------------------------------------
def lenet5_forward(p, x):
    """x: (N, 1, 28, 28) f32 (PyTorch NCHW) -> (N, 10) f32 logits."""
    n = x.shape[0]
    cdt = p["conv1_w"].dtype

    # Single layout change at the external boundary; bf16 from here on.
    x = x.transpose(0, 2, 3, 1).astype(cdt)                   # (N, 28, 28, 1)

    # conv1 + ReLU -> pool
    a, (_, ho, wo) = im2col_nhwc(x, 5, 5)                     # (N*576, 25)
    y = matmul_bias(a, p["conv1_w"], p["conv1_b"], relu=True, out_dtype=cdt)
    y = y.reshape(n, ho, wo, C_PAD)                           # (N, 24, 24, 128)
    y = max_pool_2x2_nhwc(y)                                  # (N, 12, 12, 128)

    # conv2 + ReLU -> pool (real channels are the first 20 lanes)
    a, (_, ho, wo) = im2col_nhwc(y[:, :, :, :20], 5, 5)       # (N*64, 500)
    y = matmul_bias(a, p["conv2_w"], p["conv2_b"], relu=True, out_dtype=cdt)
    y = y.reshape(n, ho, wo, C_PAD)                           # (N, 8, 8, 128)
    y = max_pool_2x2_nhwc(y)                                  # (N, 4, 4, 128)

    # fc1 + ReLU: flatten in (h, w, c_padded) order; fc1_w was re-ordered /
    # zero-padded to match, so no slicing or transpose is needed here.
    y = y.reshape(n, 4 * 4 * C_PAD)                           # (N, 2048)
    y = matmul_bias(y, p["fc1_w"], p["fc1_b"], relu=True, out_dtype=cdt)

    # fc2 (logits kept in f32); logical outputs are the first 10 lanes.
    y = matmul_bias(y, p["fc2_w"], p["fc2_b"], relu=False,
                    out_dtype=jnp.float32)
    return y[:, :10]


def lenet5_reference(params, x):
    """Pure-JAX f32 reference (faithful to the PyTorch module)."""
    def conv(x, w, b):
        y = jax.lax.conv_general_dilated(
            x, w, window_strides=(1, 1), padding="VALID",
            dimension_numbers=("NCHW", "OIHW", "NCHW"))
        return jax.nn.relu(y + b[None, :, None, None])

    def pool(x):
        n, c, h, w = x.shape
        return x.reshape(n, c, h // 2, 2, w // 2, 2).max(axis=(3, 5))

    x = pool(conv(x, params["conv1_w"], params["conv1_b"]))
    x = pool(conv(x, params["conv2_w"], params["conv2_b"]))
    x = x.reshape(x.shape[0], 800)
    x = jax.nn.relu(x @ params["fc1_w"].T + params["fc1_b"])
    return x @ params["fc2_w"].T + params["fc2_b"]


if __name__ == "__main__":
    key = jax.random.PRNGKey(0)
    pkey, xkey = jax.random.split(key)
    params = init_params(pkey)
    x = jax.random.normal(xkey, (2, 1, 28, 28), jnp.float32)

    # Weight relayout / padding / bf16 cast happens exactly once, outside jit.
    prepped = prepare_params(params)

    fwd = jax.jit(lenet5_forward)
    out = jax.block_until_ready(fwd(prepped, x))
    assert out.shape == (2, 10)

    ref = jax.block_until_ready(lenet5_reference(params, x))
    # bf16 MXU path vs f32 reference: accept bf16-class error.
    assert jnp.allclose(out, ref, rtol=1e-1, atol=1e-1), "mismatch vs reference"

    print("KERNEL_OK")
</pallas_src>

<mosaic_0001>
module attributes {stable_mosaic.version = 11 : i64} {
  func.func @_matmul_bias_kernel(%arg0: i32, %arg1: memref<256x25xbf16, #tpu.memory_space<vmem>>, %arg2: memref<25x128xbf16, #tpu.memory_space<vmem>>, %arg3: memref<1x128xf32, #tpu.memory_space<vmem>>, %arg4: memref<256x128xbf16, #tpu.memory_space<vmem>>) attributes {dimension_semantics = [#tpu.dimension_semantics<parallel>], iteration_bounds = array<i64: 5>, scalar_prefetch = 0 : i64, scratch_operands = 0 : i64, tpu.core_type = #tpu.core_type<tc>, window_params = [{transform_indices = @transform_0, window_bounds = array<i64: 256, 25>}, {pipeline_mode = #tpu.pipeline_mode<synchronous>, transform_indices = @transform_1, window_bounds = array<i64: 25, 128>}, {pipeline_mode = #tpu.pipeline_mode<synchronous>, transform_indices = @transform_2, window_bounds = array<i64: 1, 128>}, {transform_indices = @transform_3, window_bounds = array<i64: 256, 128>}]} {
    %c0 = arith.constant 0 : index
    %c0_0 = arith.constant 0 : index
    %0 = vector.load %arg1[%c0, %c0_0] : memref<256x25xbf16, #tpu.memory_space<vmem>>, vector<256x25xbf16>
    %c0_1 = arith.constant 0 : index
    %c0_2 = arith.constant 0 : index
    %1 = vector.load %arg2[%c0_1, %c0_2] : memref<25x128xbf16, #tpu.memory_space<vmem>>, vector<25x128xbf16>
    %cst = arith.constant dense<0.000000e+00> : vector<256x128xf32>
    %2 = tpu.matmul %0, %1, %cst {dimension_numbers = #tpu.dot_dimension_numbers<[1], [0], [0], [1], [0, 0, 1, 1], [], []>} : vector<256x25xbf16>, vector<25x128xbf16>, vector<256x128xf32> -> vector<256x128xf32>
    %c0_3 = arith.constant 0 : index
    %c0_4 = arith.constant 0 : index
    %3 = vector.load %arg3[%c0_3, %c0_4] : memref<1x128xf32, #tpu.memory_space<vmem>>, vector<1x128xf32>
    %4 = vector.broadcast %3 : vector<1x128xf32> to vector<256x128xf32>
    %5 = arith.addf %2, %4 : vector<256x128xf32>
    %cst_5 = arith.constant 0.000000e+00 : f32
    %6 = vector.broadcast %cst_5 : f32 to vector<256x128xf32>
    %7 = arith.maximumf %5, %6 : vector<256x128xf32>
    %8 = arith.truncf %7 : vector<256x128xf32> to vector<256x128xbf16>
    %c0_6 = arith.constant 0 : index
    %c0_7 = arith.constant 0 : index
    %9 = vector.load %arg4[%c0_6, %c0_7] : memref<256x128xbf16, #tpu.memory_space<vmem>>, vector<256x128xbf16>
    tpu.vector_store %arg4[%c0_6, %c0_7], %8 {strides = array<i32>} : memref<256x128xbf16, #tpu.memory_space<vmem>>, vector<256x128xbf16>,
    return
  }
  func.func @transform_0(%arg0: i32) -> (i32, i32) {
    %c0_i32 = arith.constant 0 : i32
    %c0_i32_0 = arith.constant 0 : i32
    return %arg0, %c0_i32 : i32, i32
  }
  func.func @transform_1(%arg0: i32) -> (i32, i32) {
    %c0_i32 = arith.constant 0 : i32
    %c0_i32_0 = arith.constant 0 : i32
    %c0_i32_1 = arith.constant 0 : i32
    return %c0_i32, %c0_i32_0 : i32, i32
  }
  func.func @transform_2(%arg0: i32) -> (i32, i32) {
    %c0_i32 = arith.constant 0 : i32
    %c0_i32_0 = arith.constant 0 : i32
    %c0_i32_1 = arith.constant 0 : i32
    return %c0_i32, %c0_i32_0 : i32, i32
  }
  func.func @transform_3(%arg0: i32) -> (i32, i32) {
    %c0_i32 = arith.constant 0 : i32
    %c0_i32_0 = arith.constant 0 : i32
    return %arg0, %c0_i32 : i32, i32
  }
}

module attributes {stable_mosaic.version = 11 : i64} {
  func.func @_pool2x2_kernel(%arg0: i32, %arg1: memref<24x6144xbf16, #tpu.memory_space<vmem>>, %arg2: memref<24x1536xbf16, #tpu.memory_space<vmem>>) attributes {dimension_semantics = [#tpu.dimension_semantics<parallel>], iteration_bounds = array<i64: 1>, scalar_prefetch = 0 : i64, scratch_operands = 0 : i64, tpu.core_type = #tpu.core_type<tc>, window_params = [{transform_indices = @transform_0, window_bounds = array<i64: 24, 6144>}, {transform_indices = @transform_1, window_bounds = array<i64: 24, 1536>}]} {
    %c0 = arith.constant 0 : index
    %c0_0 = arith.constant 0 : index
    %0 = vector.load %arg1[%c0, %c0_0] : memref<24x6144xbf16, #tpu.memory_space<vmem>>, vector<24x6144xbf16>
    %1 = vector.extract_strided_slice %0 {offsets = [0, 0], sizes = [24, 3072], strides = [1, 1]} : vector<24x6144xbf16> to vector<24x3072xbf16>
    %2 = vector.extract_strided_slice %0 {offsets = [0, 3072], sizes = [24, 3072], strides = [1, 1]} : vector<24x6144xbf16> to vector<24x3072xbf16>
    %3 = arith.maximumf %1, %2 : vector<24x3072xbf16>
    %4 = vector.extract_strided_slice %3 {offsets = [0, 0], sizes = [24, 128], strides = [1, 1]} : vector<24x3072xbf16> to vector<24x128xbf16>
    %5 = vector.extract_strided_slice %3 {offsets = [0, 128], sizes = [24, 128], strides = [1, 1]} : vector<24x3072xbf16> to vector<24x128xbf16>
    %6 = arith.maximumf %4, %5 : vector<24x128xbf16>
    %c0_1 = arith.constant 0 : index
    %c0_2 = arith.constant 0 : index
    %7 = vector.load %arg2[%c0_1, %c0_2] : memref<24x1536xbf16, #tpu.memory_space<vmem>>, vector<24x128xbf16>
    tpu.vector_store %arg2[%c0_1, %c0_2], %6 {strides = array<i32>} : memref<24x1536xbf16, #tpu.memory_space<vmem>>, vector<24x128xbf16>,
    %8 = vector.extract_strided_slice %3 {offsets = [0, 256], sizes = [24, 128], strides = [1, 1]} : vector<24x3072xbf16> to vector<24x128xbf16>
    %9 = vector.extract_strided_slice %3 {offsets = [0, 384], sizes = [24, 128], strides = [1, 1]} : vector<24x3072xbf16> to vector<24x128xbf16>
    %10 = arith.maximumf %8, %9 : vector<24x128xbf16>
    %c0_3 = arith.constant 0 : index
    %c128 = arith.constant 128 : index
    %11 = vector.load %arg2[%c0_3, %c128] : memref<24x1536xbf16, #tpu.memory_space<vmem>>, vector<24x128xbf16>
    tpu.vector_store %arg2[%c0_3, %c128], %10 {strides = array<i32>} : memref<24x1536xbf16, #tpu.memory_space<vmem>>, vector<24x128xbf16>,
    %12 = vector.extract_strided_slice %3 {offsets = [0, 512], sizes = [24, 128], strides = [1, 1]} : vector<24x3072xbf16> to vector<24x128xbf16>
    %13 = vector.extract_strided_slice %3 {offsets = [0, 640], sizes = [24, 128], strides = [1, 1]} : vector<24x3072xbf16> to vector<24x128xbf16>
    %14 = arith.maximumf %12, %13 : vector<24x128xbf16>
    %c0_4 = arith.constant 0 : index
    %c256 = arith.constant 256 : index
    %15 = vector.load %arg2[%c0_4, %c256] : memref<24x1536xbf16, #tpu.memory_space<vmem>>, vector<24x128xbf16>
    tpu.vector_store %arg2[%c0_4, %c256], %14 {strides = array<i32>} : memref<24x1536xbf16, #tpu.memory_space<vmem>>, vector<24x128xbf16>,
    %16 = vector.extract_strided_slice %3 {offsets = [0, 768], sizes = [24, 128], strides = [1, 1]} : vector<24x3072xbf16> to vector<24x128xbf16>
    %17 = vector.extract_strided_slice %3 {offsets = [0, 896], sizes = [24, 128], strides = [1, 1]} : vector<24x3072xbf16> to vector<24x128xbf16>
    %18 = arith.maximumf %16, %17 : vector<24x128xbf16>
    %c0_5 = arith.constant 0 : index
    %c384 = arith.constant 384 : index
    %19 = vector.load %arg2[%c0_5, %c384] : memref<24x1536xbf16, #tpu.memory_space<vmem>>, vector<24x128xbf16>
    tpu.vector_store %arg2[%c0_5, %c384], %18 {strides = array<i32>} : memref<24x1536xbf16, #tpu.memory_space<vmem>>, vector<24x128xbf16>,
    %20 = vector.extract_strided_slice %3 {offsets = [0, 1024], sizes = [24, 128], strides = [1, 1]} : vector<24x3072xbf16> to vector<24x128xbf16>
    %21 = vector.extract_strided_slice %3 {offsets = [0, 1152], sizes = [24, 128], strides = [1, 1]} : vector<24x3072xbf16> to vector<24x128xbf16>
    %22 = arith.maximumf %20, %21 : vector<24x128xbf16>
    %c0_6 = arith.constant 0 : index
    %c512 = arith.constant 512 : index
    %23 = vector.load %arg2[%c0_6, %c512] : memref<24x1536xbf16, #tpu.memory_space<vmem>>, vector<24x128xbf16>
    tpu.vector_store %arg2[%c0_6, %c512], %22 {strides = array<i32>} : memref<24x1536xbf16, #tpu.memory_space<vmem>>, vector<24x128xbf16>,
    %24 = vector.extract_strided_slice %3 {offsets = [0, 1280], sizes = [24, 128], strides = [1, 1]} : vector<24x3072xbf16> to vector<24x128xbf16>
    %25 = vector.extract_strided_slice %3 {offsets = [0, 1408], sizes = [24, 128], strides = [1, 1]} : vector<24x3072xbf16> to vector<24x128xbf16>
    %26 = arith.maximumf %24, %25 : vector<24x128xbf16>
    %c0_7 = arith.constant 0 : index
    %c640 = arith.constant 640 : index
    %27 = vector.load %arg2[%c0_7, %c640] : memref<24x1536xbf16, #tpu.memory_space<vmem>>, vector<24x128xbf16>
    tpu.vector_store %arg2[%c0_7, %c640], %26 {strides = array<i32>} : memref<24x1536xbf16, #tpu.memory_space<vmem>>, vector<24x128xbf16>,
    %28 = vector.extract_strided_slice %3 {offsets = [0, 1536], sizes = [24, 128], strides = [1, 1]} : vector<24x3072xbf16> to vector<24x128xbf16>
    %29 = vector.extract_strided_slice %3 {offsets = [0, 1664], sizes = [24, 128], strides = [1, 1]} : vector<24x3072xbf16> to vector<24x128xbf16>
    %30 = arith.maximumf %28, %29 : vector<24x128xbf16>
    %c0_8 = arith.constant 0 : index
    %c768 = arith.constant 768 : index
    %31 = vector.load %arg2[%c0_8, %c768] : memref<24x1536xbf16, #tpu.memory_space<vmem>>, vector<24x128xbf16>
    tpu.vector_store %arg2[%c0_8, %c768], %30 {strides = array<i32>} : memref<24x1536xbf16, #tpu.memory_space<vmem>>, vector<24x128xbf16>,
    %32 = vector.extract_strided_slice %3 {offsets = [0, 1792], sizes = [24, 128], strides = [1, 1]} : vector<24x3072xbf16> to vector<24x128xbf16>
    %33 = vector.extract_strided_slice %3 {offsets = [0, 1920], sizes = [24, 128], strides = [1, 1]} : vector<24x3072xbf16> to vector<24x128xbf16>
    %34 = arith.maximumf %32, %33 : vector<24x128xbf16>
    %c0_9 = arith.constant 0 : index
    %c896 = arith.constant 896 : index
    %35 = vector.load %arg2[%c0_9, %c896] : memref<24x1536xbf16, #tpu.memory_space<vmem>>, vector<24x128xbf16>
    tpu.vector_store %arg2[%c0_9, %c896], %34 {strides = array<i32>} : memref<24x1536xbf16, #tpu.memory_space<vmem>>, vector<24x128xbf16>,
    %36 = vector.extract_strided_slice %3 {offsets = [0, 2048], sizes = [24, 128], strides = [1, 1]} : vector<24x3072xbf16> to vector<24x128xbf16>
    %37 = vector.extract_strided_slice %3 {offsets = [0, 2176], sizes = [24, 128], strides = [1, 1]} : vector<24x3072xbf16> to vector<24x128xbf16>
    %38 = arith.maximumf %36, %37 : vector<24x128xbf16>
    %c0_10 = arith.constant 0 : index
    %c1024 = arith.constant 1024 : index
    %39 = vector.load %arg2[%c0_10, %c1024] : memref<24x1536xbf16, #tpu.memory_space<vmem>>, vector<24x128xbf16>
    tpu.vector_store %arg2[%c0_10, %c1024], %38 {strides = array<i32>} : memref<24x1536xbf16, #tpu.memory_space<vmem>>, vector<24x128xbf16>,
    %40 = vector.extract_strided_slice %3 {offsets = [0, 2304], sizes = [24, 128], strides = [1, 1]} : vector<24x3072xbf16> to vector<24x128xbf16>
    %41 = vector.extract_strided_slice %3 {offsets = [0, 2432], sizes = [24, 128], strides = [1, 1]} : vector<24x3072xbf16> to vector<24x128xbf16>
    %42 = arith.maximumf %40, %41 : vector<24x128xbf16>
    %c0_11 = arith.constant 0 : index
    %c1152 = arith.constant 1152 : index
    %43 = vector.load %arg2[%c0_11, %c1152] : memref<24x1536xbf16, #tpu.memory_space<vmem>>, vector<24x128xbf16>
    tpu.vector_store %arg2[%c0_11, %c1152], %42 {strides = array<i32>} : memref<24x1536xbf16, #tpu.memory_space<vmem>>, vector<24x128xbf16>,
    %44 = vector.extract_strided_slice %3 {offsets = [0, 2560], sizes = [24, 128], strides = [1, 1]} : vector<24x3072xbf16> to vector<24x128xbf16>
    %45 = vector.extract_strided_slice %3 {offsets = [0, 2688], sizes = [24, 128], strides = [1, 1]} : vector<24x3072xbf16> to vector<24x128xbf16>
    %46 = arith.maximumf %44, %45 : vector<24x128xbf16>
    %c0_12 = arith.constant 0 : index
    %c1280 = arith.constant 1280 : index
    %47 = vector.load %arg2[%c0_12, %c1280] : memref<24x1536xbf16, #tpu.memory_space<vmem>>, vector<24x128xbf16>
    tpu.vector_store %arg2[%c0_12, %c1280], %46 {strides = array<i32>} : memref<24x1536xbf16, #tpu.memory_space<vmem>>, vector<24x128xbf16>,
    %48 = vector.extract_strided_slice %3 {offsets = [0, 2816], sizes = [24, 128], strides = [1, 1]} : vector<24x3072xbf16> to vector<24x128xbf16>
    %49 = vector.extract_strided_slice %3 {offsets = [0, 2944], sizes = [24, 128], strides = [1, 1]} : vector<24x3072xbf16> to vector<24x128xbf16>
    %50 = arith.maximumf %48, %49 : vector<24x128xbf16>
    %c0_13 = arith.constant 0 : index
    %c1408 = arith.constant 1408 : index
    %51 = vector.load %arg2[%c0_13, %c1408] : memref<24x1536xbf16, #tpu.memory_space<vmem>>, vector<24x128xbf16>
    tpu.vector_store %arg2[%c0_13, %c1408], %50 {strides = array<i32>} : memref<24x1536xbf16, #tpu.memory_space<vmem>>, vector<24x128xbf16>,
    return
  }
  func.func @transform_0(%arg0: i32) -> (i32, i32) {
    %c0_i32 = arith.constant 0 : i32
    %c0_i32_0 = arith.constant 0 : i32
    return %arg0, %c0_i32 : i32, i32
  }
  func.func @transform_1(%arg0: i32) -> (i32, i32) {
    %c0_i32 = arith.constant 0 : i32
    %c0_i32_0 = arith.constant 0 : i32
    return %arg0, %c0_i32 : i32, i32
  }
}

module attributes {stable_mosaic.version = 11 : i64} {
  func.func @_matmul_bias_kernel(%arg0: i32, %arg1: memref<128x500xbf16, #tpu.memory_space<vmem>>, %arg2: memref<500x128xbf16, #tpu.memory_space<vmem>>, %arg3: memref<1x128xf32, #tpu.memory_space<vmem>>, %arg4: memref<128x128xbf16, #tpu.memory_space<vmem>>) attributes {dimension_semantics = [#tpu.dimension_semantics<parallel>], iteration_bounds = array<i64: 1>, scalar_prefetch = 0 : i64, scratch_operands = 0 : i64, tpu.core_type = #tpu.core_type<tc>, window_params = [{transform_indices = @transform_0, window_bounds = array<i64: 128, 500>}, {pipeline_mode = #tpu.pipeline_mode<synchronous>, transform_indices = @transform_1, window_bounds = array<i64: 500, 128>}, {pipeline_mode = #tpu.pipeline_mode<synchronous>, transform_indices = @transform_2, window_bounds = array<i64: 1, 128>}, {transform_indices = @transform_3, window_bounds = array<i64: 128, 128>}]} {
    %c0 = arith.constant 0 : index
    %c0_0 = arith.constant 0 : index
    %0 = vector.load %arg1[%c0, %c0_0] : memref<128x500xbf16, #tpu.memory_space<vmem>>, vector<128x500xbf16>
    %c0_1 = arith.constant 0 : index
    %c0_2 = arith.constant 0 : index
    %1 = vector.load %arg2[%c0_1, %c0_2] : memref<500x128xbf16, #tpu.memory_space<vmem>>, vector<500x128xbf16>
    %cst = arith.constant dense<0.000000e+00> : vector<128x128xf32>
    %2 = tpu.matmul %0, %1, %cst {dimension_numbers = #tpu.dot_dimension_numbers<[1], [0], [0], [1], [0, 0, 1, 1], [], []>} : vector<128x500xbf16>, vector<500x128xbf16>, vector<128x128xf32> -> vector<128x128xf32>
    %c0_3 = arith.constant 0 : index
    %c0_4 = arith.constant 0 : index
    %3 = vector.load %arg3[%c0_3, %c0_4] : memref<1x128xf32, #tpu.memory_space<vmem>>, vector<1x128xf32>
    %4 = vector.broadcast %3 : vector<1x128xf32> to vector<128x128xf32>
    %5 = arith.addf %2, %4 : vector<128x128xf32>
    %cst_5 = arith.constant 0.000000e+00 : f32
    %6 = vector.broadcast %cst_5 : f32 to vector<128x128xf32>
    %7 = arith.maximumf %5, %6 : vector<128x128xf32>
    %8 = arith.truncf %7 : vector<128x128xf32> to vector<128x128xbf16>
    %c0_6 = arith.constant 0 : index
    %c0_7 = arith.constant 0 : index
    %9 = vector.load %arg4[%c0_6, %c0_7] : memref<128x128xbf16, #tpu.memory_space<vmem>>, vector<128x128xbf16>
    tpu.vector_store %arg4[%c0_6, %c0_7], %8 {strides = array<i32>} : memref<128x128xbf16, #tpu.memory_space<vmem>>, vector<128x128xbf16>,
    return
  }
  func.func @transform_0(%arg0: i32) -> (i32, i32) {
    %c0_i32 = arith.constant 0 : i32
    %c0_i32_0 = arith.constant 0 : i32
    return %arg0, %c0_i32 : i32, i32
  }
  func.func @transform_1(%arg0: i32) -> (i32, i32) {
    %c0_i32 = arith.constant 0 : i32
    %c0_i32_0 = arith.constant 0 : i32
    %c0_i32_1 = arith.constant 0 : i32
    return %c0_i32, %c0_i32_0 : i32, i32
  }
  func.func @transform_2(%arg0: i32) -> (i32, i32) {
    %c0_i32 = arith.constant 0 : i32
    %c0_i32_0 = arith.constant 0 : i32
    %c0_i32_1 = arith.constant 0 : i32
    return %c0_i32, %c0_i32_0 : i32, i32
  }
  func.func @transform_3(%arg0: i32) -> (i32, i32) {
    %c0_i32 = arith.constant 0 : i32
    %c0_i32_0 = arith.constant 0 : i32
    return %arg0, %c0_i32 : i32, i32
  }
}

module attributes {stable_mosaic.version = 11 : i64} {
  func.func @_pool2x2_kernel(%arg0: i32, %arg1: memref<8x2048xbf16, #tpu.memory_space<vmem>>, %arg2: memref<8x512xbf16, #tpu.memory_space<vmem>>) attributes {dimension_semantics = [#tpu.dimension_semantics<parallel>], iteration_bounds = array<i64: 1>, scalar_prefetch = 0 : i64, scratch_operands = 0 : i64, tpu.core_type = #tpu.core_type<tc>, window_params = [{transform_indices = @transform_0, window_bounds = array<i64: 8, 2048>}, {transform_indices = @transform_1, window_bounds = array<i64: 8, 512>}]} {
    %c0 = arith.constant 0 : index
    %c0_0 = arith.constant 0 : index
    %0 = vector.load %arg1[%c0, %c0_0] : memref<8x2048xbf16, #tpu.memory_space<vmem>>, vector<8x2048xbf16>
    %1 = vector.extract_strided_slice %0 {offsets = [0, 0], sizes = [8, 1024], strides = [1, 1]} : vector<8x2048xbf16> to vector<8x1024xbf16>
    %2 = vector.extract_strided_slice %0 {offsets = [0, 1024], sizes = [8, 1024], strides = [1, 1]} : vector<8x2048xbf16> to vector<8x1024xbf16>
    %3 = arith.maximumf %1, %2 : vector<8x1024xbf16>
    %4 = vector.extract_strided_slice %3 {offsets = [0, 0], sizes = [8, 128], strides = [1, 1]} : vector<8x1024xbf16> to vector<8x128xbf16>
    %5 = vector.extract_strided_slice %3 {offsets = [0, 128], sizes = [8, 128], strides = [1, 1]} : vector<8x1024xbf16> to vector<8x128xbf16>
    %6 = arith.maximumf %4, %5 : vector<8x128xbf16>
    %c0_1 = arith.constant 0 : index
    %c0_2 = arith.constant 0 : index
    %7 = vector.load %arg2[%c0_1, %c0_2] : memref<8x512xbf16, #tpu.memory_space<vmem>>, vector<8x128xbf16>
    tpu.vector_store %arg2[%c0_1, %c0_2], %6 {strides = array<i32>} : memref<8x512xbf16, #tpu.memory_space<vmem>>, vector<8x128xbf16>,
    %8 = vector.extract_strided_slice %3 {offsets = [0, 256], sizes = [8, 128], strides = [1, 1]} : vector<8x1024xbf16> to vector<8x128xbf16>
    %9 = vector.extract_strided_slice %3 {offsets = [0, 384], sizes = [8, 128], strides = [1, 1]} : vector<8x1024xbf16> to vector<8x128xbf16>
    %10 = arith.maximumf %8, %9 : vector<8x128xbf16>
    %c0_3 = arith.constant 0 : index
    %c128 = arith.constant 128 : index
    %11 = vector.load %arg2[%c0_3, %c128] : memref<8x512xbf16, #tpu.memory_space<vmem>>, vector<8x128xbf16>
    tpu.vector_store %arg2[%c0_3, %c128], %10 {strides = array<i32>} : memref<8x512xbf16, #tpu.memory_space<vmem>>, vector<8x128xbf16>,
    %12 = vector.extract_strided_slice %3 {offsets = [0, 512], sizes = [8, 128], strides = [1, 1]} : vector<8x1024xbf16> to vector<8x128xbf16>
    %13 = vector.extract_strided_slice %3 {offsets = [0, 640], sizes = [8, 128], strides = [1, 1]} : vector<8x1024xbf16> to vector<8x128xbf16>
    %14 = arith.maximumf %12, %13 : vector<8x128xbf16>
    %c0_4 = arith.constant 0 : index
    %c256 = arith.constant 256 : index
    %15 = vector.load %arg2[%c0_4, %c256] : memref<8x512xbf16, #tpu.memory_space<vmem>>, vector<8x128xbf16>
    tpu.vector_store %arg2[%c0_4, %c256], %14 {strides = array<i32>} : memref<8x512xbf16, #tpu.memory_space<vmem>>, vector<8x128xbf16>,
    %16 = vector.extract_strided_slice %3 {offsets = [0, 768], sizes = [8, 128], strides = [1, 1]} : vector<8x1024xbf16> to vector<8x128xbf16>
    %17 = vector.extract_strided_slice %3 {offsets = [0, 896], sizes = [8, 128], strides = [1, 1]} : vector<8x1024xbf16> to vector<8x128xbf16>
    %18 = arith.maximumf %16, %17 : vector<8x128xbf16>
    %c0_5 = arith.constant 0 : index
    %c384 = arith.constant 384 : index
    %19 = vector.load %arg2[%c0_5, %c384] : memref<8x512xbf16, #tpu.memory_space<vmem>>, vector<8x128xbf16>
    tpu.vector_store %arg2[%c0_5, %c384], %18 {strides = array<i32>} : memref<8x512xbf16, #tpu.memory_space<vmem>>, vector<8x128xbf16>,
    return
  }
  func.func @transform_0(%arg0: i32) -> (i32, i32) {
    %c0_i32 = arith.constant 0 : i32
    %c0_i32_0 = arith.constant 0 : i32
    return %arg0, %c0_i32 : i32, i32
  }
  func.func @transform_1(%arg0: i32) -> (i32, i32) {
    %c0_i32 = arith.constant 0 : i32
    %c0_i32_0 = arith.constant 0 : i32
    return %arg0, %c0_i32 : i32, i32
  }
}

module attributes {stable_mosaic.version = 11 : i64} {
  func.func @_matmul_bias_kernel(%arg0: i32, %arg1: memref<8x2048xbf16, #tpu.memory_space<vmem>>, %arg2: memref<2048x512xbf16, #tpu.memory_space<vmem>>, %arg3: memref<1x512xf32, #tpu.memory_space<vmem>>, %arg4: memref<8x512xbf16, #tpu.memory_space<vmem>>) attributes {dimension_semantics = [#tpu.dimension_semantics<parallel>], iteration_bounds = array<i64: 1>, scalar_prefetch = 0 : i64, scratch_operands = 0 : i64, tpu.core_type = #tpu.core_type<tc>, window_params = [{transform_indices = @transform_0, window_bounds = array<i64: 8, 2048>}, {pipeline_mode = #tpu.pipeline_mode<synchronous>, transform_indices = @transform_1, window_bounds = array<i64: 2048, 512>}, {pipeline_mode = #tpu.pipeline_mode<synchronous>, transform_indices = @transform_2, window_bounds = array<i64: 1, 512>}, {transform_indices = @transform_3, window_bounds = array<i64: 8, 512>}]} {
    %c0 = arith.constant 0 : index
    %c0_0 = arith.constant 0 : index
    %0 = vector.load %arg1[%c0, %c0_0] : memref<8x2048xbf16, #tpu.memory_space<vmem>>, vector<8x2048xbf16>
    %c0_1 = arith.constant 0 : index
    %c0_2 = arith.constant 0 : index
    %1 = vector.load %arg2[%c0_1, %c0_2] : memref<2048x512xbf16, #tpu.memory_space<vmem>>, vector<2048x512xbf16>
    %cst = arith.constant dense<0.000000e+00> : vector<8x512xf32>
    %2 = tpu.matmul %0, %1, %cst {dimension_numbers = #tpu.dot_dimension_numbers<[1], [0], [0], [1], [0, 0, 1, 1], [], []>} : vector<8x2048xbf16>, vector<2048x512xbf16>, vector<8x512xf32> -> vector<8x512xf32>
    %c0_3 = arith.constant 0 : index
    %c0_4 = arith.constant 0 : index
    %3 = vector.load %arg3[%c0_3, %c0_4] : memref<1x512xf32, #tpu.memory_space<vmem>>, vector<1x512xf32>
    %4 = vector.broadcast %3 : vector<1x512xf32> to vector<8x512xf32>
    %5 = arith.addf %2, %4 : vector<8x512xf32>
    %cst_5 = arith.constant 0.000000e+00 : f32
    %6 = vector.broadcast %cst_5 : f32 to vector<8x512xf32>
    %7 = arith.maximumf %5, %6 : vector<8x512xf32>
    %8 = arith.truncf %7 : vector<8x512xf32> to vector<8x512xbf16>
    %c0_6 = arith.constant 0 : index
    %c0_7 = arith.constant 0 : index
    %9 = vector.load %arg4[%c0_6, %c0_7] : memref<8x512xbf16, #tpu.memory_space<vmem>>, vector<8x512xbf16>
    tpu.vector_store %arg4[%c0_6, %c0_7], %8 {strides = array<i32>} : memref<8x512xbf16, #tpu.memory_space<vmem>>, vector<8x512xbf16>,
    return
  }
  func.func @transform_0(%arg0: i32) -> (i32, i32) {
    %c0_i32 = arith.constant 0 : i32
    %c0_i32_0 = arith.constant 0 : i32
    return %arg0, %c0_i32 : i32, i32
  }
  func.func @transform_1(%arg0: i32) -> (i32, i32) {
    %c0_i32 = arith.constant 0 : i32
    %c0_i32_0 = arith.constant 0 : i32
    %c0_i32_1 = arith.constant 0 : i32
    return %c0_i32, %c0_i32_0 : i32, i32
  }
  func.func @transform_2(%arg0: i32) -> (i32, i32) {
    %c0_i32 = arith.constant 0 : i32
    %c0_i32_0 = arith.constant 0 : i32
    %c0_i32_1 = arith.constant 0 : i32
    return %c0_i32, %c0_i32_0 : i32, i32
  }
  func.func @transform_3(%arg0: i32) -> (i32, i32) {
    %c0_i32 = arith.constant 0 : i32
    %c0_i32_0 = arith.constant 0 : i32
    return %arg0, %c0_i32 : i32, i32
  }
}

module attributes {stable_mosaic.version = 11 : i64} {
  func.func @_matmul_bias_kernel(%arg0: i32, %arg1: memref<8x512xbf16, #tpu.memory_space<vmem>>, %arg2: memref<512x128xbf16, #tpu.memory_space<vmem>>, %arg3: memref<1x128xf32, #tpu.memory_space<vmem>>, %arg4: memref<8x128xf32, #tpu.memory_space<vmem>>) attributes {dimension_semantics = [#tpu.dimension_semantics<parallel>], iteration_bounds = array<i64: 1>, scalar_prefetch = 0 : i64, scratch_operands = 0 : i64, tpu.core_type = #tpu.core_type<tc>, window_params = [{transform_indices = @transform_0, window_bounds = array<i64: 8, 512>}, {pipeline_mode = #tpu.pipeline_mode<synchronous>, transform_indices = @transform_1, window_bounds = array<i64: 512, 128>}, {pipeline_mode = #tpu.pipeline_mode<synchronous>, transform_indices = @transform_2, window_bounds = array<i64: 1, 128>}, {transform_indices = @transform_3, window_bounds = array<i64: 8, 128>}]} {
    %c0 = arith.constant 0 : index
    %c0_0 = arith.constant 0 : index
    %0 = vector.load %arg1[%c0, %c0_0] : memref<8x512xbf16, #tpu.memory_space<vmem>>, vector<8x512xbf16>
    %c0_1 = arith.constant 0 : index
    %c0_2 = arith.constant 0 : index
    %1 = vector.load %arg2[%c0_1, %c0_2] : memref<512x128xbf16, #tpu.memory_space<vmem>>, vector<512x128xbf16>
    %cst = arith.constant dense<0.000000e+00> : vector<8x128xf32>
    %2 = tpu.matmul %0, %1, %cst {dimension_numbers = #tpu.dot_dimension_numbers<[1], [0], [0], [1], [0, 0, 1, 1], [], []>} : vector<8x512xbf16>, vector<512x128xbf16>, vector<8x128xf32> -> vector<8x128xf32>
    %c0_3 = arith.constant 0 : index
    %c0_4 = arith.constant 0 : index
    %3 = vector.load %arg3[%c0_3, %c0_4] : memref<1x128xf32, #tpu.memory_space<vmem>>, vector<1x128xf32>
    %4 = vector.broadcast %3 : vector<1x128xf32> to vector<8x128xf32>
    %5 = arith.addf %2, %4 : vector<8x128xf32>
    %c0_5 = arith.constant 0 : index
    %c0_6 = arith.constant 0 : index
    %6 = vector.load %arg4[%c0_5, %c0_6] : memref<8x128xf32, #tpu.memory_space<vmem>>, vector<8x128xf32>
    tpu.vector_store %arg4[%c0_5, %c0_6], %5 {strides = array<i32>} : memref<8x128xf32, #tpu.memory_space<vmem>>, vector<8x128xf32>,
    return
  }
  func.func @transform_0(%arg0: i32) -> (i32, i32) {
    %c0_i32 = arith.constant 0 : i32
    %c0_i32_0 = arith.constant 0 : i32
    return %arg0, %c0_i32 : i32, i32
  }
  func.func @transform_1(%arg0: i32) -> (i32, i32) {
    %c0_i32 = arith.constant 0 : i32
    %c0_i32_0 = arith.constant 0 : i32
    %c0_i32_1 = arith.constant 0 : i32
    return %c0_i32, %c0_i32_0 : i32, i32
  }
  func.func @transform_2(%arg0: i32) -> (i32, i32) {
    %c0_i32 = arith.constant 0 : i32
    %c0_i32_0 = arith.constant 0 : i32
    %c0_i32_1 = arith.constant 0 : i32
    return %c0_i32, %c0_i32_0 : i32, i32
  }
  func.func @transform_3(%arg0: i32) -> (i32, i32) {
    %c0_i32 = arith.constant 0 : i32
    %c0_i32_0 = arith.constant 0 : i32
    return %arg0, %c0_i32 : i32, i32
  }
}

</mosaic_0001>

<llo_original>
// kernel: lenet5_forward.6
$region0: #{lenet5_forward.6}
  #allocation0 [shape = 'u32[]', space=smem, size = 0x4, offset = 0x4, fixed_abs, tag = 'smem constant byte address 0x4 - core index']
  #allocation1 [shape = 'u32[144,128]{1,0:T(1,128)}', space=vmem, size = 0x12000, scoped, tag = 'internal scratch']
  %s0 = inlined_call_operand.vmem [shape: bf16[1280,25], index: 0, kind: input, shape index: {}]
  %s1 = inlined_call_operand.hbm [shape: bf16[25,128], index: 1, kind: input, shape index: {}]
  %s2 = inlined_call_operand.hbm [shape: f32[1,128], index: 2, kind: input, shape index: {}]
  %s3 = inlined_call_operand.vmem [shape: bf16[1280,128], index: 3, kind: output, shape index: {}]
  %s4 = sld [smem:[#allocation0]]
  $region53: #{lenet5_forward.6} parent=0
    _
  %s6 = ssub.s32 1, %s4
  %s7 = scalar_select 0, %s6, %s4
  $region1: #{lenet5_forward.6} parent=0
    #allocation2 [shape = 'u8[8192]{0}', space=vmem, size = 0x2000, scoped, tag = 'input window, operand 1, single buffered']
    #allocation3 [shape = 's32[2]{0}', space=sflag, size = 0x8, scoped, tag = 'scoped memory for lenet5_forward.6']
    #allocation4 [shape = 'u8[512]{0}', space=vmem, size = 0x400, scoped, tag = 'input window, operand 2, single buffered']
    #allocation5 [shape = 's32[1]{0}', space=sflag, size = 0x4, scoped, tag = 'scoped memory for lenet5_forward.6']
    %8 = vsyncpa [#allocation3], 0
    %9 = vsyncpa [#allocation5], 0
    loop: start=0, step=1, limit=7
    $region2: #{lenet5_forward.6} parent=1 // loop_pre_header
      _
    $region3: #{lenet5_forward.6} parent=1 // loop_header
      %s11 = sphi 0, %s15
      %p12 = scmp.ge.s32.totalorder %s11, 7
      %s21 = sphi 0, %s23
      %s24 = sphi 0, %s21
      %s25 = sphi 0, %s24
      %s41 = sphi 0, %s25
      %s45 = sphi 0, %s45
      %s47 = sphi 0, %s45
      %s48 = sphi 0, %s47
      %s62 = sphi 0, %s48
      %s66 = sphi 0, %s66
      %s68 = sphi 0, %s66
      %s69 = sphi 0, %s68
      %s83 = sphi 0, %s69
      %s89 = sphi 0, %s91
      %s92 = sphi 0, %s89
      %s93 = sphi 0, %s92
      %s109 = sphi 0, %s93
    $region4: #{lenet5_forward.6} parent=1 // loop_header_branch
      %14 = sbr.rel (%p12) target = $region8
    $region5: #{lenet5_forward.6} parent=1 // loop_body
      %s16 = ssub.s32 %s11, 1
      %s17 = ssub.s32 %s11, 2
      %s18 = sadd.s32 %s11, 1
      %s19 = ssub.s32 %s11, %s18
      %p20 = scmp.eq.s32.totalorder %s19, 0
      %s22 = sadd.s32 %s21, 1
      %s23 = scalar_select %p20, %s21, %s22
      %p26 = pneg %p20
      %p27 = scmp.eq.s32.totalorder %s11, 4
      %p28 = por %p26, %p27
      %p29 = scmp.ne.s32.totalorder %s21, %s24
      %p30 = scmp.eq.s32.totalorder %s11, 0
      %p31 = por %p29, %p30
      %p32 = scmp.ne.s32.totalorder %s21, %s24
      %p33 = scmp.eq.s32.totalorder %s16, 4
      %p34 = por %p32, %p33
      %p35 = scmp.ne.s32.totalorder %s24, %s25
      %p36 = scmp.eq.s32.totalorder %s16, 0
      %p37 = por %p35, %p36
      %p38 = scmp.ne.s32.totalorder %s24, %s25
      %p39 = scmp.eq.s32.totalorder %s17, 4
      %p40 = por %p38, %p39
      %p42 = scmp.ne.s32.totalorder %s25, %s41
      %p43 = scmp.eq.s32.totalorder %s17, 0
      %p44 = por %p42, %p43
      %s46 = sadd.s32 %s45, 1
      %p49 = scmp.eq.s32.totalorder %s11, 4
      %p50 = scmp.ne.s32.totalorder %s45, %s47
      %p51 = scmp.eq.s32.totalorder %s11, 0
      %p52 = por %p50, %p51
      %p53 = scmp.ne.s32.totalorder %s45, %s47
      %p54 = scmp.eq.s32.totalorder %s16, 4
      %p55 = por %p53, %p54
      %p56 = scmp.ne.s32.totalorder %s47, %s48
      %p57 = scmp.eq.s32.totalorder %s16, 0
      %p58 = por %p56, %p57
      %p59 = scmp.ne.s32.totalorder %s47, %s48
      %p60 = scmp.eq.s32.totalorder %s17, 4
      %p61 = por %p59, %p60
      %p63 = scmp.ne.s32.totalorder %s48, %s62
      %p64 = scmp.eq.s32.totalorder %s17, 0
      %p65 = por %p63, %p64
      %s67 = sadd.s32 %s66, 1
      %p70 = scmp.eq.s32.totalorder %s11, 4
      %p71 = scmp.ne.s32.totalorder %s66, %s68
      %p72 = scmp.eq.s32.totalorder %s11, 0
      %p73 = por %p71, %p72
      %p74 = scmp.ne.s32.totalorder %s66, %s68
      %p75 = scmp.eq.s32.totalorder %s16, 4
      %p76 = por %p74, %p75
      %p77 = scmp.ne.s32.totalorder %s68, %s69
      %p78 = scmp.eq.s32.totalorder %s16, 0
      %p79 = por %p77, %p78
      %p80 = scmp.ne.s32.totalorder %s68, %s69
      %p81 = scmp.eq.s32.totalorder %s17, 4
      %p82 = por %p80, %p81
      %p84 = scmp.ne.s32.totalorder %s69, %s83
      %p85 = scmp.eq.s32.totalorder %s17, 0
      %p86 = por %p84, %p85
      %s87 = ssub.s32 %s11, %s18
      %p88 = scmp.eq.s32.totalorder %s87, 0
      %s90 = sadd.s32 %s89, 1
      %s91 = scalar_select %p88, %s89, %s90
      %p94 = pneg %p88
      %p95 = scmp.eq.s32.totalorder %s11, 4
      %p96 = por %p94, %p95
      %p97 = scmp.ne.s32.totalorder %s89, %s92
      %p98 = scmp.eq.s32.totalorder %s11, 0
      %p99 = por %p97, %p98
      %p100 = scmp.ne.s32.totalorder %s89, %s92
      %p101 = scmp.eq.s32.totalorder %s16, 4
      %p102 = por %p100, %p101
      %p103 = scmp.ne.s32.totalorder %s92, %s93
      %p104 = scmp.eq.s32.totalorder %s16, 0
      %p105 = por %p103, %p104
      %p106 = scmp.ne.s32.totalorder %s92, %s93
      %p107 = scmp.eq.s32.totalorder %s17, 4
      %p108 = por %p106, %p107
      %p110 = scmp.ne.s32.totalorder %s93, %s109
      %p111 = scmp.eq.s32.totalorder %s17, 0
      %p112 = por %p110, %p111
      %p113 = scmp.le.s32.totalorder 1, %s11
      %p114 = scmp.lt.s32.totalorder %s11, 6
      %p115 = pnand %p113, %p114
      %p116 = pneg %p115
      // Predicated region
      $region9: #{lenet5_forward.6} parent=5 // pred_check
        _
      $region10: #{lenet5_forward.6} parent=5 // pred_check_branch
        %118 = sbr.rel (%p115) target = $region12
      $region11: #{lenet5_forward.6} parent=5 // pred_region
        %s119 = ssub.s32 %s11, 1
        // Predicated region
        $region13: #{lenet5_forward.6} parent=11 // pred_check
          %p120 = pneg %p58
        $region14: #{lenet5_forward.6} parent=11 // pred_check_branch
          %122 = sbr.rel (%p120) target = $region16
        $region15: #{lenet5_forward.6} parent=11 // pred_region
          %s124 = ssub.s32 256, 256
          %125 = vsyncadd [#allocation3], %s124
          %s126 = sshll.u32 [#allocation2], 4
          %s127 = int_to_ptr.vmem [resolvable:$true] %s126
          %132 = dma.hbm_to_vmem [thread:$0]  %s1, 256, %s127, [#allocation3], 64, 64, 4
        $region16: #{lenet5_forward.6} parent=11 // pred_fallthru
          _
        // Predicated region
        $region17: #{lenet5_forward.6} parent=11 // pred_check
          %p133 = pneg %p79
        $region18: #{lenet5_forward.6} parent=11 // pred_check_branch
          %135 = sbr.rel (%p133) target = $region20
        $region19: #{lenet5_forward.6} parent=11 // pred_region
          %s137 = ssub.s32 16, 16
          %138 = vsyncadd [#allocation5], %s137
          %s140 = sshll.u32 [#allocation4], 4
          %s141 = int_to_ptr.vmem [resolvable:$true] %s140
          %143 = dma.hbm_to_vmem [thread:$0]  %s2, 16, %s141, [#allocation5]
        $region20: #{lenet5_forward.6} parent=11 // pred_fallthru
          _
      $region12: #{lenet5_forward.6} parent=5 // pred_fallthru
        _
      %p144 = scmp.lt.s32.totalorder %s11, 5
      // Predicated region
      $region21: #{lenet5_forward.6} parent=5 // pred_check
        %p145 = pneg %p144
      $region22: #{lenet5_forward.6} parent=5 // pred_check_branch
        %147 = sbr.rel (%p145) target = $region24
      $region23: #{lenet5_forward.6} parent=5 // pred_region
        // Predicated region
        $region25: #{lenet5_forward.6} parent=23 // pred_check
          %p148 = pneg %p31
        $region26: #{lenet5_forward.6} parent=23 // pred_check_branch
          %150 = sbr.rel (%p148) target = $region28
        $region27: #{lenet5_forward.6} parent=23 // pred_region
          %s151 = smul.u32 32, %s11
          %p152 = scmp.lt.s32.totalorder %s151, 159
          %s153 = scalar_select %p152, %s151, 159
          %s154 = smul.addr %s153, 4
          %s155 = scalar_lea.vmem %s0, %s154
          %s156 = smul.u32 32, %s11
        $region28: #{lenet5_forward.6} parent=23 // pred_fallthru
          _
      $region24: #{lenet5_forward.6} parent=5 // pred_fallthru
        _
      %p157 = scmp.le.s32.totalorder 1, %s11
      %p158 = scmp.lt.s32.totalorder %s11, 6
      %p159 = pnand %p157, %p158
      %p160 = pneg %p159
      // Predicated region
      $region29: #{lenet5_forward.6} parent=5 // pred_check
        _
      $region30: #{lenet5_forward.6} parent=5 // pred_check_branch
        %162 = sbr.rel (%p159) target = $region32
      $region31: #{lenet5_forward.6} parent=5 // pred_region
        %s163 = ssub.s32 %s11, 1
        // Predicated region
        $region33: #{lenet5_forward.6} parent=31 // pred_check
          %p164 = pneg %p58
        $region34: #{lenet5_forward.6} parent=31 // pred_check_branch
          %166 = sbr.rel (%p164) target = $region36
        $region35: #{lenet5_forward.6} parent=31 // pred_region
          %167 = dma.done [#allocation3], 256
        $region36: #{lenet5_forward.6} parent=31 // pred_fallthru
          _
        // Predicated region
        $region37: #{lenet5_forward.6} parent=31 // pred_check
          %p168 = pneg %p79
        $region38: #{lenet5_forward.6} parent=31 // pred_check_branch
          %170 = sbr.rel (%p168) target = $region40
        $region39: #{lenet5_forward.6} parent=31 // pred_region
          %171 = dma.done [#allocation5], 16
        $region40: #{lenet5_forward.6} parent=31 // pred_fallthru
          _
        %s172 = smul.u32 32, %s16
        %p173 = scmp.lt.s32.totalorder %s172, 159
        %s174 = scalar_select %p173, %s172, 159
        %s175 = smul.addr %s174, 4
        %s176 = scalar_lea.vmem %s0, %s175
        %p177 = pneg %p37
        %p178 = pneg %p34
        %p179 = pneg %p58
        %p180 = pneg %p55
        %p181 = pneg %p79
        %p182 = pneg %p76
        %p183 = pneg %p105
        %p184 = pneg %p102
        %s185 = smul.u32 32, %s16
        %p186 = scmp.lt.s32.totalorder %s185, 159
        %s187 = scalar_select %p186, %s185, 159
        %s188 = smul.addr %s187, 4
        %s189 = scalar_lea.vmem %s3, %s188
        %s190 = smul.u32 32, %s16
        %p191 = scmp.lt.s32.totalorder %s190, 159
        %s192 = scalar_select %p191, %s190, 159
        %s193 = smul.addr %s192, 4
        %s194 = scalar_lea.vmem %s0, %s193
        %s195 = smul.u32 32, %s16
        %s196 = smul.u32 32, %s16
        %p197 = scmp.lt.s32.totalorder %s196, 159
        %s198 = scalar_select %p197, %s196, 159
        %s199 = smul.addr %s198, 4
        %s200 = scalar_lea.vmem %s3, %s199
        %s201 = smul.u32 32, %s16
        %v203 = vld [vmem:[%s194] sm:$0xf]
        %v204 = vld [vmem:[%s194 + $0x4] sm:$0xf]
        %v205 = vld [vmem:[%s194 + $0x8] sm:$0xf]
        %v206 = vld [vmem:[%s194 + $0xc] sm:$0xf]
        %v207 = vld [vmem:[%s194 + $0x10] sm:$0xf]
        %v208 = vld [vmem:[%s194 + $0x14] sm:$0xf]
        %v209 = vld [vmem:[%s194 + $0x18] sm:$0xf]
        %v210 = vld [vmem:[%s194 + $0x1c] sm:$0xf]
        %v211 = vld [vmem:[%s194 + $0x20] sm:$0xf]
        %v212 = vld [vmem:[%s194 + $0x24] sm:$0xf]
        %v213 = vld [vmem:[%s194 + $0x28] sm:$0xf]
        %v214 = vld [vmem:[%s194 + $0x2c] sm:$0xf]
        %v215 = vld [vmem:[%s194 + $0x30] sm:$0xf]
        %v216 = vld [vmem:[%s194 + $0x34] sm:$0xf]
        %v217 = vld [vmem:[%s194 + $0x38] sm:$0xf]
        %v218 = vld [vmem:[%s194 + $0x3c] sm:$0xf]
        %v219 = vld [vmem:[%s194 + $0x40] sm:$0xf]
        %v220 = vld [vmem:[%s194 + $0x44] sm:$0xf]
        %v221 = vld [vmem:[%s194 + $0x48] sm:$0xf]
        %v222 = vld [vmem:[%s194 + $0x4c] sm:$0xf]
        %v223 = vld [vmem:[%s194 + $0x50] sm:$0xf]
        %v224 = vld [vmem:[%s194 + $0x54] sm:$0xf]
        %v225 = vld [vmem:[%s194 + $0x58] sm:$0xf]
        %v226 = vld [vmem:[%s194 + $0x5c] sm:$0xf]
        %v227 = vld [vmem:[%s194 + $0x60] sm:$0xf]
        %v228 = vld [vmem:[%s194 + $0x64] sm:$0xf]
        %v229 = vld [vmem:[%s194 + $0x68] sm:$0xf]
        %v230 = vld [vmem:[%s194 + $0x6c] sm:$0xf]
        %v231 = vld [vmem:[%s194 + $0x70] sm:$0xf]
        %v232 = vld [vmem:[%s194 + $0x74] sm:$0xf]
        %v233 = vld [vmem:[%s194 + $0x78] sm:$0xf]
        %v234 = vld [vmem:[%s194 + $0x7c] sm:$0xf]
        %v235 = vld [vmem:[#allocation2] sm:$0xf]
        %v236 = vld [vmem:[#allocation2 + $0x4] sm:$0xf]
        %v237 = vld [vmem:[#allocation2 + $0x8] sm:$0xf]
        %v238 = vld [vmem:[#allocation2 + $0xc] sm:$0x1]
        %v239 = vld [vmem:[#allocation4] sm:$0x1]
        %v241 = vlaneseq
        %v242 = vshrl.u32 %v241, 7
        %v243 = vsub.s32 0, %v242
        %v244 = vrot.slane %v239, %v243
        %v278 = vunpack.c.l.b16 %v203
        %v279 = vunpack.c.l.b16 %v204
        %v280 = vunpack.c.l.b16 %v205
        %v281 = vunpack.c.l.b16 %v206
        %v282 = vunpack.c.l.b16 %v207
        %v283 = vunpack.c.l.b16 %v208
        %v284 = vunpack.c.l.b16 %v209
        %v285 = vunpack.c.l.b16 %v210
        %v286 = vunpack.c.l.b16 %v211
        %v287 = vunpack.c.l.b16 %v212
        %v288 = vunpack.c.l.b16 %v213
        %v289 = vunpack.c.l.b16 %v214
        %v290 = vunpack.c.l.b16 %v215
        %v291 = vunpack.c.l.b16 %v216
        %v292 = vunpack.c.l.b16 %v217
        %v293 = vunpack.c.l.b16 %v218
        %v294 = vunpack.c.l.b16 %v219
        %v295 = vunpack.c.l.b16 %v220
        %v296 = vunpack.c.l.b16 %v221
        %v297 = vunpack.c.l.b16 %v222
        %v298 = vunpack.c.l.b16 %v223
        %v299 = vunpack.c.l.b16 %v224
        %v300 = vunpack.c.l.b16 %v225
        %v301 = vunpack.c.l.b16 %v226
        %v302 = vunpack.c.l.b16 %v227
        %v303 = vunpack.c.l.b16 %v228
        %v304 = vunpack.c.l.b16 %v229
        %v305 = vunpack.c.l.b16 %v230
        %v306 = vunpack.c.l.b16 %v231
        %v307 = vunpack.c.l.b16 %v232
        %v308 = vunpack.c.l.b16 %v233
        %v309 = vunpack.c.l.b16 %v234
        %v310 = vpack.c.b16 %v279, %v278
        %v311 = vpack.c.b16 %v281, %v280
        %v312 = vpack.c.b16 %v283, %v282
        %v313 = vpack.c.b16 %v285, %v284
        %v314 = vpack.c.b16 %v287, %v286
        %v315 = vpack.c.b16 %v289, %v288
        %v316 = vpack.c.b16 %v291, %v290
        %v317 = vpack.c.b16 %v293, %v292
        %v318 = vpack.c.b16 %v295, %v294
        %v319 = vpack.c.b16 %v297, %v296
        %v320 = vpack.c.b16 %v299, %v298
        %v321 = vpack.c.b16 %v301, %v300
        %v322 = vpack.c.b16 %v303, %v302
        %v323 = vpack.c.b16 %v305, %v304
        %v324 = vpack.c.b16 %v307, %v306
        %v325 = vpack.c.b16 %v309, %v308
        %v330 = vunpack.c.l.b16 %v235
        %v331 = vunpack.c.l.b16 %v236
        %v332 = vunpack.c.l.b16 %v237
        %v333 = vunpack.c.l.b16 %v238
        %v334 = vpack.c.b16 %v331, %v330
        %v335 = vpack.c.b16 %v333, %v332
        %vm337 = vcmask 203776
        %v339 = vsel %vm337, %v310, 0
        %v342 = vsel %vm337, %v311, 0
        %v345 = vsel %vm337, %v312, 0
        %v348 = vsel %vm337, %v313, 0
        %v351 = vsel %vm337, %v314, 0
        %v354 = vsel %vm337, %v315, 0
        %v357 = vsel %vm337, %v316, 0
        %v360 = vsel %vm337, %v317, 0
        %v363 = vsel %vm337, %v318, 0
        %v366 = vsel %vm337, %v319, 0
        %v369 = vsel %vm337, %v320, 0
        %v372 = vsel %vm337, %v321, 0
        %v375 = vsel %vm337, %v322, 0
        %v378 = vsel %vm337, %v323, 0
        %v381 = vsel %vm337, %v324, 0
        %v384 = vsel %vm337, %v325, 0
        %vm386 = vcmask 1043456
        %vm387 = vcmask 1044480
        %v388 = vsel %vm386, 4294967295, 65535
        %v389 = vsel %vm387, %v388, 0
        %v391 = vand.u32 %v335, %v389
        %393 = vmatprep.subr.bf16.mxu0 0
        %394 = vmatpush1.bf16.msra.mxu0 %v334
        %395 = vmatprep.subr.bf16.mxu0 0
        %396 = vmatpush1.bf16.msra.mxu0 %v391
        %397 = vmatprep.subr.bf16.mxu0 0
        %398 = vmatpush1.bf16.msra.mxu0 0
        %399 = vmatprep.subr.bf16.mxu0 0
        %400 = vmatpush1.bf16.msra.mxu0 0
        %401 = vmatprep.subr.bf16.mxu0 0
        %402 = vmatpush1.bf16.msra.mxu0 0
        %403 = vmatprep.subr.bf16.mxu0 0
        %404 = vmatpush1.bf16.msra.mxu0 0
        %405 = vmatprep.subr.bf16.mxu0 0
        %406 = vmatpush1.bf16.msra.mxu0 0
        %407 = vmatprep.subr.bf16.mxu0 0
        %408 = vmatpush1.bf16.msra.mxu0 0
        %409 = vmatprep.subr.bf16.mxu0 0
        %410 = vmatpush1.bf16.msra.mxu0 0
        %411 = vmatprep.subr.bf16.mxu0 0
        %412 = vmatpush1.bf16.msra.mxu0 0
        %413 = vmatprep.subr.bf16.mxu0 0
        %414 = vmatpush1.bf16.msra.mxu0 0
        %415 = vmatprep.subr.bf16.mxu0 0
        %416 = vmatpush1.bf16.msra.mxu0 0
        %417 = vmatprep.subr.bf16.mxu0 0
        %418 = vmatpush1.bf16.msra.mxu0 0
        %419 = vmatprep.subr.bf16.mxu0 0
        %420 = vmatpush1.bf16.msra.mxu0 0
        %421 = vmatprep.subr.bf16.mxu0 0
        %422 = vmatpush1.bf16.msra.mxu0 0
        %423 = vmatprep.subr.bf16.mxu0 0
        %424 = vmatpush1.bf16.msra.mxu0 0
        %425 = vmatprep.mubr.bf16.mxu0 0
        %426 = vmatmul.mubr.bf16.gmra.mrb[0].mxu0 %v339
        %v427 = vpop.f32.mrb[0].mxu0
        %v428 = vadd.f32 %v244, %v427
        %v429 = vpop.f32.mrb[0].mxu0
        %v430 = vpop.f32.mrb[0].mxu0
        %v431 = vadd.f32 %v244, %v430
        %v432 = vpop.f32.mrb[0].mxu0
        %433 = vmatprep.mubr.bf16.mxu0 0
        %434 = vmatmul.mubr.bf16.gmra.mrb[0].mxu0 %v342
        %v435 = vpop.f32.mrb[0].mxu0
        %v436 = vadd.f32 %v244, %v435
        %v437 = vpop.f32.mrb[0].mxu0
        %v438 = vpop.f32.mrb[0].mxu0
        %v439 = vadd.f32 %v244, %v438
        %v440 = vpop.f32.mrb[0].mxu0
        %441 = vmatprep.mubr.bf16.mxu0 0
        %442 = vmatmul.mubr.bf16.gmra.mrb[0].mxu0 %v345
        %v443 = vpop.f32.mrb[0].mxu0
        %v444 = vadd.f32 %v244, %v443
        %v445 = vpop.f32.mrb[0].mxu0
        %v446 = vpop.f32.mrb[0].mxu0
        %v447 = vadd.f32 %v244, %v446
        %v448 = vpop.f32.mrb[0].mxu0
        %449 = vmatprep.mubr.bf16.mxu0 0
        %450 = vmatmul.mubr.bf16.gmra.mrb[0].mxu0 %v348
        %v451 = vpop.f32.mrb[0].mxu0
        %v452 = vadd.f32 %v244, %v451
        %v453 = vpop.f32.mrb[0].mxu0
        %v454 = vpop.f32.mrb[0].mxu0
        %v455 = vadd.f32 %v244, %v454
        %v456 = vpop.f32.mrb[0].mxu0
        %457 = vmatprep.mubr.bf16.mxu0 0
        %458 = vmatmul.mubr.bf16.gmra.mrb[0].mxu0 %v351
        %v459 = vpop.f32.mrb[0].mxu0
        %v460 = vadd.f32 %v244, %v459
        %v461 = vpop.f32.mrb[0].mxu0
        %v462 = vpop.f32.mrb[0].mxu0
        %v463 = vadd.f32 %v244, %v462
        %v464 = vpop.f32.mrb[0].mxu0
        %465 = vmatprep.mubr.bf16.mxu0 0
        %466 = vmatmul.mubr.bf16.gmra.mrb[0].mxu0 %v354
        %v467 = vpop.f32.mrb[0].mxu0
        %v468 = vadd.f32 %v244, %v467
        %v469 = vpop.f32.mrb[0].mxu0
        %v470 = vpop.f32.mrb[0].mxu0
        %v471 = vadd.f32 %v244, %v470
        %v472 = vpop.f32.mrb[0].mxu0
        %473 = vmatprep.mubr.bf16.mxu0 0
        %474 = vmatmul.mubr.bf16.gmra.mrb[0].mxu0 %v357
        %v475 = vpop.f32.mrb[0].mxu0
        %v476 = vadd.f32 %v244, %v475
        %v477 = vpop.f32.mrb[0].mxu0
        %v478 = vpop.f32.mrb[0].mxu0
        %v479 = vadd.f32 %v244, %v478
        %v480 = vpop.f32.mrb[0].mxu0
        %481 = vmatprep.mubr.bf16.mxu0 0
        %482 = vmatmul.mubr.bf16.gmra.mrb[0].mxu0 %v360
        %v483 = vpop.f32.mrb[0].mxu0
        %v484 = vadd.f32 %v244, %v483
        %v485 = vpop.f32.mrb[0].mxu0
        %v486 = vpop.f32.mrb[0].mxu0
        %v487 = vadd.f32 %v244, %v486
        %v488 = vpop.f32.mrb[0].mxu0
        %489 = vmatprep.mubr.bf16.mxu0 0
        %490 = vmatmul.mubr.bf16.gmra.mrb[0].mxu0 %v363
        %v491 = vpop.f32.mrb[0].mxu0
        %v492 = vadd.f32 %v244, %v491
        %v493 = vpop.f32.mrb[0].mxu0
        %v494 = vpop.f32.mrb[0].mxu0
        %v495 = vadd.f32 %v244, %v494
        %v496 = vpop.f32.mrb[0].mxu0
        %497 = vmatprep.mubr.bf16.mxu0 0
        %498 = vmatmul.mubr.bf16.gmra.mrb[0].mxu0 %v366
        %v499 = vpop.f32.mrb[0].mxu0
        %v500 = vadd.f32 %v244, %v499
        %v501 = vpop.f32.mrb[0].mxu0
        %v502 = vpop.f32.mrb[0].mxu0
        %v503 = vadd.f32 %v244, %v502
        %v504 = vpop.f32.mrb[0].mxu0
        %505 = vmatprep.mubr.bf16.mxu0 0
        %506 = vmatmul.mubr.bf16.gmra.mrb[0].mxu0 %v369
        %v507 = vpop.f32.mrb[0].mxu0
        %v508 = vadd.f32 %v244, %v507
        %v509 = vpop.f32.mrb[0].mxu0
        %v510 = vpop.f32.mrb[0].mxu0
        %v511 = vadd.f32 %v244, %v510
        %v512 = vpop.f32.mrb[0].mxu0
        %513 = vmatprep.mubr.bf16.mxu0 0
        %514 = vmatmul.mubr.bf16.gmra.mrb[0].mxu0 %v372
        %v515 = vpop.f32.mrb[0].mxu0
        %v516 = vadd.f32 %v244, %v515
        %v517 = vpop.f32.mrb[0].mxu0
        %v518 = vpop.f32.mrb[0].mxu0
        %v519 = vadd.f32 %v244, %v518
        %v520 = vpop.f32.mrb[0].mxu0
        %521 = vmatprep.mubr.bf16.mxu0 0
        %522 = vmatmul.mubr.bf16.gmra.mrb[0].mxu0 %v375
        %v523 = vpop.f32.mrb[0].mxu0
        %v524 = vadd.f32 %v244, %v523
        %v525 = vpop.f32.mrb[0].mxu0
        %v526 = vpop.f32.mrb[0].mxu0
        %v527 = vadd.f32 %v244, %v526
        %v528 = vpop.f32.mrb[0].mxu0
        %529 = vmatprep.mubr.bf16.mxu0 0
        %530 = vmatmul.mubr.bf16.gmra.mrb[0].mxu0 %v378
        %v531 = vpop.f32.mrb[0].mxu0
        %v532 = vadd.f32 %v244, %v531
        %v533 = vpop.f32.mrb[0].mxu0
        %v534 = vpop.f32.mrb[0].mxu0
        %v535 = vadd.f32 %v244, %v534
        %v536 = vpop.f32.mrb[0].mxu0
        %537 = vmatprep.mubr.bf16.mxu0 0
        %538 = vmatmul.mubr.bf16.gmra.mrb[0].mxu0 %v381
        %v539 = vpop.f32.mrb[0].mxu0
        %v540 = vadd.f32 %v244, %v539
        %v541 = vpop.f32.mrb[0].mxu0
        %v542 = vpop.f32.mrb[0].mxu0
        %v543 = vadd.f32 %v244, %v542
        %v544 = vpop.f32.mrb[0].mxu0
        %545 = vmatprep.mubr.bf16.mxu0 0
        %546 = vmatmul.mubr.bf16.gmra.mrb[0].mxu0 %v384
        %v547 = vpop.f32.mrb[0].mxu0
        %v548 = vadd.f32 %v244, %v547
        %v549 = vpop.f32.mrb[0].mxu0
        %v550 = vpop.f32.mrb[0].mxu0
        %v551 = vadd.f32 %v244, %v550
        %v552 = vpop.f32.mrb[0].mxu0
        %553 = vdwg.mxu0
        %v554 = vmax.f32 %v428, 0.0
        %v555 = vmax.f32 %v431, 0.0
        %v556 = vmax.f32 %v436, 0.0
        %v557 = vmax.f32 %v439, 0.0
        %v558 = vmax.f32 %v444, 0.0
        %v559 = vmax.f32 %v447, 0.0
        %v560 = vmax.f32 %v452, 0.0
        %v561 = vmax.f32 %v455, 0.0
        %v562 = vmax.f32 %v460, 0.0
        %v563 = vmax.f32 %v463, 0.0
        %v564 = vmax.f32 %v468, 0.0
        %v565 = vmax.f32 %v471, 0.0
        %v566 = vmax.f32 %v476, 0.0
        %v567 = vmax.f32 %v479, 0.0
        %v568 = vmax.f32 %v484, 0.0
        %v569 = vmax.f32 %v487, 0.0
        %v570 = vmax.f32 %v492, 0.0
        %v571 = vmax.f32 %v495, 0.0
        %v572 = vmax.f32 %v500, 0.0
        %v573 = vmax.f32 %v503, 0.0
        %v574 = vmax.f32 %v508, 0.0
        %v575 = vmax.f32 %v511, 0.0
        %v576 = vmax.f32 %v516, 0.0
        %v577 = vmax.f32 %v519, 0.0
        %v578 = vmax.f32 %v524, 0.0
        %v579 = vmax.f32 %v527, 0.0
        %v580 = vmax.f32 %v532, 0.0
        %v581 = vmax.f32 %v535, 0.0
        %v582 = vmax.f32 %v540, 0.0
        %v583 = vmax.f32 %v543, 0.0
        %v584 = vmax.f32 %v548, 0.0
        %v585 = vmax.f32 %v551, 0.0
        %v586 = vpack.c.bf16 %v555, %v554
        %v587 = vpack.c.bf16 %v557, %v556
        %v588 = vpack.c.bf16 %v559, %v558
        %v589 = vpack.c.bf16 %v561, %v560
        %v590 = vpack.c.bf16 %v563, %v562
        %v591 = vpack.c.bf16 %v565, %v564
        %v592 = vpack.c.bf16 %v567, %v566
        %v593 = vpack.c.bf16 %v569, %v568
        %v594 = vpack.c.bf16 %v571, %v570
        %v595 = vpack.c.bf16 %v573, %v572
        %v596 = vpack.c.bf16 %v575, %v574
        %v597 = vpack.c.bf16 %v577, %v576
        %v598 = vpack.c.bf16 %v579, %v578
        %v599 = vpack.c.bf16 %v581, %v580
        %v600 = vpack.c.bf16 %v583, %v582
        %v601 = vpack.c.bf16 %v585, %v584
        %v618 = vunpack.c.l.b16 %v586
        %v619 = vunpack.c.h.b16 %v586
        %v620 = vunpack.c.l.b16 %v587
        %v621 = vunpack.c.h.b16 %v587
        %v622 = vunpack.c.l.b16 %v588
        %v623 = vunpack.c.h.b16 %v588
        %v624 = vunpack.c.l.b16 %v589
        %v625 = vunpack.c.h.b16 %v589
        %v626 = vunpack.c.l.b16 %v590
        %v627 = vunpack.c.h.b16 %v590
        %v628 = vunpack.c.l.b16 %v591
        %v629 = vunpack.c.h.b16 %v591
        %v630 = vunpack.c.l.b16 %v592
        %v631 = vunpack.c.h.b16 %v592
        %v632 = vunpack.c.l.b16 %v593
        %v633 = vunpack.c.h.b16 %v593
        %v634 = vunpack.c.l.b16 %v594
        %v635 = vunpack.c.h.b16 %v594
        %v636 = vunpack.c.l.b16 %v595
        %v637 = vunpack.c.h.b16 %v595
        %v638 = vunpack.c.l.b16 %v596
        %v639 = vunpack.c.h.b16 %v596
        %v640 = vunpack.c.l.b16 %v597
        %v641 = vunpack.c.h.b16 %v597
        %v642 = vunpack.c.l.b16 %v598
        %v643 = vunpack.c.h.b16 %v598
        %v644 = vunpack.c.l.b16 %v599
        %v645 = vunpack.c.h.b16 %v599
        %v646 = vunpack.c.l.b16 %v600
        %v647 = vunpack.c.h.b16 %v600
        %v648 = vunpack.c.l.b16 %v601
        %v649 = vunpack.c.h.b16 %v601
        %v650 = vpack.c.b16 %v618, %v618
        %v651 = vpack.c.b16 %v619, %v619
        %v652 = vpack.c.b16 %v620, %v620
        %v653 = vpack.c.b16 %v621, %v621
        %v654 = vpack.c.b16 %v622, %v622
        %v655 = vpack.c.b16 %v623, %v623
        %v656 = vpack.c.b16 %v624, %v624
        %v657 = vpack.c.b16 %v625, %v625
        %v658 = vpack.c.b16 %v626, %v626
        %v659 = vpack.c.b16 %v627, %v627
        %v660 = vpack.c.b16 %v628, %v628
        %v661 = vpack.c.b16 %v629, %v629
        %v662 = vpack.c.b16 %v630, %v630
        %v663 = vpack.c.b16 %v631, %v631
        %v664 = vpack.c.b16 %v632, %v632
        %v665 = vpack.c.b16 %v633, %v633
        %v666 = vpack.c.b16 %v634, %v634
        %v667 = vpack.c.b16 %v635, %v635
        %v668 = vpack.c.b16 %v636, %v636
        %v669 = vpack.c.b16 %v637, %v637
        %v670 = vpack.c.b16 %v638, %v638
        %v671 = vpack.c.b16 %v639, %v639
        %v672 = vpack.c.b16 %v640, %v640
        %v673 = vpack.c.b16 %v641, %v641
        %v674 = vpack.c.b16 %v642, %v642
        %v675 = vpack.c.b16 %v643, %v643
        %v676 = vpack.c.b16 %v644, %v644
        %v677 = vpack.c.b16 %v645, %v645
        %v678 = vpack.c.b16 %v646, %v646
        %v679 = vpack.c.b16 %v647, %v647
        %v680 = vpack.c.b16 %v648, %v648
        %v681 = vpack.c.b16 %v649, %v649
        %714 = vst [vmem:[%s200] sm:$0xf] %v650
        %715 = vst [vmem:[%s200 + $0x4] sm:$0xf] %v651
        %716 = vst [vmem:[%s200 + $0x8] sm:$0xf] %v652
        %717 = vst [vmem:[%s200 + $0xc] sm:$0xf] %v653
        %718 = vst [vmem:[%s200 + $0x10] sm:$0xf] %v654
        %719 = vst [vmem:[%s200 + $0x14] sm:$0xf] %v655
        %720 = vst [vmem:[%s200 + $0x18] sm:$0xf] %v656
        %721 = vst [vmem:[%s200 + $0x1c] sm:$0xf] %v657
        %722 = vst [vmem:[%s200 + $0x20] sm:$0xf] %v658
        %723 = vst [vmem:[%s200 + $0x24] sm:$0xf] %v659
        %724 = vst [vmem:[%s200 + $0x28] sm:$0xf] %v660
        %725 = vst [vmem:[%s200 + $0x2c] sm:$0xf] %v661
        %726 = vst [vmem:[%s200 + $0x30] sm:$0xf] %v662
        %727 = vst [vmem:[%s200 + $0x34] sm:$0xf] %v663
        %728 = vst [vmem:[%s200 + $0x38] sm:$0xf] %v664
        %729 = vst [vmem:[%s200 + $0x3c] sm:$0xf] %v665
        %730 = vst [vmem:[%s200 + $0x40] sm:$0xf] %v666
        %731 = vst [vmem:[%s200 + $0x44] sm:$0xf] %v667
        %732 = vst [vmem:[%s200 + $0x48] sm:$0xf] %v668
        %733 = vst [vmem:[%s200 + $0x4c] sm:$0xf] %v669
        %734 = vst [vmem:[%s200 + $0x50] sm:$0xf] %v670
        %735 = vst [vmem:[%s200 + $0x54] sm:$0xf] %v671
        %736 = vst [vmem:[%s200 + $0x58] sm:$0xf] %v672
        %737 = vst [vmem:[%s200 + $0x5c] sm:$0xf] %v673
        %738 = vst [vmem:[%s200 + $0x60] sm:$0xf] %v674
        %739 = vst [vmem:[%s200 + $0x64] sm:$0xf] %v675
        %740 = vst [vmem:[%s200 + $0x68] sm:$0xf] %v676
        %741 = vst [vmem:[%s200 + $0x6c] sm:$0xf] %v677
        %742 = vst [vmem:[%s200 + $0x70] sm:$0xf] %v678
        %743 = vst [vmem:[%s200 + $0x74] sm:$0xf] %v679
        %744 = vst [vmem:[%s200 + $0x78] sm:$0xf] %v680
        %745 = vst [vmem:[%s200 + $0x7c] sm:$0xf] %v681
        %s746 = smul.u32 32, %s16
        %p747 = scmp.lt.s32.totalorder %s746, 159
        %s748 = scalar_select %p747, %s746, 159
        %s749 = smul.addr %s748, 4
        %s750 = scalar_lea.vmem %s3, %s749
        // Predicated region
        $region41: #{lenet5_forward.6} parent=31 // pred_check
          %p751 = pneg %p102
        $region42: #{lenet5_forward.6} parent=31 // pred_check_branch
          %753 = sbr.rel (%p751) target = $region44
        $region43: #{lenet5_forward.6} parent=31 // pred_region
          %s754 = smul.u32 32, %s16
        $region44: #{lenet5_forward.6} parent=31 // pred_fallthru
          _
      $region32: #{lenet5_forward.6} parent=5 // pred_fallthru
        _
      %p755 = scmp.le.s32.totalorder 2, %s11
      // Predicated region
      $region45: #{lenet5_forward.6} parent=5 // pred_check
        %p756 = pneg %p755
      $region46: #{lenet5_forward.6} parent=5 // pred_check_branch
        %758 = sbr.rel (%p756) target = $region48
      $region47: #{lenet5_forward.6} parent=5 // pred_region
        %s759 = ssub.s32 %s11, 2
        // Predicated region
        $region49: #{lenet5_forward.6} parent=47 // pred_check
          %p760 = pneg %p108
        $region50: #{lenet5_forward.6} parent=47 // pred_check_branch
          %762 = sbr.rel (%p760) target = $region52
        $region51: #{lenet5_forward.6} parent=47 // pred_region
          %s763 = smul.u32 32, %s17
          %p764 = scmp.lt.s32.totalorder %s763, 159
          %s765 = scalar_select %p764, %s763, 159
          %s766 = smul.addr %s765, 4
          %s767 = scalar_lea.vmem %s3, %s766
        $region52: #{lenet5_forward.6} parent=47 // pred_fallthru
          _
      $region48: #{lenet5_forward.6} parent=5 // pred_fallthru
        _
    $region6: #{lenet5_forward.6} parent=1 // loop_footer
      %s15 = sadd.s32 1, %s11
    $region7: #{lenet5_forward.6} parent=1 // loop_footer_branch
      %10 = sbr.rel target = $region3
    $region8: #{lenet5_forward.6} parent=1 // loop_exit
      _
    %768 = vsyncpa [#allocation3], 1
    %s769 = scalar_lea.sflag [#allocation3], 1
    %770 = vsyncpa %s769, 1
    %771 = vsyncpa [#allocation5], 1

// kernel: lenet5_forward.7
$region0: #{lenet5_forward.7}
  #allocation0 [shape = 'u32[]', space=smem, size = 0x4, offset = 0x4, fixed_abs, tag = 'smem constant byte address 0x4 - core index']
  #allocation1 [shape = 'u32[144,128]{1,0:T(1,128)}', space=vmem, size = 0x12000, scoped, tag = 'internal scratch']
  %s0 = inlined_call_operand.vmem [shape: bf16[24,6144], index: 0, kind: input, shape index: {}]
  %s1 = inlined_call_operand.vmem [shape: bf16[24,1536], index: 1, kind: output, shape index: {}]
  %s2 = sld [smem:[#allocation0]]
  $region14: #{lenet5_forward.7} parent=0
    _
  %s4 = ssub.s32 1, %s2
  %s5 = scalar_select 0, %s4, %s2
  // Predicated region
  $region2: #{lenet5_forward.7} parent=0 // pred_check
    _
  $region3: #{lenet5_forward.7} parent=0 // pred_check_branch
    %7 = sbr.rel (0) target = $region5
  $region4: #{lenet5_forward.7} parent=0 // pred_region
    _
  $region5: #{lenet5_forward.7} parent=0 // pred_fallthru
    _
  %v8 = vld [vmem:[%s0] sm:$0xff]
  %v9 = vld [vmem:[%s0 + $0x8] sm:$0xff]
  %v10 = vld [vmem:[%s0 + $0x10] sm:$0xff]
  %v11 = vld [vmem:[%s0 + $0x18] sm:$0xff]
  %v12 = vld [vmem:[%s0 + $0x20] sm:$0xff]
  %v13 = vld [vmem:[%s0 + $0x28] sm:$0xff]
  %v14 = vld [vmem:[%s0 + $0x30] sm:$0xff]
  %v15 = vld [vmem:[%s0 + $0x38] sm:$0xff]
  %v16 = vld [vmem:[%s0 + $0x40] sm:$0xff]
  %v17 = vld [vmem:[%s0 + $0x48] sm:$0xff]
  %v18 = vld [vmem:[%s0 + $0x50] sm:$0xff]
  %v19 = vld [vmem:[%s0 + $0x58] sm:$0xff]
  %v20 = vld [vmem:[%s0 + $0x60] sm:$0xff]
  %v21 = vld [vmem:[%s0 + $0x68] sm:$0xff]
  %v22 = vld [vmem:[%s0 + $0x70] sm:$0xff]
  %v23 = vld [vmem:[%s0 + $0x78] sm:$0xff]
  %v24 = vld [vmem:[%s0 + $0x80] sm:$0xff]
  %v25 = vld [vmem:[%s0 + $0x88] sm:$0xff]
  %v26 = vld [vmem:[%s0 + $0x90] sm:$0xff]
  %v27 = vld [vmem:[%s0 + $0x98] sm:$0xff]
  %v28 = vld [vmem:[%s0 + $0xa0] sm:$0xff]
  %v29 = vld [vmem:[%s0 + $0xa8] sm:$0xff]
  %v30 = vld [vmem:[%s0 + $0xb0] sm:$0xff]
  %v31 = vld [vmem:[%s0 + $0xb8] sm:$0xff]
  %v32 = vld [vmem:[%s0 + $0xc0] sm:$0xff]
  %v33 = vld [vmem:[%s0 + $0xc8] sm:$0xff]
  %v34 = vld [vmem:[%s0 + $0xd0] sm:$0xff]
  %v35 = vld [vmem:[%s0 + $0xd8] sm:$0xff]
  %v36 = vld [vmem:[%s0 + $0xe0] sm:$0xff]
  %v37 = vld [vmem:[%s0 + $0xe8] sm:$0xff]
  %v38 = vld [vmem:[%s0 + $0xf0] sm:$0xff]
  %v39 = vld [vmem:[%s0 + $0xf8] sm:$0xff]
  %v40 = vld [vmem:[%s0 + $0x100] sm:$0xff]
  %v41 = vld [vmem:[%s0 + $0x108] sm:$0xff]
  %v42 = vld [vmem:[%s0 + $0x110] sm:$0xff]
  %v43 = vld [vmem:[%s0 + $0x118] sm:$0xff]
  %v44 = vld [vmem:[%s0 + $0x120] sm:$0xff]
  %v45 = vld [vmem:[%s0 + $0x128] sm:$0xff]
  %v46 = vld [vmem:[%s0 + $0x130] sm:$0xff]
  %v47 = vld [vmem:[%s0 + $0x138] sm:$0xff]
  %v48 = vld [vmem:[%s0 + $0x140] sm:$0xff]
  %v49 = vld [vmem:[%s0 + $0x148] sm:$0xff]
  %v50 = vld [vmem:[%s0 + $0x150] sm:$0xff]
  %v51 = vld [vmem:[%s0 + $0x158] sm:$0xff]
  %v52 = vld [vmem:[%s0 + $0x160] sm:$0xff]
  %v53 = vld [vmem:[%s0 + $0x168] sm:$0xff]
  %v54 = vld [vmem:[%s0 + $0x170] sm:$0xff]
  %v55 = vld [vmem:[%s0 + $0x178] sm:$0xff]
  %v56 = vld [vmem:[%s0 + $0x180] sm:$0xff]
  %v57 = vld [vmem:[%s0 + $0x188] sm:$0xff]
  %v58 = vld [vmem:[%s0 + $0x190] sm:$0xff]
  %v59 = vld [vmem:[%s0 + $0x198] sm:$0xff]
  %v60 = vld [vmem:[%s0 + $0x1a0] sm:$0xff]
  %v61 = vld [vmem:[%s0 + $0x1a8] sm:$0xff]
  %v62 = vld [vmem:[%s0 + $0x1b0] sm:$0xff]
  %v63 = vld [vmem:[%s0 + $0x1b8] sm:$0xff]
  %v64 = vld [vmem:[%s0 + $0x1c0] sm:$0xff]
  %v65 = vld [vmem:[%s0 + $0x1c8] sm:$0xff]
  %v66 = vld [vmem:[%s0 + $0x1d0] sm:$0xff]
  %v67 = vld [vmem:[%s0 + $0x1d8] sm:$0xff]
  %v68 = vld [vmem:[%s0 + $0x1e0] sm:$0xff]
  %v69 = vld [vmem:[%s0 + $0x1e8] sm:$0xff]
  %v70 = vld [vmem:[%s0 + $0x1f0] sm:$0xff]
  %v71 = vld [vmem:[%s0 + $0x1f8] sm:$0xff]
  %v72 = vld [vmem:[%s0 + $0x200] sm:$0xff]
  %v73 = vld [vmem:[%s0 + $0x208] sm:$0xff]
  %v74 = vld [vmem:[%s0 + $0x210] sm:$0xff]
  %v75 = vld [vmem:[%s0 + $0x218] sm:$0xff]
  %v76 = vld [vmem:[%s0 + $0x220] sm:$0xff]
  %v77 = vld [vmem:[%s0 + $0x228] sm:$0xff]
  %v78 = vld [vmem:[%s0 + $0x230] sm:$0xff]
  %v79 = vld [vmem:[%s0 + $0x238] sm:$0xff]
  %v80 = vmax.bf16 %v8, %v20
  %v81 = vmax.bf16 %v9, %v21
  %v82 = vmax.bf16 %v10, %v22
  %v83 = vmax.bf16 %v11, %v23
  %v84 = vmax.bf16 %v12, %v24
  %v85 = vmax.bf16 %v13, %v25
  %v86 = vmax.bf16 %v14, %v26
  %v87 = vmax.bf16 %v15, %v27
  %v88 = vmax.bf16 %v16, %v28
  %v89 = vmax.bf16 %v17, %v29
  %v90 = vmax.bf16 %v18, %v30
  %v91 = vmax.bf16 %v19, %v31
  %v92 = vmax.bf16 %v32, %v44
  %v93 = vmax.bf16 %v33, %v45
  %v94 = vmax.bf16 %v34, %v46
  %v95 = vmax.bf16 %v35, %v47
  %v96 = vmax.bf16 %v36, %v48
  %v97 = vmax.bf16 %v37, %v49
  %v98 = vmax.bf16 %v38, %v50
  %v99 = vmax.bf16 %v39, %v51
  %v100 = vmax.bf16 %v40, %v52
  %v101 = vmax.bf16 %v41, %v53
  %v102 = vmax.bf16 %v42, %v54
  %v103 = vmax.bf16 %v43, %v55
  %v104 = vmax.bf16 %v56, %v68
  %v105 = vmax.bf16 %v57, %v69
  %v106 = vmax.bf16 %v58, %v70
  %v107 = vmax.bf16 %v59, %v71
  %v108 = vmax.bf16 %v60, %v72
  %v109 = vmax.bf16 %v61, %v73
  %v110 = vmax.bf16 %v62, %v74
  %v111 = vmax.bf16 %v63, %v75
  %v112 = vmax.bf16 %v64, %v76
  %v113 = vmax.bf16 %v65, %v77
  %v114 = vmax.bf16 %v66, %v78
  %v115 = vmax.bf16 %v67, %v79
  %v119 = vrot.slane %v80, 4
  %v120 = vrot.slane %v92, 4
  %v121 = vrot.slane %v104, 4
  %v125 = vmax.bf16 %v80, %v119
  %v126 = vmax.bf16 %v92, %v120
  %v127 = vmax.bf16 %v104, %v121
  %128 = vst [vmem:[%s1] sm:$0xf] %v125
  %129 = vst [vmem:[%s1 + $0x30] sm:$0xf] %v126
  %130 = vst [vmem:[%s1 + $0x60] sm:$0xf] %v127
  %v134 = vrot.slane %v81, 4
  %v135 = vrot.slane %v93, 4
  %v136 = vrot.slane %v105, 4
  %v140 = vmax.bf16 %v81, %v134
  %v141 = vmax.bf16 %v93, %v135
  %v142 = vmax.bf16 %v105, %v136
  %143 = vst [vmem:[%s1 + $0x4] sm:$0xf] %v140
  %144 = vst [vmem:[%s1 + $0x34] sm:$0xf] %v141
  %145 = vst [vmem:[%s1 + $0x64] sm:$0xf] %v142
  %v149 = vrot.slane %v82, 4
  %v150 = vrot.slane %v94, 4
  %v151 = vrot.slane %v106, 4
  %v155 = vmax.bf16 %v82, %v149
  %v156 = vmax.bf16 %v94, %v150
  %v157 = vmax.bf16 %v106, %v151
  %158 = vst [vmem:[%s1 + $0x8] sm:$0xf] %v155
  %159 = vst [vmem:[%s1 + $0x38] sm:$0xf] %v156
  %160 = vst [vmem:[%s1 + $0x68] sm:$0xf] %v157
  %v164 = vrot.slane %v83, 4
  %v165 = vrot.slane %v95, 4
  %v166 = vrot.slane %v107, 4
  %v170 = vmax.bf16 %v83, %v164
  %v171 = vmax.bf16 %v95, %v165
  %v172 = vmax.bf16 %v107, %v166
  %173 = vst [vmem:[%s1 + $0xc] sm:$0xf] %v170
  %174 = vst [vmem:[%s1 + $0x3c] sm:$0xf] %v171
  %175 = vst [vmem:[%s1 + $0x6c] sm:$0xf] %v172
  %v179 = vrot.slane %v84, 4
  %v180 = vrot.slane %v96, 4
  %v181 = vrot.slane %v108, 4
  %v185 = vmax.bf16 %v84, %v179
  %v186 = vmax.bf16 %v96, %v180
  %v187 = vmax.bf16 %v108, %v181
  %188 = vst [vmem:[%s1 + $0x10] sm:$0xf] %v185
  %189 = vst [vmem:[%s1 + $0x40] sm:$0xf] %v186
  %190 = vst [vmem:[%s1 + $0x70] sm:$0xf] %v187
  %v194 = vrot.slane %v85, 4
  %v195 = vrot.slane %v97, 4
  %v196 = vrot.slane %v109, 4
  %v200 = vmax.bf16 %v85, %v194
  %v201 = vmax.bf16 %v97, %v195
  %v202 = vmax.bf16 %v109, %v196
  %203 = vst [vmem:[%s1 + $0x14] sm:$0xf] %v200
  %204 = vst [vmem:[%s1 + $0x44] sm:$0xf] %v201
  %205 = vst [vmem:[%s1 + $0x74] sm:$0xf] %v202
  %v209 = vrot.slane %v86, 4
  %v210 = vrot.slane %v98, 4
  %v211 = vrot.slane %v110, 4
  %v215 = vmax.bf16 %v86, %v209
  %v216 = vmax.bf16 %v98, %v210
  %v217 = vmax.bf16 %v110, %v211
  %218 = vst [vmem:[%s1 + $0x18] sm:$0xf] %v215
  %219 = vst [vmem:[%s1 + $0x48] sm:$0xf] %v216
  %220 = vst [vmem:[%s1 + $0x78] sm:$0xf] %v217
  %v224 = vrot.slane %v87, 4
  %v225 = vrot.slane %v99, 4
  %v226 = vrot.slane %v111, 4
  %v230 = vmax.bf16 %v87, %v224
  %v231 = vmax.bf16 %v99, %v225
  %v232 = vmax.bf16 %v111, %v226
  %233 = vst [vmem:[%s1 + $0x1c] sm:$0xf] %v230
  %234 = vst [vmem:[%s1 + $0x4c] sm:$0xf] %v231
  %235 = vst [vmem:[%s1 + $0x7c] sm:$0xf] %v232
  %v239 = vrot.slane %v88, 4
  %v240 = vrot.slane %v100, 4
  %v241 = vrot.slane %v112, 4
  %v245 = vmax.bf16 %v88, %v239
  %v246 = vmax.bf16 %v100, %v240
  %v247 = vmax.bf16 %v112, %v241
  %248 = vst [vmem:[%s1 + $0x20] sm:$0xf] %v245
  %249 = vst [vmem:[%s1 + $0x50] sm:$0xf] %v246
  %250 = vst [vmem:[%s1 + $0x80] sm:$0xf] %v247
  %v254 = vrot.slane %v89, 4
  %v255 = vrot.slane %v101, 4
  %v256 = vrot.slane %v113, 4
  %v260 = vmax.bf16 %v89, %v254
  %v261 = vmax.bf16 %v101, %v255
  %v262 = vmax.bf16 %v113, %v256
  %263 = vst [vmem:[%s1 + $0x24] sm:$0xf] %v260
  %264 = vst [vmem:[%s1 + $0x54] sm:$0xf] %v261
  %265 = vst [vmem:[%s1 + $0x84] sm:$0xf] %v262
  %v269 = vrot.slane %v90, 4
  %v270 = vrot.slane %v102, 4
  %v271 = vrot.slane %v114, 4
  %v275 = vmax.bf16 %v90, %v269
  %v276 = vmax.bf16 %v102, %v270
  %v277 = vmax.bf16 %v114, %v271
  %278 = vst [vmem:[%s1 + $0x28] sm:$0xf] %v275
  %279 = vst [vmem:[%s1 + $0x58] sm:$0xf] %v276
  %280 = vst [vmem:[%s1 + $0x88] sm:$0xf] %v277
  %v284 = vrot.slane %v91, 4
  %v285 = vrot.slane %v103, 4
  %v286 = vrot.slane %v115, 4
  %v290 = vmax.bf16 %v91, %v284
  %v291 = vmax.bf16 %v103, %v285
  %v292 = vmax.bf16 %v115, %v286
  %293 = vst [vmem:[%s1 + $0x2c] sm:$0xf] %v290
  %294 = vst [vmem:[%s1 + $0x5c] sm:$0xf] %v291
  %295 = vst [vmem:[%s1 + $0x8c] sm:$0xf] %v292
  // Predicated region
  $region6: #{lenet5_forward.7} parent=0 // pred_check
    _
  $region7: #{lenet5_forward.7} parent=0 // pred_check_branch
    %297 = sbr.rel (0) target = $region9
  $region8: #{lenet5_forward.7} parent=0 // pred_region
    _
  $region9: #{lenet5_forward.7} parent=0 // pred_fallthru
    _
  // Predicated region
  $region10: #{lenet5_forward.7} parent=0 // pred_check
    _
  $region11: #{lenet5_forward.7} parent=0 // pred_check_branch
    %299 = sbr.rel (0) target = $region13
  $region12: #{lenet5_forward.7} parent=0 // pred_region
    _
  $region13: #{lenet5_forward.7} parent=0 // pred_fallthru
    _

// kernel: lenet5_forward.8
$region0: #{lenet5_forward.8}
  #allocation0 [shape = 'u32[]', space=smem, size = 0x4, offset = 0x4, fixed_abs, tag = 'smem constant byte address 0x4 - core index']
  #allocation1 [shape = 'u32[144,128]{1,0:T(1,128)}', space=vmem, size = 0x12000, scoped, tag = 'internal scratch']
  %s0 = inlined_call_operand.vmem [shape: bf16[128,500], index: 0, kind: input, shape index: {}]
  %s1 = inlined_call_operand.vmem [shape: bf16[500,128], index: 1, kind: input, shape index: {}]
  %s2 = inlined_call_operand.vmem [shape: f32[1,128], index: 2, kind: input, shape index: {}]
  %s3 = inlined_call_operand.vmem [shape: bf16[128,128], index: 3, kind: output, shape index: {}]
  %s4 = sld [smem:[#allocation0]]
  $region22: #{lenet5_forward.8} parent=0
    _
  %s6 = ssub.s32 1, %s4
  %s7 = scalar_select 0, %s6, %s4
  // Predicated region
  $region2: #{lenet5_forward.8} parent=0 // pred_check
    _
  $region3: #{lenet5_forward.8} parent=0 // pred_check_branch
    %9 = sbr.rel (0) target = $region5
  $region4: #{lenet5_forward.8} parent=0 // pred_region
    _
  $region5: #{lenet5_forward.8} parent=0 // pred_fallthru
    _
  // Predicated region
  $region6: #{lenet5_forward.8} parent=0 // pred_check
    _
  $region7: #{lenet5_forward.8} parent=0 // pred_check_branch
    %11 = sbr.rel (0) target = $region9
  $region8: #{lenet5_forward.8} parent=0 // pred_region
    _
  $region9: #{lenet5_forward.8} parent=0 // pred_fallthru
    _
  // Predicated region
  $region10: #{lenet5_forward.8} parent=0 // pred_check
    _
  $region11: #{lenet5_forward.8} parent=0 // pred_check_branch
    %13 = sbr.rel (0) target = $region13
  $region12: #{lenet5_forward.8} parent=0 // pred_region
    _
  $region13: #{lenet5_forward.8} parent=0 // pred_fallthru
    _
  %v15 = vld [vmem:[%s0] sm:$0xff]
  %v16 = vld [vmem:[%s0 + $0x8] sm:$0xff]
  %v17 = vld [vmem:[%s0 + $0x10] sm:$0xff]
  %v18 = vld [vmem:[%s0 + $0x18] sm:$0xff]
  %v19 = vld [vmem:[%s0 + $0x20] sm:$0xff]
  %v20 = vld [vmem:[%s0 + $0x28] sm:$0xff]
  %v21 = vld [vmem:[%s0 + $0x30] sm:$0xff]
  %v22 = vld [vmem:[%s0 + $0x38] sm:$0xff]
  %v23 = vld [vmem:[%s0 + $0x40] sm:$0xff]
  %v24 = vld [vmem:[%s0 + $0x48] sm:$0xff]
  %v25 = vld [vmem:[%s0 + $0x50] sm:$0xff]
  %v26 = vld [vmem:[%s0 + $0x58] sm:$0xff]
  %v27 = vld [vmem:[%s0 + $0x60] sm:$0xff]
  %v28 = vld [vmem:[%s0 + $0x68] sm:$0xff]
  %v29 = vld [vmem:[%s0 + $0x70] sm:$0xff]
  %v30 = vld [vmem:[%s0 + $0x78] sm:$0xff]
  %v31 = vld [vmem:[%s0 + $0x80] sm:$0xff]
  %v32 = vld [vmem:[%s0 + $0x88] sm:$0xff]
  %v33 = vld [vmem:[%s0 + $0x90] sm:$0xff]
  %v34 = vld [vmem:[%s0 + $0x98] sm:$0xff]
  %v35 = vld [vmem:[%s0 + $0xa0] sm:$0xff]
  %v36 = vld [vmem:[%s0 + $0xa8] sm:$0xff]
  %v37 = vld [vmem:[%s0 + $0xb0] sm:$0xff]
  %v38 = vld [vmem:[%s0 + $0xb8] sm:$0xff]
  %v39 = vld [vmem:[%s0 + $0xc0] sm:$0xff]
  %v40 = vld [vmem:[%s0 + $0xc8] sm:$0xff]
  %v41 = vld [vmem:[%s0 + $0xd0] sm:$0xff]
  %v42 = vld [vmem:[%s0 + $0xd8] sm:$0xff]
  %v43 = vld [vmem:[%s0 + $0xe0] sm:$0xff]
  %v44 = vld [vmem:[%s0 + $0xe8] sm:$0xff]
  %v45 = vld [vmem:[%s0 + $0xf0] sm:$0xff]
  %v46 = vld [vmem:[%s0 + $0xf8] sm:$0xff]
  %v47 = vld [vmem:[%s1] sm:$0xf]
  %v48 = vld [vmem:[%s1 + $0x4] sm:$0xf]
  %v49 = vld [vmem:[%s1 + $0x8] sm:$0xf]
  %v50 = vld [vmem:[%s1 + $0xc] sm:$0xf]
  %v51 = vld [vmem:[%s1 + $0x10] sm:$0xf]
  %v52 = vld [vmem:[%s1 + $0x14] sm:$0xf]
  %v53 = vld [vmem:[%s1 + $0x18] sm:$0xf]
  %v54 = vld [vmem:[%s1 + $0x1c] sm:$0xf]
  %v55 = vld [vmem:[%s1 + $0x20] sm:$0xf]
  %v56 = vld [vmem:[%s1 + $0x24] sm:$0xf]
  %v57 = vld [vmem:[%s1 + $0x28] sm:$0xf]
  %v58 = vld [vmem:[%s1 + $0x2c] sm:$0xf]
  %v59 = vld [vmem:[%s1 + $0x30] sm:$0xf]
  %v60 = vld [vmem:[%s1 + $0x34] sm:$0xf]
  %v61 = vld [vmem:[%s1 + $0x38] sm:$0xf]
  %v62 = vld [vmem:[%s1 + $0x3c] sm:$0xf]
  %v63 = vld [vmem:[%s1 + $0x40] sm:$0xf]
  %v64 = vld [vmem:[%s1 + $0x44] sm:$0xf]
  %v65 = vld [vmem:[%s1 + $0x48] sm:$0xf]
  %v66 = vld [vmem:[%s1 + $0x4c] sm:$0xf]
  %v67 = vld [vmem:[%s1 + $0x50] sm:$0xf]
  %v68 = vld [vmem:[%s1 + $0x54] sm:$0xf]
  %v69 = vld [vmem:[%s1 + $0x58] sm:$0xf]
  %v70 = vld [vmem:[%s1 + $0x5c] sm:$0xf]
  %v71 = vld [vmem:[%s1 + $0x60] sm:$0xf]
  %v72 = vld [vmem:[%s1 + $0x64] sm:$0xf]
  %v73 = vld [vmem:[%s1 + $0x68] sm:$0xf]
  %v74 = vld [vmem:[%s1 + $0x6c] sm:$0xf]
  %v75 = vld [vmem:[%s1 + $0x70] sm:$0xf]
  %v76 = vld [vmem:[%s1 + $0x74] sm:$0xf]
  %v77 = vld [vmem:[%s1 + $0x78] sm:$0xf]
  %v78 = vld [vmem:[%s1 + $0x7c] sm:$0xf]
  %v79 = vld [vmem:[%s1 + $0x80] sm:$0xf]
  %v80 = vld [vmem:[%s1 + $0x84] sm:$0xf]
  %v81 = vld [vmem:[%s1 + $0x88] sm:$0xf]
  %v82 = vld [vmem:[%s1 + $0x8c] sm:$0xf]
  %v83 = vld [vmem:[%s1 + $0x90] sm:$0xf]
  %v84 = vld [vmem:[%s1 + $0x94] sm:$0xf]
  %v85 = vld [vmem:[%s1 + $0x98] sm:$0xf]
  %v86 = vld [vmem:[%s1 + $0x9c] sm:$0xf]
  %v87 = vld [vmem:[%s1 + $0xa0] sm:$0xf]
  %v88 = vld [vmem:[%s1 + $0xa4] sm:$0xf]
  %v89 = vld [vmem:[%s1 + $0xa8] sm:$0xf]
  %v90 = vld [vmem:[%s1 + $0xac] sm:$0xf]
  %v91 = vld [vmem:[%s1 + $0xb0] sm:$0xf]
  %v92 = vld [vmem:[%s1 + $0xb4] sm:$0xf]
  %v93 = vld [vmem:[%s1 + $0xb8] sm:$0xf]
  %v94 = vld [vmem:[%s1 + $0xbc] sm:$0xf]
  %v95 = vld [vmem:[%s1 + $0xc0] sm:$0xf]
  %v96 = vld [vmem:[%s1 + $0xc4] sm:$0xf]
  %v97 = vld [vmem:[%s1 + $0xc8] sm:$0xf]
  %v98 = vld [vmem:[%s1 + $0xcc] sm:$0xf]
  %v99 = vld [vmem:[%s1 + $0xd0] sm:$0xf]
  %v100 = vld [vmem:[%s1 + $0xd4] sm:$0xf]
  %v101 = vld [vmem:[%s1 + $0xd8] sm:$0xf]
  %v102 = vld [vmem:[%s1 + $0xdc] sm:$0xf]
  %v103 = vld [vmem:[%s1 + $0xe0] sm:$0xf]
  %v104 = vld [vmem:[%s1 + $0xe4] sm:$0xf]
  %v105 = vld [vmem:[%s1 + $0xe8] sm:$0xf]
  %v106 = vld [vmem:[%s1 + $0xec] sm:$0xf]
  %v107 = vld [vmem:[%s1 + $0xf0] sm:$0xf]
  %v108 = vld [vmem:[%s1 + $0xf4] sm:$0xf]
  %v109 = vld [vmem:[%s1 + $0xf8] sm:$0x3]
  %v110 = vld [vmem:[%s2] sm:$0x1]
  %v112 = vlaneseq
  %v113 = vshrl.u32 %v112, 7
  %v114 = vsub.s32 0, %v113
  %v115 = vrot.slane %v110, %v114
  %v149 = vunpack.c.l.b16 %v15
  %v150 = vunpack.c.h.b16 %v15
  %v151 = vunpack.c.l.b16 %v16
  %v152 = vunpack.c.h.b16 %v16
  %v153 = vunpack.c.l.b16 %v17
  %v154 = vunpack.c.h.b16 %v17
  %v155 = vunpack.c.l.b16 %v18
  %v156 = vunpack.c.h.b16 %v18
  %v157 = vunpack.c.l.b16 %v19
  %v158 = vunpack.c.h.b16 %v19
  %v159 = vunpack.c.l.b16 %v20
  %v160 = vunpack.c.h.b16 %v20
  %v161 = vunpack.c.l.b16 %v21
  %v162 = vunpack.c.h.b16 %v21
  %v163 = vunpack.c.l.b16 %v22
  %v164 = vunpack.c.h.b16 %v22
  %v165 = vunpack.c.l.b16 %v23
  %v166 = vunpack.c.h.b16 %v23
  %v167 = vunpack.c.l.b16 %v24
  %v168 = vunpack.c.h.b16 %v24
  %v169 = vunpack.c.l.b16 %v25
  %v170 = vunpack.c.h.b16 %v25
  %v171 = vunpack.c.l.b16 %v26
  %v172 = vunpack.c.h.b16 %v26
  %v173 = vunpack.c.l.b16 %v27
  %v174 = vunpack.c.h.b16 %v27
  %v175 = vunpack.c.l.b16 %v28
  %v176 = vunpack.c.h.b16 %v28
  %v177 = vunpack.c.l.b16 %v29
  %v178 = vunpack.c.h.b16 %v29
  %v179 = vunpack.c.l.b16 %v30
  %v180 = vunpack.c.h.b16 %v30
  %v181 = vunpack.c.l.b16 %v31
  %v182 = vunpack.c.h.b16 %v31
  %v183 = vunpack.c.l.b16 %v32
  %v184 = vunpack.c.h.b16 %v32
  %v185 = vunpack.c.l.b16 %v33
  %v186 = vunpack.c.h.b16 %v33
  %v187 = vunpack.c.l.b16 %v34
  %v188 = vunpack.c.h.b16 %v34
  %v189 = vunpack.c.l.b16 %v35
  %v190 = vunpack.c.h.b16 %v35
  %v191 = vunpack.c.l.b16 %v36
  %v192 = vunpack.c.h.b16 %v36
  %v193 = vunpack.c.l.b16 %v37
  %v194 = vunpack.c.h.b16 %v37
  %v195 = vunpack.c.l.b16 %v38
  %v196 = vunpack.c.h.b16 %v38
  %v197 = vunpack.c.l.b16 %v39
  %v198 = vunpack.c.h.b16 %v39
  %v199 = vunpack.c.l.b16 %v40
  %v200 = vunpack.c.h.b16 %v40
  %v201 = vunpack.c.l.b16 %v41
  %v202 = vunpack.c.h.b16 %v41
  %v203 = vunpack.c.l.b16 %v42
  %v204 = vunpack.c.h.b16 %v42
  %v205 = vunpack.c.l.b16 %v43
  %v206 = vunpack.c.h.b16 %v43
  %v207 = vunpack.c.l.b16 %v44
  %v208 = vunpack.c.h.b16 %v44
  %v209 = vunpack.c.l.b16 %v45
  %v210 = vunpack.c.h.b16 %v45
  %v211 = vunpack.c.l.b16 %v46
  %v212 = vunpack.c.h.b16 %v46
  %v213 = vpack.c.b16 %v153, %v149
  %v214 = vpack.c.b16 %v154, %v150
  %v215 = vpack.c.b16 %v155, %v151
  %v216 = vpack.c.b16 %v156, %v152
  %v217 = vpack.c.b16 %v161, %v157
  %v218 = vpack.c.b16 %v162, %v158
  %v219 = vpack.c.b16 %v163, %v159
  %v220 = vpack.c.b16 %v164, %v160
  %v221 = vpack.c.b16 %v169, %v165
  %v222 = vpack.c.b16 %v170, %v166
  %v223 = vpack.c.b16 %v171, %v167
  %v224 = vpack.c.b16 %v172, %v168
  %v225 = vpack.c.b16 %v177, %v173
  %v226 = vpack.c.b16 %v178, %v174
  %v227 = vpack.c.b16 %v179, %v175
  %v228 = vpack.c.b16 %v180, %v176
  %v229 = vpack.c.b16 %v185, %v181
  %v230 = vpack.c.b16 %v186, %v182
  %v231 = vpack.c.b16 %v187, %v183
  %v232 = vpack.c.b16 %v188, %v184
  %v233 = vpack.c.b16 %v193, %v189
  %v234 = vpack.c.b16 %v194, %v190
  %v235 = vpack.c.b16 %v195, %v191
  %v236 = vpack.c.b16 %v196, %v192
  %v237 = vpack.c.b16 %v201, %v197
  %v238 = vpack.c.b16 %v202, %v198
  %v239 = vpack.c.b16 %v203, %v199
  %v240 = vpack.c.b16 %v204, %v200
  %v241 = vpack.c.b16 %v209, %v205
  %v242 = vpack.c.b16 %v210, %v206
  %v243 = vpack.c.b16 %v211, %v207
  %v244 = vpack.c.b16 %v212, %v208
  %v332 = vunpack.c.l.b16 %v47
  %v333 = vunpack.c.l.b16 %v48
  %v334 = vunpack.c.l.b16 %v49
  %v335 = vunpack.c.l.b16 %v50
  %v336 = vunpack.c.l.b16 %v51
  %v337 = vunpack.c.l.b16 %v52
  %v338 = vunpack.c.l.b16 %v53
  %v339 = vunpack.c.l.b16 %v54
  %v340 = vunpack.c.l.b16 %v55
  %v341 = vunpack.c.l.b16 %v56
  %v342 = vunpack.c.l.b16 %v57
  %v343 = vunpack.c.l.b16 %v58
  %v344 = vunpack.c.l.b16 %v59
  %v345 = vunpack.c.l.b16 %v60
  %v346 = vunpack.c.l.b16 %v61
  %v347 = vunpack.c.l.b16 %v62
  %v348 = vunpack.c.l.b16 %v63
  %v349 = vunpack.c.l.b16 %v64
  %v350 = vunpack.c.l.b16 %v65
  %v351 = vunpack.c.l.b16 %v66
  %v352 = vunpack.c.l.b16 %v67
  %v353 = vunpack.c.l.b16 %v68
  %v354 = vunpack.c.l.b16 %v69
  %v355 = vunpack.c.l.b16 %v70
  %v356 = vunpack.c.l.b16 %v71
  %v357 = vunpack.c.l.b16 %v72
  %v358 = vunpack.c.l.b16 %v73
  %v359 = vunpack.c.l.b16 %v74
  %v360 = vunpack.c.l.b16 %v75
  %v361 = vunpack.c.l.b16 %v76
  %v362 = vunpack.c.l.b16 %v77
  %v363 = vunpack.c.l.b16 %v78
  %v364 = vunpack.c.l.b16 %v79
  %v365 = vunpack.c.l.b16 %v80
  %v366 = vunpack.c.l.b16 %v81
  %v367 = vunpack.c.l.b16 %v82
  %v368 = vunpack.c.l.b16 %v83
  %v369 = vunpack.c.l.b16 %v84
  %v370 = vunpack.c.l.b16 %v85
  %v371 = vunpack.c.l.b16 %v86
  %v372 = vunpack.c.l.b16 %v87
  %v373 = vunpack.c.l.b16 %v88
  %v374 = vunpack.c.l.b16 %v89
  %v375 = vunpack.c.l.b16 %v90
  %v376 = vunpack.c.l.b16 %v91
  %v377 = vunpack.c.l.b16 %v92
  %v378 = vunpack.c.l.b16 %v93
  %v379 = vunpack.c.l.b16 %v94
  %v380 = vunpack.c.l.b16 %v95
  %v381 = vunpack.c.l.b16 %v96
  %v382 = vunpack.c.l.b16 %v97
  %v383 = vunpack.c.l.b16 %v98
  %v384 = vunpack.c.l.b16 %v99
  %v385 = vunpack.c.l.b16 %v100
  %v386 = vunpack.c.l.b16 %v101
  %v387 = vunpack.c.l.b16 %v102
  %v388 = vunpack.c.l.b16 %v103
  %v389 = vunpack.c.l.b16 %v104
  %v390 = vunpack.c.l.b16 %v105
  %v391 = vunpack.c.l.b16 %v106
  %v392 = vunpack.c.l.b16 %v107
  %v393 = vunpack.c.l.b16 %v108
  %v394 = vunpack.c.l.b16 %v109
  %v395 = vpack.c.b16 %v333, %v332
  %v396 = vpack.c.b16 %v335, %v334
  %v397 = vpack.c.b16 %v337, %v336
  %v398 = vpack.c.b16 %v339, %v338
  %v399 = vpack.c.b16 %v341, %v340
  %v400 = vpack.c.b16 %v343, %v342
  %v401 = vpack.c.b16 %v345, %v344
  %v402 = vpack.c.b16 %v347, %v346
  %v403 = vpack.c.b16 %v349, %v348
  %v404 = vpack.c.b16 %v351, %v350
  %v405 = vpack.c.b16 %v353, %v352
  %v406 = vpack.c.b16 %v355, %v354
  %v407 = vpack.c.b16 %v357, %v356
  %v408 = vpack.c.b16 %v359, %v358
  %v409 = vpack.c.b16 %v361, %v360
  %v410 = vpack.c.b16 %v363, %v362
  %v411 = vpack.c.b16 %v365, %v364
  %v412 = vpack.c.b16 %v367, %v366
  %v413 = vpack.c.b16 %v369, %v368
  %v414 = vpack.c.b16 %v371, %v370
  %v415 = vpack.c.b16 %v373, %v372
  %v416 = vpack.c.b16 %v375, %v374
  %v417 = vpack.c.b16 %v377, %v376
  %v418 = vpack.c.b16 %v379, %v378
  %v419 = vpack.c.b16 %v381, %v380
  %v420 = vpack.c.b16 %v383, %v382
  %v421 = vpack.c.b16 %v385, %v384
  %v422 = vpack.c.b16 %v387, %v386
  %v423 = vpack.c.b16 %v389, %v388
  %v424 = vpack.c.b16 %v391, %v390
  %v425 = vpack.c.b16 %v393, %v392
  %v426 = vpack.c.b16 %v394, %v394
  %vm458 = vcmask 949248
  %v460 = vsel %vm458, %v216, 0
  %v463 = vsel %vm458, %v220, 0
  %v466 = vsel %vm458, %v224, 0
  %v469 = vsel %vm458, %v228, 0
  %v472 = vsel %vm458, %v232, 0
  %v475 = vsel %vm458, %v236, 0
  %v478 = vsel %vm458, %v240, 0
  %v481 = vsel %vm458, %v244, 0
  %vm483 = vcmask 1041408
  %v485 = vsel %vm483, %v426, 0
  %487 = vmatprep.subr.bf16.mxu0 0
  %488 = vmatpush1.bf16.msra.mxu0 %v395
  %489 = vmatprep.subr.bf16.mxu0 0
  %490 = vmatpush1.bf16.msra.mxu0 %v396
  %491 = vmatprep.subr.bf16.mxu0 0
  %492 = vmatpush1.bf16.msra.mxu0 %v397
  %493 = vmatprep.subr.bf16.mxu0 0
  %494 = vmatpush1.bf16.msra.mxu0 %v398
  %495 = vmatprep.subr.bf16.mxu0 0
  %496 = vmatpush1.bf16.msra.mxu0 %v399
  %497 = vmatprep.subr.bf16.mxu0 0
  %498 = vmatpush1.bf16.msra.mxu0 %v400
  %499 = vmatprep.subr.bf16.mxu0 0
  %500 = vmatpush1.bf16.msra.mxu0 %v401
  %501 = vmatprep.subr.bf16.mxu0 0
  %502 = vmatpush1.bf16.msra.mxu0 %v402
  %503 = vmatprep.subr.bf16.mxu0 0
  %504 = vmatpush1.bf16.msra.mxu0 %v403
  %505 = vmatprep.subr.bf16.mxu0 0
  %506 = vmatpush1.bf16.msra.mxu0 %v404
  %507 = vmatprep.subr.bf16.mxu0 0
  %508 = vmatpush1.bf16.msra.mxu0 %v405
  %509 = vmatprep.subr.bf16.mxu0 0
  %510 = vmatpush1.bf16.msra.mxu0 %v406
  %511 = vmatprep.subr.bf16.mxu0 0
  %512 = vmatpush1.bf16.msra.mxu0 %v407
  %513 = vmatprep.subr.bf16.mxu0 0
  %514 = vmatpush1.bf16.msra.mxu0 %v408
  %515 = vmatprep.subr.bf16.mxu0 0
  %516 = vmatpush1.bf16.msra.mxu0 %v409
  %517 = vmatprep.subr.bf16.mxu0 0
  %518 = vmatpush1.bf16.msra.mxu0 %v410
  %519 = vmatprep.mubr.bf16.mxu0 %v214
  %520 = vmatmul.mubr.bf16.gmra.mrb[0].mxu0 %v213
  %v521 = vpop.f32.mrb[0].mxu0
  %v522 = vadd.f32 %v115, %v521
  %v523 = vpop.f32.mrb[0].mxu0
  %v524 = vpop.f32.mrb[0].mxu0
  %v525 = vadd.f32 %v115, %v524
  %v526 = vpop.f32.mrb[0].mxu0
  %527 = vmatprep.mubr.bf16.mxu0 %v218
  %528 = vmatmul.mubr.bf16.gmra.mrb[0].mxu0 %v217
  %v529 = vpop.f32.mrb[0].mxu0
  %v530 = vadd.f32 %v115, %v529
  %v531 = vpop.f32.mrb[0].mxu0
  %v532 = vpop.f32.mrb[0].mxu0
  %v533 = vadd.f32 %v115, %v532
  %v534 = vpop.f32.mrb[0].mxu0
  %535 = vmatprep.mubr.bf16.mxu0 %v222
  %536 = vmatmul.mubr.bf16.gmra.mrb[0].mxu0 %v221
  %v537 = vpop.f32.mrb[0].mxu0
  %v538 = vadd.f32 %v115, %v537
  %v539 = vpop.f32.mrb[0].mxu0
  %v540 = vpop.f32.mrb[0].mxu0
  %v541 = vadd.f32 %v115, %v540
  %v542 = vpop.f32.mrb[0].mxu0
  %543 = vmatprep.mubr.bf16.mxu0 %v226
  %544 = vmatmul.mubr.bf16.gmra.mrb[0].mxu0 %v225
  %v545 = vpop.f32.mrb[0].mxu0
  %v546 = vadd.f32 %v115, %v545
  %v547 = vpop.f32.mrb[0].mxu0
  %v548 = vpop.f32.mrb[0].mxu0
  %v549 = vadd.f32 %v115, %v548
  %v550 = vpop.f32.mrb[0].mxu0
  %551 = vmatprep.mubr.bf16.mxu0 %v230
  %552 = vmatmul.mubr.bf16.gmra.mrb[0].mxu0 %v229
  %v553 = vpop.f32.mrb[0].mxu0
  %v554 = vadd.f32 %v115, %v553
  %v555 = vpop.f32.mrb[0].mxu0
  %v556 = vpop.f32.mrb[0].mxu0
  %v557 = vadd.f32 %v115, %v556
  %v558 = vpop.f32.mrb[0].mxu0
  %559 = vmatprep.mubr.bf16.mxu0 %v234
  %560 = vmatmul.mubr.bf16.gmra.mrb[0].mxu0 %v233
  %v561 = vpop.f32.mrb[0].mxu0
  %v562 = vadd.f32 %v115, %v561
  %v563 = vpop.f32.mrb[0].mxu0
  %v564 = vpop.f32.mrb[0].mxu0
  %v565 = vadd.f32 %v115, %v564
  %v566 = vpop.f32.mrb[0].mxu0
  %567 = vmatprep.mubr.bf16.mxu0 %v238
  %568 = vmatmul.mubr.bf16.gmra.mrb[0].mxu0 %v237
  %v569 = vpop.f32.mrb[0].mxu0
  %v570 = vadd.f32 %v115, %v569
  %v571 = vpop.f32.mrb[0].mxu0
  %v572 = vpop.f32.mrb[0].mxu0
  %v573 = vadd.f32 %v115, %v572
  %v574 = vpop.f32.mrb[0].mxu0
  %575 = vmatprep.mubr.bf16.mxu0 %v242
  %576 = vmatmul.mubr.bf16.gmra.mrb[0].mxu0 %v241
  %v577 = vpop.f32.mrb[0].mxu0
  %v578 = vadd.f32 %v115, %v577
  %v579 = vpop.f32.mrb[0].mxu0
  %v580 = vpop.f32.mrb[0].mxu0
  %v581 = vadd.f32 %v115, %v580
  %v582 = vpop.f32.mrb[0].mxu0
  %583 = vdwg.mxu0
  %584 = vmatprep.subr.bf16.mxu0 0
  %585 = vmatpush1.bf16.msra.mxu0 %v411
  %586 = vmatprep.subr.bf16.mxu0 0
  %587 = vmatpush1.bf16.msra.mxu0 %v412
  %588 = vmatprep.subr.bf16.mxu0 0
  %589 = vmatpush1.bf16.msra.mxu0 %v413
  %590 = vmatprep.subr.bf16.mxu0 0
  %591 = vmatpush1.bf16.msra.mxu0 %v414
  %592 = vmatprep.subr.bf16.mxu0 0
  %593 = vmatpush1.bf16.msra.mxu0 %v415
  %594 = vmatprep.subr.bf16.mxu0 0
  %595 = vmatpush1.bf16.msra.mxu0 %v416
  %596 = vmatprep.subr.bf16.mxu0 0
  %597 = vmatpush1.bf16.msra.mxu0 %v417
  %598 = vmatprep.subr.bf16.mxu0 0
  %599 = vmatpush1.bf16.msra.mxu0 %v418
  %600 = vmatprep.subr.bf16.mxu0 0
  %601 = vmatpush1.bf16.msra.mxu0 %v419
  %602 = vmatprep.subr.bf16.mxu0 0
  %603 = vmatpush1.bf16.msra.mxu0 %v420
  %604 = vmatprep.subr.bf16.mxu0 0
  %605 = vmatpush1.bf16.msra.mxu0 %v421
  %606 = vmatprep.subr.bf16.mxu0 0
  %607 = vmatpush1.bf16.msra.mxu0 %v422
  %608 = vmatprep.subr.bf16.mxu0 0
  %609 = vmatpush1.bf16.msra.mxu0 %v423
  %610 = vmatprep.subr.bf16.mxu0 0
  %611 = vmatpush1.bf16.msra.mxu0 %v424
  %612 = vmatprep.subr.bf16.mxu0 0
  %613 = vmatpush1.bf16.msra.mxu0 %v425
  %614 = vmatprep.subr.bf16.mxu0 0
  %615 = vmatpush1.bf16.msra.mxu0 %v485
  %616 = vmatprep.mubr.bf16.mxu0 %v460
  %617 = vmatmul.mubr.bf16.gmra.mrb[0].mxu0 %v215
  %v618 = vpop.f32.mrb[0].mxu0
  %v619 = vadd.f32 %v522, %v618
  %v620 = vpop.f32.mrb[0].mxu0
  %v621 = vpop.f32.mrb[0].mxu0
  %v622 = vadd.f32 %v525, %v621
  %v623 = vpop.f32.mrb[0].mxu0
  %624 = vmatprep.mubr.bf16.mxu0 %v463
  %625 = vmatmul.mubr.bf16.gmra.mrb[0].mxu0 %v219
  %v626 = vpop.f32.mrb[0].mxu0
  %v627 = vadd.f32 %v530, %v626
  %v628 = vpop.f32.mrb[0].mxu0
  %v629 = vpop.f32.mrb[0].mxu0
  %v630 = vadd.f32 %v533, %v629
  %v631 = vpop.f32.mrb[0].mxu0
  %632 = vmatprep.mubr.bf16.mxu0 %v466
  %633 = vmatmul.mubr.bf16.gmra.mrb[0].mxu0 %v223
  %v634 = vpop.f32.mrb[0].mxu0
  %v635 = vadd.f32 %v538, %v634
  %v636 = vpop.f32.mrb[0].mxu0
  %v637 = vpop.f32.mrb[0].mxu0
  %v638 = vadd.f32 %v541, %v637
  %v639 = vpop.f32.mrb[0].mxu0
  %640 = vmatprep.mubr.bf16.mxu0 %v469
  %641 = vmatmul.mubr.bf16.gmra.mrb[0].mxu0 %v227
  %v642 = vpop.f32.mrb[0].mxu0
  %v643 = vadd.f32 %v546, %v642
  %v644 = vpop.f32.mrb[0].mxu0
  %v645 = vpop.f32.mrb[0].mxu0
  %v646 = vadd.f32 %v549, %v645
  %v647 = vpop.f32.mrb[0].mxu0
  %648 = vmatprep.mubr.bf16.mxu0 %v472
  %649 = vmatmul.mubr.bf16.gmra.mrb[0].mxu0 %v231
  %v650 = vpop.f32.mrb[0].mxu0
  %v651 = vadd.f32 %v554, %v650
  %v652 = vpop.f32.mrb[0].mxu0
  %v653 = vpop.f32.mrb[0].mxu0
  %v654 = vadd.f32 %v557, %v653
  %v655 = vpop.f32.mrb[0].mxu0
  %656 = vmatprep.mubr.bf16.mxu0 %v475
  %657 = vmatmul.mubr.bf16.gmra.mrb[0].mxu0 %v235
  %v658 = vpop.f32.mrb[0].mxu0
  %v659 = vadd.f32 %v562, %v658
  %v660 = vpop.f32.mrb[0].mxu0
  %v661 = vpop.f32.mrb[0].mxu0
  %v662 = vadd.f32 %v565, %v661
  %v663 = vpop.f32.mrb[0].mxu0
  %664 = vmatprep.mubr.bf16.mxu0 %v478
  %665 = vmatmul.mubr.bf16.gmra.mrb[0].mxu0 %v239
  %v666 = vpop.f32.mrb[0].mxu0
  %v667 = vadd.f32 %v570, %v666
  %v668 = vpop.f32.mrb[0].mxu0
  %v669 = vpop.f32.mrb[0].mxu0
  %v670 = vadd.f32 %v573, %v669
  %v671 = vpop.f32.mrb[0].mxu0
  %672 = vmatprep.mubr.bf16.mxu0 %v481
  %673 = vmatmul.mubr.bf16.gmra.mrb[0].mxu0 %v243
  %v674 = vpop.f32.mrb[0].mxu0
  %v675 = vadd.f32 %v578, %v674
  %v676 = vpop.f32.mrb[0].mxu0
  %v677 = vpop.f32.mrb[0].mxu0
  %v678 = vadd.f32 %v581, %v677
  %v679 = vpop.f32.mrb[0].mxu0
  %680 = vdwg.mxu0
  %v681 = vmax.f32 %v619, 0.0
  %v682 = vmax.f32 %v622, 0.0
  %v683 = vmax.f32 %v627, 0.0
  %v684 = vmax.f32 %v630, 0.0
  %v685 = vmax.f32 %v635, 0.0
  %v686 = vmax.f32 %v638, 0.0
  %v687 = vmax.f32 %v643, 0.0
  %v688 = vmax.f32 %v646, 0.0
  %v689 = vmax.f32 %v651, 0.0
  %v690 = vmax.f32 %v654, 0.0
  %v691 = vmax.f32 %v659, 0.0
  %v692 = vmax.f32 %v662, 0.0
  %v693 = vmax.f32 %v667, 0.0
  %v694 = vmax.f32 %v670, 0.0
  %v695 = vmax.f32 %v675, 0.0
  %v696 = vmax.f32 %v678, 0.0
  %v697 = vpack.c.bf16 %v682, %v681
  %v698 = vpack.c.bf16 %v684, %v683
  %v699 = vpack.c.bf16 %v686, %v685
  %v700 = vpack.c.bf16 %v688, %v687
  %v701 = vpack.c.bf16 %v690, %v689
  %v702 = vpack.c.bf16 %v692, %v691
  %v703 = vpack.c.bf16 %v694, %v693
  %v704 = vpack.c.bf16 %v696, %v695
  %v713 = vunpack.c.l.b16 %v697
  %v714 = vunpack.c.h.b16 %v697
  %v715 = vunpack.c.l.b16 %v698
  %v716 = vunpack.c.h.b16 %v698
  %v717 = vunpack.c.l.b16 %v699
  %v718 = vunpack.c.h.b16 %v699
  %v719 = vunpack.c.l.b16 %v700
  %v720 = vunpack.c.h.b16 %v700
  %v721 = vunpack.c.l.b16 %v701
  %v722 = vunpack.c.h.b16 %v701
  %v723 = vunpack.c.l.b16 %v702
  %v724 = vunpack.c.h.b16 %v702
  %v725 = vunpack.c.l.b16 %v703
  %v726 = vunpack.c.h.b16 %v703
  %v727 = vunpack.c.l.b16 %v704
  %v728 = vunpack.c.h.b16 %v704
  %v729 = vpack.c.b16 %v713, %v713
  %v730 = vpack.c.b16 %v714, %v714
  %v731 = vpack.c.b16 %v715, %v715
  %v732 = vpack.c.b16 %v716, %v716
  %v733 = vpack.c.b16 %v717, %v717
  %v734 = vpack.c.b16 %v718, %v718
  %v735 = vpack.c.b16 %v719, %v719
  %v736 = vpack.c.b16 %v720, %v720
  %v737 = vpack.c.b16 %v721, %v721
  %v738 = vpack.c.b16 %v722, %v722
  %v739 = vpack.c.b16 %v723, %v723
  %v740 = vpack.c.b16 %v724, %v724
  %v741 = vpack.c.b16 %v725, %v725
  %v742 = vpack.c.b16 %v726, %v726
  %v743 = vpack.c.b16 %v727, %v727
  %v744 = vpack.c.b16 %v728, %v728
  %761 = vst [vmem:[%s3] sm:$0xf] %v729
  %762 = vst [vmem:[%s3 + $0x4] sm:$0xf] %v730
  %763 = vst [vmem:[%s3 + $0x8] sm:$0xf] %v731
  %764 = vst [vmem:[%s3 + $0xc] sm:$0xf] %v732
  %765 = vst [vmem:[%s3 + $0x10] sm:$0xf] %v733
  %766 = vst [vmem:[%s3 + $0x14] sm:$0xf] %v734
  %767 = vst [vmem:[%s3 + $0x18] sm:$0xf] %v735
  %768 = vst [vmem:[%s3 + $0x1c] sm:$0xf] %v736
  %769 = vst [vmem:[%s3 + $0x20] sm:$0xf] %v737
  %770 = vst [vmem:[%s3 + $0x24] sm:$0xf] %v738
  %771 = vst [vmem:[%s3 + $0x28] sm:$0xf] %v739
  %772 = vst [vmem:[%s3 + $0x2c] sm:$0xf] %v740
  %773 = vst [vmem:[%s3 + $0x30] sm:$0xf] %v741
  %774 = vst [vmem:[%s3 + $0x34] sm:$0xf] %v742
  %775 = vst [vmem:[%s3 + $0x38] sm:$0xf] %v743
  %776 = vst [vmem:[%s3 + $0x3c] sm:$0xf] %v744
  // Predicated region
  $region14: #{lenet5_forward.8} parent=0 // pred_check
    _
  $region15: #{lenet5_forward.8} parent=0 // pred_check_branch
    %778 = sbr.rel (0) target = $region17
  $region16: #{lenet5_forward.8} parent=0 // pred_region
    _
  $region17: #{lenet5_forward.8} parent=0 // pred_fallthru
    _
  // Predicated region
  $region18: #{lenet5_forward.8} parent=0 // pred_check
    _
  $region19: #{lenet5_forward.8} parent=0 // pred_check_branch
    %780 = sbr.rel (0) target = $region21
  $region20: #{lenet5_forward.8} parent=0 // pred_region
    _
  $region21: #{lenet5_forward.8} parent=0 // pred_fallthru
    _

// kernel: lenet5_forward.9
$region0: #{lenet5_forward.9}
  #allocation0 [shape = 'u32[]', space=smem, size = 0x4, offset = 0x4, fixed_abs, tag = 'smem constant byte address 0x4 - core index']
  #allocation1 [shape = 'u32[144,128]{1,0:T(1,128)}', space=vmem, size = 0x12000, scoped, tag = 'internal scratch']
  %s0 = inlined_call_operand.vmem [shape: bf16[8,2048], index: 0, kind: input, shape index: {}]
  %s1 = inlined_call_operand.vmem [shape: bf16[8,512], index: 1, kind: output, shape index: {}]
  %s2 = sld [smem:[#allocation0]]
  $region14: #{lenet5_forward.9} parent=0
    _
  %s4 = ssub.s32 1, %s2
  %s5 = scalar_select 0, %s4, %s2
  // Predicated region
  $region2: #{lenet5_forward.9} parent=0 // pred_check
    _
  $region3: #{lenet5_forward.9} parent=0 // pred_check_branch
    %7 = sbr.rel (0) target = $region5
  $region4: #{lenet5_forward.9} parent=0 // pred_region
    _
  $region5: #{lenet5_forward.9} parent=0 // pred_fallthru
    _
  %v8 = vld [vmem:[%s0] sm:$0xff]
  %v9 = vld [vmem:[%s0 + $0x8] sm:$0xff]
  %v10 = vld [vmem:[%s0 + $0x10] sm:$0xff]
  %v11 = vld [vmem:[%s0 + $0x18] sm:$0xff]
  %v12 = vld [vmem:[%s0 + $0x20] sm:$0xff]
  %v13 = vld [vmem:[%s0 + $0x28] sm:$0xff]
  %v14 = vld [vmem:[%s0 + $0x30] sm:$0xff]
  %v15 = vld [vmem:[%s0 + $0x38] sm:$0xff]
  %v16 = vmax.bf16 %v8, %v12
  %v17 = vmax.bf16 %v9, %v13
  %v18 = vmax.bf16 %v10, %v14
  %v19 = vmax.bf16 %v11, %v15
  %v21 = vrot.slane %v16, 4
  %v23 = vmax.bf16 %v16, %v21
  %24 = vst [vmem:[%s1] sm:$0xf] %v23
  %v26 = vrot.slane %v17, 4
  %v28 = vmax.bf16 %v17, %v26
  %29 = vst [vmem:[%s1 + $0x4] sm:$0xf] %v28
  %v31 = vrot.slane %v18, 4
  %v33 = vmax.bf16 %v18, %v31
  %34 = vst [vmem:[%s1 + $0x8] sm:$0xf] %v33
  %v36 = vrot.slane %v19, 4
  %v38 = vmax.bf16 %v19, %v36
  %39 = vst [vmem:[%s1 + $0xc] sm:$0xf] %v38
  // Predicated region
  $region6: #{lenet5_forward.9} parent=0 // pred_check
    _
  $region7: #{lenet5_forward.9} parent=0 // pred_check_branch
    %41 = sbr.rel (0) target = $region9
  $region8: #{lenet5_forward.9} parent=0 // pred_region
    _
  $region9: #{lenet5_forward.9} parent=0 // pred_fallthru
    _
  // Predicated region
  $region10: #{lenet5_forward.9} parent=0 // pred_check
    _
  $region11: #{lenet5_forward.9} parent=0 // pred_check_branch
    %43 = sbr.rel (0) target = $region13
  $region12: #{lenet5_forward.9} parent=0 // pred_region
    _
  $region13: #{lenet5_forward.9} parent=0 // pred_fallthru
    _

// kernel: lenet5_forward.11
$region0: #{lenet5_forward.11}
  #allocation0 [shape = 'u32[]', space=smem, size = 0x4, offset = 0x4, fixed_abs, tag = 'smem constant byte address 0x4 - core index']
  #allocation1 [shape = 'u32[144,128]{1,0:T(1,128)}', space=vmem, size = 0x12000, scoped, tag = 'internal scratch']
  %s0 = inlined_call_operand.vmem [shape: bf16[8,512], index: 0, kind: input, shape index: {}]
  %s1 = inlined_call_operand.vmem [shape: bf16[512,128], index: 1, kind: input, shape index: {}]
  %s2 = inlined_call_operand.vmem [shape: f32[1,128], index: 2, kind: input, shape index: {}]
  %s3 = inlined_call_operand.vmem [shape: f32[8,128], index: 3, kind: output, shape index: {}]
  %s4 = sld [smem:[#allocation0]]
  $region22: #{lenet5_forward.11} parent=0
    _
  %s6 = ssub.s32 1, %s4
  %s7 = scalar_select 0, %s6, %s4
  // Predicated region
  $region2: #{lenet5_forward.11} parent=0 // pred_check
    _
  $region3: #{lenet5_forward.11} parent=0 // pred_check_branch
    %9 = sbr.rel (0) target = $region5
  $region4: #{lenet5_forward.11} parent=0 // pred_region
    _
  $region5: #{lenet5_forward.11} parent=0 // pred_fallthru
    _
  // Predicated region
  $region6: #{lenet5_forward.11} parent=0 // pred_check
    _
  $region7: #{lenet5_forward.11} parent=0 // pred_check_branch
    %11 = sbr.rel (0) target = $region9
  $region8: #{lenet5_forward.11} parent=0 // pred_region
    _
  $region9: #{lenet5_forward.11} parent=0 // pred_fallthru
    _
  // Predicated region
  $region10: #{lenet5_forward.11} parent=0 // pred_check
    _
  $region11: #{lenet5_forward.11} parent=0 // pred_check_branch
    %13 = sbr.rel (0) target = $region13
  $region12: #{lenet5_forward.11} parent=0 // pred_region
    _
  $region13: #{lenet5_forward.11} parent=0 // pred_fallthru
    _
  %v15 = vld [vmem:[%s0] sm:$0xff]
  %v16 = vld [vmem:[%s0 + $0x8] sm:$0xff]
  %v17 = vld [vmem:[%s1] sm:$0xf]
  %v18 = vld [vmem:[%s1 + $0x4] sm:$0xf]
  %v19 = vld [vmem:[%s1 + $0x8] sm:$0xf]
  %v20 = vld [vmem:[%s1 + $0xc] sm:$0xf]
  %v21 = vld [vmem:[%s1 + $0x10] sm:$0xf]
  %v22 = vld [vmem:[%s1 + $0x14] sm:$0xf]
  %v23 = vld [vmem:[%s1 + $0x18] sm:$0xf]
  %v24 = vld [vmem:[%s1 + $0x1c] sm:$0xf]
  %v25 = vld [vmem:[%s1 + $0x20] sm:$0xf]
  %v26 = vld [vmem:[%s1 + $0x24] sm:$0xf]
  %v27 = vld [vmem:[%s1 + $0x28] sm:$0xf]
  %v28 = vld [vmem:[%s1 + $0x2c] sm:$0xf]
  %v29 = vld [vmem:[%s1 + $0x30] sm:$0xf]
  %v30 = vld [vmem:[%s1 + $0x34] sm:$0xf]
  %v31 = vld [vmem:[%s1 + $0x38] sm:$0xf]
  %v32 = vld [vmem:[%s1 + $0x3c] sm:$0xf]
  %v33 = vld [vmem:[%s1 + $0x40] sm:$0xf]
  %v34 = vld [vmem:[%s1 + $0x44] sm:$0xf]
  %v35 = vld [vmem:[%s1 + $0x48] sm:$0xf]
  %v36 = vld [vmem:[%s1 + $0x4c] sm:$0xf]
  %v37 = vld [vmem:[%s1 + $0x50] sm:$0xf]
  %v38 = vld [vmem:[%s1 + $0x54] sm:$0xf]
  %v39 = vld [vmem:[%s1 + $0x58] sm:$0xf]
  %v40 = vld [vmem:[%s1 + $0x5c] sm:$0xf]
  %v41 = vld [vmem:[%s1 + $0x60] sm:$0xf]
  %v42 = vld [vmem:[%s1 + $0x64] sm:$0xf]
  %v43 = vld [vmem:[%s1 + $0x68] sm:$0xf]
  %v44 = vld [vmem:[%s1 + $0x6c] sm:$0xf]
  %v45 = vld [vmem:[%s1 + $0x70] sm:$0xf]
  %v46 = vld [vmem:[%s1 + $0x74] sm:$0xf]
  %v47 = vld [vmem:[%s1 + $0x78] sm:$0xf]
  %v48 = vld [vmem:[%s1 + $0x7c] sm:$0xf]
  %v49 = vld [vmem:[%s1 + $0x80] sm:$0xf]
  %v50 = vld [vmem:[%s1 + $0x84] sm:$0xf]
  %v51 = vld [vmem:[%s1 + $0x88] sm:$0xf]
  %v52 = vld [vmem:[%s1 + $0x8c] sm:$0xf]
  %v53 = vld [vmem:[%s1 + $0x90] sm:$0xf]
  %v54 = vld [vmem:[%s1 + $0x94] sm:$0xf]
  %v55 = vld [vmem:[%s1 + $0x98] sm:$0xf]
  %v56 = vld [vmem:[%s1 + $0x9c] sm:$0xf]
  %v57 = vld [vmem:[%s1 + $0xa0] sm:$0xf]
  %v58 = vld [vmem:[%s1 + $0xa4] sm:$0xf]
  %v59 = vld [vmem:[%s1 + $0xa8] sm:$0xf]
  %v60 = vld [vmem:[%s1 + $0xac] sm:$0xf]
  %v61 = vld [vmem:[%s1 + $0xb0] sm:$0xf]
  %v62 = vld [vmem:[%s1 + $0xb4] sm:$0xf]
  %v63 = vld [vmem:[%s1 + $0xb8] sm:$0xf]
  %v64 = vld [vmem:[%s1 + $0xbc] sm:$0xf]
  %v65 = vld [vmem:[%s1 + $0xc0] sm:$0xf]
  %v66 = vld [vmem:[%s1 + $0xc4] sm:$0xf]
  %v67 = vld [vmem:[%s1 + $0xc8] sm:$0xf]
  %v68 = vld [vmem:[%s1 + $0xcc] sm:$0xf]
  %v69 = vld [vmem:[%s1 + $0xd0] sm:$0xf]
  %v70 = vld [vmem:[%s1 + $0xd4] sm:$0xf]
  %v71 = vld [vmem:[%s1 + $0xd8] sm:$0xf]
  %v72 = vld [vmem:[%s1 + $0xdc] sm:$0xf]
  %v73 = vld [vmem:[%s1 + $0xe0] sm:$0xf]
  %v74 = vld [vmem:[%s1 + $0xe4] sm:$0xf]
  %v75 = vld [vmem:[%s1 + $0xe8] sm:$0xf]
  %v76 = vld [vmem:[%s1 + $0xec] sm:$0xf]
  %v77 = vld [vmem:[%s1 + $0xf0] sm:$0xf]
  %v78 = vld [vmem:[%s1 + $0xf4] sm:$0xf]
  %v79 = vld [vmem:[%s1 + $0xf8] sm:$0xf]
  %v80 = vld [vmem:[%s1 + $0xfc] sm:$0xf]
  %v81 = vld [vmem:[%s2] sm:$0x1]
  %v83 = vlaneseq
  %v84 = vshrl.u32 %v83, 7
  %v85 = vsub.s32 0, %v84
  %v86 = vrot.slane %v81, %v85
  %v90 = vunpack.c.l.b16 %v15
  %v91 = vunpack.c.h.b16 %v15
  %v92 = vunpack.c.l.b16 %v16
  %v93 = vunpack.c.h.b16 %v16
  %v94 = vpack.c.b16 %v90, %v90
  %v95 = vpack.c.b16 %v91, %v91
  %v96 = vpack.c.b16 %v92, %v92
  %v97 = vpack.c.b16 %v93, %v93
  %v166 = vunpack.c.l.b16 %v17
  %v167 = vunpack.c.l.b16 %v18
  %v168 = vunpack.c.l.b16 %v19
  %v169 = vunpack.c.l.b16 %v20
  %v170 = vunpack.c.l.b16 %v21
  %v171 = vunpack.c.l.b16 %v22
  %v172 = vunpack.c.l.b16 %v23
  %v173 = vunpack.c.l.b16 %v24
  %v174 = vunpack.c.l.b16 %v25
  %v175 = vunpack.c.l.b16 %v26
  %v176 = vunpack.c.l.b16 %v27
  %v177 = vunpack.c.l.b16 %v28
  %v178 = vunpack.c.l.b16 %v29
  %v179 = vunpack.c.l.b16 %v30
  %v180 = vunpack.c.l.b16 %v31
  %v181 = vunpack.c.l.b16 %v32
  %v182 = vunpack.c.l.b16 %v33
  %v183 = vunpack.c.l.b16 %v34
  %v184 = vunpack.c.l.b16 %v35
  %v185 = vunpack.c.l.b16 %v36
  %v186 = vunpack.c.l.b16 %v37
  %v187 = vunpack.c.l.b16 %v38
  %v188 = vunpack.c.l.b16 %v39
  %v189 = vunpack.c.l.b16 %v40
  %v190 = vunpack.c.l.b16 %v41
  %v191 = vunpack.c.l.b16 %v42
  %v192 = vunpack.c.l.b16 %v43
  %v193 = vunpack.c.l.b16 %v44
  %v194 = vunpack.c.l.b16 %v45
  %v195 = vunpack.c.l.b16 %v46
  %v196 = vunpack.c.l.b16 %v47
  %v197 = vunpack.c.l.b16 %v48
  %v198 = vunpack.c.l.b16 %v49
  %v199 = vunpack.c.l.b16 %v50
  %v200 = vunpack.c.l.b16 %v51
  %v201 = vunpack.c.l.b16 %v52
  %v202 = vunpack.c.l.b16 %v53
  %v203 = vunpack.c.l.b16 %v54
  %v204 = vunpack.c.l.b16 %v55
  %v205 = vunpack.c.l.b16 %v56
  %v206 = vunpack.c.l.b16 %v57
  %v207 = vunpack.c.l.b16 %v58
  %v208 = vunpack.c.l.b16 %v59
  %v209 = vunpack.c.l.b16 %v60
  %v210 = vunpack.c.l.b16 %v61
  %v211 = vunpack.c.l.b16 %v62
  %v212 = vunpack.c.l.b16 %v63
  %v213 = vunpack.c.l.b16 %v64
  %v214 = vunpack.c.l.b16 %v65
  %v215 = vunpack.c.l.b16 %v66
  %v216 = vunpack.c.l.b16 %v67
  %v217 = vunpack.c.l.b16 %v68
  %v218 = vunpack.c.l.b16 %v69
  %v219 = vunpack.c.l.b16 %v70
  %v220 = vunpack.c.l.b16 %v71
  %v221 = vunpack.c.l.b16 %v72
  %v222 = vunpack.c.l.b16 %v73
  %v223 = vunpack.c.l.b16 %v74
  %v224 = vunpack.c.l.b16 %v75
  %v225 = vunpack.c.l.b16 %v76
  %v226 = vunpack.c.l.b16 %v77
  %v227 = vunpack.c.l.b16 %v78
  %v228 = vunpack.c.l.b16 %v79
  %v229 = vunpack.c.l.b16 %v80
  %v230 = vpack.c.b16 %v167, %v166
  %v231 = vpack.c.b16 %v169, %v168
  %v232 = vpack.c.b16 %v171, %v170
  %v233 = vpack.c.b16 %v173, %v172
  %v234 = vpack.c.b16 %v175, %v174
  %v235 = vpack.c.b16 %v177, %v176
  %v236 = vpack.c.b16 %v179, %v178
  %v237 = vpack.c.b16 %v181, %v180
  %v238 = vpack.c.b16 %v183, %v182
  %v239 = vpack.c.b16 %v185, %v184
  %v240 = vpack.c.b16 %v187, %v186
  %v241 = vpack.c.b16 %v189, %v188
  %v242 = vpack.c.b16 %v191, %v190
  %v243 = vpack.c.b16 %v193, %v192
  %v244 = vpack.c.b16 %v195, %v194
  %v245 = vpack.c.b16 %v197, %v196
  %v246 = vpack.c.b16 %v199, %v198
  %v247 = vpack.c.b16 %v201, %v200
  %v248 = vpack.c.b16 %v203, %v202
  %v249 = vpack.c.b16 %v205, %v204
  %v250 = vpack.c.b16 %v207, %v206
  %v251 = vpack.c.b16 %v209, %v208
  %v252 = vpack.c.b16 %v211, %v210
  %v253 = vpack.c.b16 %v213, %v212
  %v254 = vpack.c.b16 %v215, %v214
  %v255 = vpack.c.b16 %v217, %v216
  %v256 = vpack.c.b16 %v219, %v218
  %v257 = vpack.c.b16 %v221, %v220
  %v258 = vpack.c.b16 %v223, %v222
  %v259 = vpack.c.b16 %v225, %v224
  %v260 = vpack.c.b16 %v227, %v226
  %v261 = vpack.c.b16 %v229, %v228
  %294 = vmatprep.subr.bf16.mxu0 0
  %295 = vmatpush1.bf16.msra.mxu0 %v230
  %296 = vmatprep.subr.bf16.mxu0 0
  %297 = vmatpush1.bf16.msra.mxu0 %v231
  %298 = vmatprep.subr.bf16.mxu0 0
  %299 = vmatpush1.bf16.msra.mxu0 %v232
  %300 = vmatprep.subr.bf16.mxu0 0
  %301 = vmatpush1.bf16.msra.mxu0 %v233
  %302 = vmatprep.subr.bf16.mxu0 0
  %303 = vmatpush1.bf16.msra.mxu0 %v234
  %304 = vmatprep.subr.bf16.mxu0 0
  %305 = vmatpush1.bf16.msra.mxu0 %v235
  %306 = vmatprep.subr.bf16.mxu0 0
  %307 = vmatpush1.bf16.msra.mxu0 %v236
  %308 = vmatprep.subr.bf16.mxu0 0
  %309 = vmatpush1.bf16.msra.mxu0 %v237
  %310 = vmatprep.subr.bf16.mxu0 0
  %311 = vmatpush1.bf16.msra.mxu0 %v238
  %312 = vmatprep.subr.bf16.mxu0 0
  %313 = vmatpush1.bf16.msra.mxu0 %v239
  %314 = vmatprep.subr.bf16.mxu0 0
  %315 = vmatpush1.bf16.msra.mxu0 %v240
  %316 = vmatprep.subr.bf16.mxu0 0
  %317 = vmatpush1.bf16.msra.mxu0 %v241
  %318 = vmatprep.subr.bf16.mxu0 0
  %319 = vmatpush1.bf16.msra.mxu0 %v242
  %320 = vmatprep.subr.bf16.mxu0 0
  %321 = vmatpush1.bf16.msra.mxu0 %v243
  %322 = vmatprep.subr.bf16.mxu0 0
  %323 = vmatpush1.bf16.msra.mxu0 %v244
  %324 = vmatprep.subr.bf16.mxu0 0
  %325 = vmatpush1.bf16.msra.mxu0 %v245
  %326 = vmatprep.mubr.bf16.mxu0 %v95
  %327 = vmatmul.mubr.bf16.gmra.mrb[0].mxu0 %v94
  %v328 = vpop.f32.mrb[0].mxu0
  %v329 = vadd.f32 %v86, %v328
  %v330 = vpop.f32.mrb[0].mxu0
  %v331 = vpop.f32.mrb[0].mxu0
  %v332 = vpop.f32.mrb[0].mxu0
  %333 = vdwg.mxu0
  %334 = vmatprep.subr.bf16.mxu0 0
  %335 = vmatpush1.bf16.msra.mxu0 %v246
  %336 = vmatprep.subr.bf16.mxu0 0
  %337 = vmatpush1.bf16.msra.mxu0 %v247
  %338 = vmatprep.subr.bf16.mxu0 0
  %339 = vmatpush1.bf16.msra.mxu0 %v248
  %340 = vmatprep.subr.bf16.mxu0 0
  %341 = vmatpush1.bf16.msra.mxu0 %v249
  %342 = vmatprep.subr.bf16.mxu0 0
  %343 = vmatpush1.bf16.msra.mxu0 %v250
  %344 = vmatprep.subr.bf16.mxu0 0
  %345 = vmatpush1.bf16.msra.mxu0 %v251
  %346 = vmatprep.subr.bf16.mxu0 0
  %347 = vmatpush1.bf16.msra.mxu0 %v252
  %348 = vmatprep.subr.bf16.mxu0 0
  %349 = vmatpush1.bf16.msra.mxu0 %v253
  %350 = vmatprep.subr.bf16.mxu0 0
  %351 = vmatpush1.bf16.msra.mxu0 %v254
  %352 = vmatprep.subr.bf16.mxu0 0
  %353 = vmatpush1.bf16.msra.mxu0 %v255
  %354 = vmatprep.subr.bf16.mxu0 0
  %355 = vmatpush1.bf16.msra.mxu0 %v256
  %356 = vmatprep.subr.bf16.mxu0 0
  %357 = vmatpush1.bf16.msra.mxu0 %v257
  %358 = vmatprep.subr.bf16.mxu0 0
  %359 = vmatpush1.bf16.msra.mxu0 %v258
  %360 = vmatprep.subr.bf16.mxu0 0
  %361 = vmatpush1.bf16.msra.mxu0 %v259
  %362 = vmatprep.subr.bf16.mxu0 0
  %363 = vmatpush1.bf16.msra.mxu0 %v260
  %364 = vmatprep.subr.bf16.mxu0 0
  %365 = vmatpush1.bf16.msra.mxu0 %v261
  %366 = vmatprep.mubr.bf16.mxu0 %v97
  %367 = vmatmul.mubr.bf16.gmra.mrb[0].mxu0 %v96
  %v368 = vpop.f32.mrb[0].mxu0
  %v369 = vadd.f32 %v329, %v368
  %v370 = vpop.f32.mrb[0].mxu0
  %v371 = vpop.f32.mrb[0].mxu0
  %v372 = vpop.f32.mrb[0].mxu0
  %373 = vdwg.mxu0
  %374 = vst [vmem:[%s3] sm:$0xff] %v369
  // Predicated region
  $region14: #{lenet5_forward.11} parent=0 // pred_check
    _
  $region15: #{lenet5_forward.11} parent=0 // pred_check_branch
    %376 = sbr.rel (0) target = $region17
  $region16: #{lenet5_forward.11} parent=0 // pred_region
    _
  $region17: #{lenet5_forward.11} parent=0 // pred_fallthru
    _
  // Predicated region
  $region18: #{lenet5_forward.11} parent=0 // pred_check
    _
  $region19: #{lenet5_forward.11} parent=0 // pred_check_branch
    %378 = sbr.rel (0) target = $region21
  $region20: #{lenet5_forward.11} parent=0 // pred_region
    _
  $region21: #{lenet5_forward.11} parent=0 // pred_fallthru
    _

// kernel: lenet5_forward.10
$region0: #{lenet5_forward.10}
  #allocation0 [shape = 'u32[]', space=smem, size = 0x4, offset = 0x4, fixed_abs, tag = 'smem constant byte address 0x4 - core index']
  #allocation1 [shape = 'u32[144,128]{1,0:T(1,128)}', space=vmem, size = 0x12000, scoped, tag = 'internal scratch']
  %s0 = inlined_call_operand.vmem [shape: bf16[8,2048], index: 0, kind: input, shape index: {}]
  %s1 = inlined_call_operand.vmem [shape: bf16[2048,512], index: 1, kind: input, shape index: {}]
  %s2 = inlined_call_operand.vmem [shape: f32[1,512], index: 2, kind: input, shape index: {}]
  %s3 = inlined_call_operand.vmem [shape: bf16[8,512], index: 3, kind: output, shape index: {}]
  %s4 = sld [smem:[#allocation0]]
  $region22: #{lenet5_forward.10} parent=0
    _
  %s6 = ssub.s32 1, %s4
  %s7 = scalar_select 0, %s6, %s4
  // Predicated region
  $region2: #{lenet5_forward.10} parent=0 // pred_check
    _
  $region3: #{lenet5_forward.10} parent=0 // pred_check_branch
    %9 = sbr.rel (0) target = $region5
  $region4: #{lenet5_forward.10} parent=0 // pred_region
    _
  $region5: #{lenet5_forward.10} parent=0 // pred_fallthru
    _
  // Predicated region
  $region6: #{lenet5_forward.10} parent=0 // pred_check
    _
  $region7: #{lenet5_forward.10} parent=0 // pred_check_branch
    %11 = sbr.rel (0) target = $region9
  $region8: #{lenet5_forward.10} parent=0 // pred_region
    _
  $region9: #{lenet5_forward.10} parent=0 // pred_fallthru
    _
  // Predicated region
  $region10: #{lenet5_forward.10} parent=0 // pred_check
    _
  $region11: #{lenet5_forward.10} parent=0 // pred_check_branch
    %13 = sbr.rel (0) target = $region13
  $region12: #{lenet5_forward.10} parent=0 // pred_region
    _
  $region13: #{lenet5_forward.10} parent=0 // pred_fallthru
    _
  %v14 = vld [vmem:[%s0] sm:$0xff]
  %v15 = vld [vmem:[%s0 + $0x8] sm:$0xff]
  %v16 = vld [vmem:[%s0 + $0x10] sm:$0xff]
  %v17 = vld [vmem:[%s0 + $0x18] sm:$0xff]
  %v18 = vld [vmem:[%s0 + $0x20] sm:$0xff]
  %v19 = vld [vmem:[%s0 + $0x28] sm:$0xff]
  %v20 = vld [vmem:[%s0 + $0x30] sm:$0xff]
  %v21 = vld [vmem:[%s0 + $0x38] sm:$0xff]
  %v22 = vld [vmem:[%s1] sm:$0xff]
  %v23 = vld [vmem:[%s1 + $0x8] sm:$0xff]
  %v24 = vld [vmem:[%s1 + $0x10] sm:$0xff]
  %v25 = vld [vmem:[%s1 + $0x18] sm:$0xff]
  %v26 = vld [vmem:[%s1 + $0x20] sm:$0xff]
  %v27 = vld [vmem:[%s1 + $0x28] sm:$0xff]
  %v28 = vld [vmem:[%s1 + $0x30] sm:$0xff]
  %v29 = vld [vmem:[%s1 + $0x38] sm:$0xff]
  %v30 = vld [vmem:[%s1 + $0x40] sm:$0xff]
  %v31 = vld [vmem:[%s1 + $0x48] sm:$0xff]
  %v32 = vld [vmem:[%s1 + $0x50] sm:$0xff]
  %v33 = vld [vmem:[%s1 + $0x58] sm:$0xff]
  %v34 = vld [vmem:[%s1 + $0x60] sm:$0xff]
  %v35 = vld [vmem:[%s1 + $0x68] sm:$0xff]
  %v36 = vld [vmem:[%s1 + $0x70] sm:$0xff]
  %v37 = vld [vmem:[%s1 + $0x78] sm:$0xff]
  %v38 = vld [vmem:[%s1 + $0x80] sm:$0xff]
  %v39 = vld [vmem:[%s1 + $0x88] sm:$0xff]
  %v40 = vld [vmem:[%s1 + $0x90] sm:$0xff]
  %v41 = vld [vmem:[%s1 + $0x98] sm:$0xff]
  %v42 = vld [vmem:[%s1 + $0xa0] sm:$0xff]
  %v43 = vld [vmem:[%s1 + $0xa8] sm:$0xff]
  %v44 = vld [vmem:[%s1 + $0xb0] sm:$0xff]
  %v45 = vld [vmem:[%s1 + $0xb8] sm:$0xff]
  %v46 = vld [vmem:[%s1 + $0xc0] sm:$0xff]
  %v47 = vld [vmem:[%s1 + $0xc8] sm:$0xff]
  %v48 = vld [vmem:[%s1 + $0xd0] sm:$0xff]
  %v49 = vld [vmem:[%s1 + $0xd8] sm:$0xff]
  %v50 = vld [vmem:[%s1 + $0xe0] sm:$0xff]
  %v51 = vld [vmem:[%s1 + $0xe8] sm:$0xff]
  %v52 = vld [vmem:[%s1 + $0xf0] sm:$0xff]
  %v53 = vld [vmem:[%s1 + $0xf8] sm:$0xff]
  %v54 = vld [vmem:[%s1 + $0x100] sm:$0xff]
  %v55 = vld [vmem:[%s1 + $0x108] sm:$0xff]
  %v56 = vld [vmem:[%s1 + $0x110] sm:$0xff]
  %v57 = vld [vmem:[%s1 + $0x118] sm:$0xff]
  %v58 = vld [vmem:[%s1 + $0x120] sm:$0xff]
  %v59 = vld [vmem:[%s1 + $0x128] sm:$0xff]
  %v60 = vld [vmem:[%s1 + $0x130] sm:$0xff]
  %v61 = vld [vmem:[%s1 + $0x138] sm:$0xff]
  %v62 = vld [vmem:[%s1 + $0x140] sm:$0xff]
  %v63 = vld [vmem:[%s1 + $0x148] sm:$0xff]
  %v64 = vld [vmem:[%s1 + $0x150] sm:$0xff]
  %v65 = vld [vmem:[%s1 + $0x158] sm:$0xff]
  %v66 = vld [vmem:[%s1 + $0x160] sm:$0xff]
  %v67 = vld [vmem:[%s1 + $0x168] sm:$0xff]
  %v68 = vld [vmem:[%s1 + $0x170] sm:$0xff]
  %v69 = vld [vmem:[%s1 + $0x178] sm:$0xff]
  %v70 = vld [vmem:[%s1 + $0x180] sm:$0xff]
  %v71 = vld [vmem:[%s1 + $0x188] sm:$0xff]
  %v72 = vld [vmem:[%s1 + $0x190] sm:$0xff]
  %v73 = vld [vmem:[%s1 + $0x198] sm:$0xff]
  %v74 = vld [vmem:[%s1 + $0x1a0] sm:$0xff]
  %v75 = vld [vmem:[%s1 + $0x1a8] sm:$0xff]
  %v76 = vld [vmem:[%s1 + $0x1b0] sm:$0xff]
  %v77 = vld [vmem:[%s1 + $0x1b8] sm:$0xff]
  %v78 = vld [vmem:[%s1 + $0x1c0] sm:$0xff]
  %v79 = vld [vmem:[%s1 + $0x1c8] sm:$0xff]
  %v80 = vld [vmem:[%s1 + $0x1d0] sm:$0xff]
  %v81 = vld [vmem:[%s1 + $0x1d8] sm:$0xff]
  %v82 = vld [vmem:[%s1 + $0x1e0] sm:$0xff]
  %v83 = vld [vmem:[%s1 + $0x1e8] sm:$0xff]
  %v84 = vld [vmem:[%s1 + $0x1f0] sm:$0xff]
  %v85 = vld [vmem:[%s1 + $0x1f8] sm:$0xff]
  %v86 = vld [vmem:[%s1 + $0x200] sm:$0xff]
  %v87 = vld [vmem:[%s1 + $0x208] sm:$0xff]
  %v88 = vld [vmem:[%s1 + $0x210] sm:$0xff]
  %v89 = vld [vmem:[%s1 + $0x218] sm:$0xff]
  %v90 = vld [vmem:[%s1 + $0x220] sm:$0xff]
  %v91 = vld [vmem:[%s1 + $0x228] sm:$0xff]
  %v92 = vld [vmem:[%s1 + $0x230] sm:$0xff]
  %v93 = vld [vmem:[%s1 + $0x238] sm:$0xff]
  %v94 = vld [vmem:[%s1 + $0x240] sm:$0xff]
  %v95 = vld [vmem:[%s1 + $0x248] sm:$0xff]
  %v96 = vld [vmem:[%s1 + $0x250] sm:$0xff]
  %v97 = vld [vmem:[%s1 + $0x258] sm:$0xff]
  %v98 = vld [vmem:[%s1 + $0x260] sm:$0xff]
  %v99 = vld [vmem:[%s1 + $0x268] sm:$0xff]
  %v100 = vld [vmem:[%s1 + $0x270] sm:$0xff]
  %v101 = vld [vmem:[%s1 + $0x278] sm:$0xff]
  %v102 = vld [vmem:[%s1 + $0x280] sm:$0xff]
  %v103 = vld [vmem:[%s1 + $0x288] sm:$0xff]
  %v104 = vld [vmem:[%s1 + $0x290] sm:$0xff]
  %v105 = vld [vmem:[%s1 + $0x298] sm:$0xff]
  %v106 = vld [vmem:[%s1 + $0x2a0] sm:$0xff]
  %v107 = vld [vmem:[%s1 + $0x2a8] sm:$0xff]
  %v108 = vld [vmem:[%s1 + $0x2b0] sm:$0xff]
  %v109 = vld [vmem:[%s1 + $0x2b8] sm:$0xff]
  %v110 = vld [vmem:[%s1 + $0x2c0] sm:$0xff]
  %v111 = vld [vmem:[%s1 + $0x2c8] sm:$0xff]
  %v112 = vld [vmem:[%s1 + $0x2d0] sm:$0xff]
  %v113 = vld [vmem:[%s1 + $0x2d8] sm:$0xff]
  %v114 = vld [vmem:[%s1 + $0x2e0] sm:$0xff]
  %v115 = vld [vmem:[%s1 + $0x2e8] sm:$0xff]
  %v116 = vld [vmem:[%s1 + $0x2f0] sm:$0xff]
  %v117 = vld [vmem:[%s1 + $0x2f8] sm:$0xff]
  %v118 = vld [vmem:[%s1 + $0x300] sm:$0xff]
  %v119 = vld [vmem:[%s1 + $0x308] sm:$0xff]
  %v120 = vld [vmem:[%s1 + $0x310] sm:$0xff]
  %v121 = vld [vmem:[%s1 + $0x318] sm:$0xff]
  %v122 = vld [vmem:[%s1 + $0x320] sm:$0xff]
  %v123 = vld [vmem:[%s1 + $0x328] sm:$0xff]
  %v124 = vld [vmem:[%s1 + $0x330] sm:$0xff]
  %v125 = vld [vmem:[%s1 + $0x338] sm:$0xff]
  %v126 = vld [vmem:[%s1 + $0x340] sm:$0xff]
  %v127 = vld [vmem:[%s1 + $0x348] sm:$0xff]
  %v128 = vld [vmem:[%s1 + $0x350] sm:$0xff]
  %v129 = vld [vmem:[%s1 + $0x358] sm:$0xff]
  %v130 = vld [vmem:[%s1 + $0x360] sm:$0xff]
  %v131 = vld [vmem:[%s1 + $0x368] sm:$0xff]
  %v132 = vld [vmem:[%s1 + $0x370] sm:$0xff]
  %v133 = vld [vmem:[%s1 + $0x378] sm:$0xff]
  %v134 = vld [vmem:[%s1 + $0x380] sm:$0xff]
  %v135 = vld [vmem:[%s1 + $0x388] sm:$0xff]
  %v136 = vld [vmem:[%s1 + $0x390] sm:$0xff]
  %v137 = vld [vmem:[%s1 + $0x398] sm:$0xff]
  %v138 = vld [vmem:[%s1 + $0x3a0] sm:$0xff]
  %v139 = vld [vmem:[%s1 + $0x3a8] sm:$0xff]
  %v140 = vld [vmem:[%s1 + $0x3b0] sm:$0xff]
  %v141 = vld [vmem:[%s1 + $0x3b8] sm:$0xff]
  %v142 = vld [vmem:[%s1 + $0x3c0] sm:$0xff]
  %v143 = vld [vmem:[%s1 + $0x3c8] sm:$0xff]
  %v144 = vld [vmem:[%s1 + $0x3d0] sm:$0xff]
  %v145 = vld [vmem:[%s1 + $0x3d8] sm:$0xff]
  %v146 = vld [vmem:[%s1 + $0x3e0] sm:$0xff]
  %v147 = vld [vmem:[%s1 + $0x3e8] sm:$0xff]
  %v148 = vld [vmem:[%s1 + $0x3f0] sm:$0xff]
  %v149 = vld [vmem:[%s1 + $0x3f8] sm:$0xff]
  %v150 = vld [vmem:[%s1 + $0x400] sm:$0xff]
  %v151 = vld [vmem:[%s1 + $0x408] sm:$0xff]
  %v152 = vld [vmem:[%s1 + $0x410] sm:$0xff]
  %v153 = vld [vmem:[%s1 + $0x418] sm:$0xff]
  %v154 = vld [vmem:[%s1 + $0x420] sm:$0xff]
  %v155 = vld [vmem:[%s1 + $0x428] sm:$0xff]
  %v156 = vld [vmem:[%s1 + $0x430] sm:$0xff]
  %v157 = vld [vmem:[%s1 + $0x438] sm:$0xff]
  %v158 = vld [vmem:[%s1 + $0x440] sm:$0xff]
  %v159 = vld [vmem:[%s1 + $0x448] sm:$0xff]
  %v160 = vld [vmem:[%s1 + $0x450] sm:$0xff]
  %v161 = vld [vmem:[%s1 + $0x458] sm:$0xff]
  %v162 = vld [vmem:[%s1 + $0x460] sm:$0xff]
  %v163 = vld [vmem:[%s1 + $0x468] sm:$0xff]
  %v164 = vld [vmem:[%s1 + $0x470] sm:$0xff]
  %v165 = vld [vmem:[%s1 + $0x478] sm:$0xff]
  %v166 = vld [vmem:[%s1 + $0x480] sm:$0xff]
  %v167 = vld [vmem:[%s1 + $0x488] sm:$0xff]
  %v168 = vld [vmem:[%s1 + $0x490] sm:$0xff]
  %v169 = vld [vmem:[%s1 + $0x498] sm:$0xff]
  %v170 = vld [vmem:[%s1 + $0x4a0] sm:$0xff]
  %v171 = vld [vmem:[%s1 + $0x4a8] sm:$0xff]
  %v172 = vld [vmem:[%s1 + $0x4b0] sm:$0xff]
  %v173 = vld [vmem:[%s1 + $0x4b8] sm:$0xff]
  %v174 = vld [vmem:[%s1 + $0x4c0] sm:$0xff]
  %v175 = vld [vmem:[%s1 + $0x4c8] sm:$0xff]
  %v176 = vld [vmem:[%s1 + $0x4d0] sm:$0xff]
  %v177 = vld [vmem:[%s1 + $0x4d8] sm:$0xff]
  %v178 = vld [vmem:[%s1 + $0x4e0] sm:$0xff]
  %v179 = vld [vmem:[%s1 + $0x4e8] sm:$0xff]
  %v180 = vld [vmem:[%s1 + $0x4f0] sm:$0xff]
  %v181 = vld [vmem:[%s1 + $0x4f8] sm:$0xff]
  %v182 = vld [vmem:[%s1 + $0x500] sm:$0xff]
  %v183 = vld [vmem:[%s1 + $0x508] sm:$0xff]
  %v184 = vld [vmem:[%s1 + $0x510] sm:$0xff]
  %v185 = vld [vmem:[%s1 + $0x518] sm:$0xff]
  %v186 = vld [vmem:[%s1 + $0x520] sm:$0xff]
  %v187 = vld [vmem:[%s1 + $0x528] sm:$0xff]
  %v188 = vld [vmem:[%s1 + $0x530] sm:$0xff]
  %v189 = vld [vmem:[%s1 + $0x538] sm:$0xff]
  %v190 = vld [vmem:[%s1 + $0x540] sm:$0xff]
  %v191 = vld [vmem:[%s1 + $0x548] sm:$0xff]
  %v192 = vld [vmem:[%s1 + $0x550] sm:$0xff]
  %v193 = vld [vmem:[%s1 + $0x558] sm:$0xff]
  %v194 = vld [vmem:[%s1 + $0x560] sm:$0xff]
  %v195 = vld [vmem:[%s1 + $0x568] sm:$0xff]
  %v196 = vld [vmem:[%s1 + $0x570] sm:$0xff]
  %v197 = vld [vmem:[%s1 + $0x578] sm:$0xff]
  %v198 = vld [vmem:[%s1 + $0x580] sm:$0xff]
  %v199 = vld [vmem:[%s1 + $0x588] sm:$0xff]
  %v200 = vld [vmem:[%s1 + $0x590] sm:$0xff]
  %v201 = vld [vmem:[%s1 + $0x598] sm:$0xff]
  %v202 = vld [vmem:[%s1 + $0x5a0] sm:$0xff]
  %v203 = vld [vmem:[%s1 + $0x5a8] sm:$0xff]
  %v204 = vld [vmem:[%s1 + $0x5b0] sm:$0xff]
  %v205 = vld [vmem:[%s1 + $0x5b8] sm:$0xff]
  %v206 = vld [vmem:[%s1 + $0x5c0] sm:$0xff]
  %v207 = vld [vmem:[%s1 + $0x5c8] sm:$0xff]
  %v208 = vld [vmem:[%s1 + $0x5d0] sm:$0xff]
  %v209 = vld [vmem:[%s1 + $0x5d8] sm:$0xff]
  %v210 = vld [vmem:[%s1 + $0x5e0] sm:$0xff]
  %v211 = vld [vmem:[%s1 + $0x5e8] sm:$0xff]
  %v212 = vld [vmem:[%s1 + $0x5f0] sm:$0xff]
  %v213 = vld [vmem:[%s1 + $0x5f8] sm:$0xff]
  %v214 = vld [vmem:[%s1 + $0x600] sm:$0xff]
  %v215 = vld [vmem:[%s1 + $0x608] sm:$0xff]
  %v216 = vld [vmem:[%s1 + $0x610] sm:$0xff]
  %v217 = vld [vmem:[%s1 + $0x618] sm:$0xff]
  %v218 = vld [vmem:[%s1 + $0x620] sm:$0xff]
  %v219 = vld [vmem:[%s1 + $0x628] sm:$0xff]
  %v220 = vld [vmem:[%s1 + $0x630] sm:$0xff]
  %v221 = vld [vmem:[%s1 + $0x638] sm:$0xff]
  %v222 = vld [vmem:[%s1 + $0x640] sm:$0xff]
  %v223 = vld [vmem:[%s1 + $0x648] sm:$0xff]
  %v224 = vld [vmem:[%s1 + $0x650] sm:$0xff]
  %v225 = vld [vmem:[%s1 + $0x658] sm:$0xff]
  %v226 = vld [vmem:[%s1 + $0x660] sm:$0xff]
  %v227 = vld [vmem:[%s1 + $0x668] sm:$0xff]
  %v228 = vld [vmem:[%s1 + $0x670] sm:$0xff]
  %v229 = vld [vmem:[%s1 + $0x678] sm:$0xff]
  %v230 = vld [vmem:[%s1 + $0x680] sm:$0xff]
  %v231 = vld [vmem:[%s1 + $0x688] sm:$0xff]
  %v232 = vld [vmem:[%s1 + $0x690] sm:$0xff]
  %v233 = vld [vmem:[%s1 + $0x698] sm:$0xff]
  %v234 = vld [vmem:[%s1 + $0x6a0] sm:$0xff]
  %v235 = vld [vmem:[%s1 + $0x6a8] sm:$0xff]
  %v236 = vld [vmem:[%s1 + $0x6b0] sm:$0xff]
  %v237 = vld [vmem:[%s1 + $0x6b8] sm:$0xff]
  %v238 = vld [vmem:[%s1 + $0x6c0] sm:$0xff]
  %v239 = vld [vmem:[%s1 + $0x6c8] sm:$0xff]
  %v240 = vld [vmem:[%s1 + $0x6d0] sm:$0xff]
  %v241 = vld [vmem:[%s1 + $0x6d8] sm:$0xff]
  %v242 = vld [vmem:[%s1 + $0x6e0] sm:$0xff]
  %v243 = vld [vmem:[%s1 + $0x6e8] sm:$0xff]
  %v244 = vld [vmem:[%s1 + $0x6f0] sm:$0xff]
  %v245 = vld [vmem:[%s1 + $0x6f8] sm:$0xff]
  %v246 = vld [vmem:[%s1 + $0x700] sm:$0xff]
  %v247 = vld [vmem:[%s1 + $0x708] sm:$0xff]
  %v248 = vld [vmem:[%s1 + $0x710] sm:$0xff]
  %v249 = vld [vmem:[%s1 + $0x718] sm:$0xff]
  %v250 = vld [vmem:[%s1 + $0x720] sm:$0xff]
  %v251 = vld [vmem:[%s1 + $0x728] sm:$0xff]
  %v252 = vld [vmem:[%s1 + $0x730] sm:$0xff]
  %v253 = vld [vmem:[%s1 + $0x738] sm:$0xff]
  %v254 = vld [vmem:[%s1 + $0x740] sm:$0xff]
  %v255 = vld [vmem:[%s1 + $0x748] sm:$0xff]
  %v256 = vld [vmem:[%s1 + $0x750] sm:$0xff]
  %v257 = vld [vmem:[%s1 + $0x758] sm:$0xff]
  %v258 = vld [vmem:[%s1 + $0x760] sm:$0xff]
  %v259 = vld [vmem:[%s1 + $0x768] sm:$0xff]
  %v260 = vld [vmem:[%s1 + $0x770] sm:$0xff]
  %v261 = vld [vmem:[%s1 + $0x778] sm:$0xff]
  %v262 = vld [vmem:[%s1 + $0x780] sm:$0xff]
  %v263 = vld [vmem:[%s1 + $0x788] sm:$0xff]
  %v264 = vld [vmem:[%s1 + $0x790] sm:$0xff]
  %v265 = vld [vmem:[%s1 + $0x798] sm:$0xff]
  %v266 = vld [vmem:[%s1 + $0x7a0] sm:$0xff]
  %v267 = vld [vmem:[%s1 + $0x7a8] sm:$0xff]
  %v268 = vld [vmem:[%s1 + $0x7b0] sm:$0xff]
  %v269 = vld [vmem:[%s1 + $0x7b8] sm:$0xff]
  %v270 = vld [vmem:[%s1 + $0x7c0] sm:$0xff]
  %v271 = vld [vmem:[%s1 + $0x7c8] sm:$0xff]
  %v272 = vld [vmem:[%s1 + $0x7d0] sm:$0xff]
  %v273 = vld [vmem:[%s1 + $0x7d8] sm:$0xff]
  %v274 = vld [vmem:[%s1 + $0x7e0] sm:$0xff]
  %v275 = vld [vmem:[%s1 + $0x7e8] sm:$0xff]
  %v276 = vld [vmem:[%s1 + $0x7f0] sm:$0xff]
  %v277 = vld [vmem:[%s1 + $0x7f8] sm:$0xff]
  %v278 = vld [vmem:[%s1 + $0x800] sm:$0xff]
  %v279 = vld [vmem:[%s1 + $0x808] sm:$0xff]
  %v280 = vld [vmem:[%s1 + $0x810] sm:$0xff]
  %v281 = vld [vmem:[%s1 + $0x818] sm:$0xff]
  %v282 = vld [vmem:[%s1 + $0x820] sm:$0xff]
  %v283 = vld [vmem:[%s1 + $0x828] sm:$0xff]
  %v284 = vld [vmem:[%s1 + $0x830] sm:$0xff]
  %v285 = vld [vmem:[%s1 + $0x838] sm:$0xff]
  %v286 = vld [vmem:[%s1 + $0x840] sm:$0xff]
  %v287 = vld [vmem:[%s1 + $0x848] sm:$0xff]
  %v288 = vld [vmem:[%s1 + $0x850] sm:$0xff]
  %v289 = vld [vmem:[%s1 + $0x858] sm:$0xff]
  %v290 = vld [vmem:[%s1 + $0x860] sm:$0xff]
  %v291 = vld [vmem:[%s1 + $0x868] sm:$0xff]
  %v292 = vld [vmem:[%s1 + $0x870] sm:$0xff]
  %v293 = vld [vmem:[%s1 + $0x878] sm:$0xff]
  %v294 = vld [vmem:[%s1 + $0x880] sm:$0xff]
  %v295 = vld [vmem:[%s1 + $0x888] sm:$0xff]
  %v296 = vld [vmem:[%s1 + $0x890] sm:$0xff]
  %v297 = vld [vmem:[%s1 + $0x898] sm:$0xff]
  %v298 = vld [vmem:[%s1 + $0x8a0] sm:$0xff]
  %v299 = vld [vmem:[%s1 + $0x8a8] sm:$0xff]
  %v300 = vld [vmem:[%s1 + $0x8b0] sm:$0xff]
  %v301 = vld [vmem:[%s1 + $0x8b8] sm:$0xff]
  %v302 = vld [vmem:[%s1 + $0x8c0] sm:$0xff]
  %v303 = vld [vmem:[%s1 + $0x8c8] sm:$0xff]
  %v304 = vld [vmem:[%s1 + $0x8d0] sm:$0xff]
  %v305 = vld [vmem:[%s1 + $0x8d8] sm:$0xff]
  %v306 = vld [vmem:[%s1 + $0x8e0] sm:$0xff]
  %v307 = vld [vmem:[%s1 + $0x8e8] sm:$0xff]
  %v308 = vld [vmem:[%s1 + $0x8f0] sm:$0xff]
  %v309 = vld [vmem:[%s1 + $0x8f8] sm:$0xff]
  %v310 = vld [vmem:[%s1 + $0x900] sm:$0xff]
  %v311 = vld [vmem:[%s1 + $0x908] sm:$0xff]
  %v312 = vld [vmem:[%s1 + $0x910] sm:$0xff]
  %v313 = vld [vmem:[%s1 + $0x918] sm:$0xff]
  %v314 = vld [vmem:[%s1 + $0x920] sm:$0xff]
  %v315 = vld [vmem:[%s1 + $0x928] sm:$0xff]
  %v316 = vld [vmem:[%s1 + $0x930] sm:$0xff]
  %v317 = vld [vmem:[%s1 + $0x938] sm:$0xff]
  %v318 = vld [vmem:[%s1 + $0x940] sm:$0xff]
  %v319 = vld [vmem:[%s1 + $0x948] sm:$0xff]
  %v320 = vld [vmem:[%s1 + $0x950] sm:$0xff]
  %v321 = vld [vmem:[%s1 + $0x958] sm:$0xff]
  %v322 = vld [vmem:[%s1 + $0x960] sm:$0xff]
  %v323 = vld [vmem:[%s1 + $0x968] sm:$0xff]
  %v324 = vld [vmem:[%s1 + $0x970] sm:$0xff]
  %v325 = vld [vmem:[%s1 + $0x978] sm:$0xff]
  %v326 = vld [vmem:[%s1 + $0x980] sm:$0xff]
  %v327 = vld [vmem:[%s1 + $0x988] sm:$0xff]
  %v328 = vld [vmem:[%s1 + $0x990] sm:$0xff]
  %v329 = vld [vmem:[%s1 + $0x998] sm:$0xff]
  %v330 = vld [vmem:[%s1 + $0x9a0] sm:$0xff]
  %v331 = vld [vmem:[%s1 + $0x9a8] sm:$0xff]
  %v332 = vld [vmem:[%s1 + $0x9b0] sm:$0xff]
  %v333 = vld [vmem:[%s1 + $0x9b8] sm:$0xff]
  %v334 = vld [vmem:[%s1 + $0x9c0] sm:$0xff]
  %v335 = vld [vmem:[%s1 + $0x9c8] sm:$0xff]
  %v336 = vld [vmem:[%s1 + $0x9d0] sm:$0xff]
  %v337 = vld [vmem:[%s1 + $0x9d8] sm:$0xff]
  %v338 = vld [vmem:[%s1 + $0x9e0] sm:$0xff]
  %v339 = vld [vmem:[%s1 + $0x9e8] sm:$0xff]
  %v340 = vld [vmem:[%s1 + $0x9f0] sm:$0xff]
  %v341 = vld [vmem:[%s1 + $0x9f8] sm:$0xff]
  %v342 = vld [vmem:[%s1 + $0xa00] sm:$0xff]
  %v343 = vld [vmem:[%s1 + $0xa08] sm:$0xff]
  %v344 = vld [vmem:[%s1 + $0xa10] sm:$0xff]
  %v345 = vld [vmem:[%s1 + $0xa18] sm:$0xff]
  %v346 = vld [vmem:[%s1 + $0xa20] sm:$0xff]
  %v347 = vld [vmem:[%s1 + $0xa28] sm:$0xff]
  %v348 = vld [vmem:[%s1 + $0xa30] sm:$0xff]
  %v349 = vld [vmem:[%s1 + $0xa38] sm:$0xff]
  %v350 = vld [vmem:[%s1 + $0xa40] sm:$0xff]
  %v351 = vld [vmem:[%s1 + $0xa48] sm:$0xff]
  %v352 = vld [vmem:[%s1 + $0xa50] sm:$0xff]
  %v353 = vld [vmem:[%s1 + $0xa58] sm:$0xff]
  %v354 = vld [vmem:[%s1 + $0xa60] sm:$0xff]
  %v355 = vld [vmem:[%s1 + $0xa68] sm:$0xff]
  %v356 = vld [vmem:[%s1 + $0xa70] sm:$0xff]
  %v357 = vld [vmem:[%s1 + $0xa78] sm:$0xff]
  %v358 = vld [vmem:[%s1 + $0xa80] sm:$0xff]
  %v359 = vld [vmem:[%s1 + $0xa88] sm:$0xff]
  %v360 = vld [vmem:[%s1 + $0xa90] sm:$0xff]
  %v361 = vld [vmem:[%s1 + $0xa98] sm:$0xff]
  %v362 = vld [vmem:[%s1 + $0xaa0] sm:$0xff]
  %v363 = vld [vmem:[%s1 + $0xaa8] sm:$0xff]
  %v364 = vld [vmem:[%s1 + $0xab0] sm:$0xff]
  %v365 = vld [vmem:[%s1 + $0xab8] sm:$0xff]
  %v366 = vld [vmem:[%s1 + $0xac0] sm:$0xff]
  %v367 = vld [vmem:[%s1 + $0xac8] sm:$0xff]
  %v368 = vld [vmem:[%s1 + $0xad0] sm:$0xff]
  %v369 = vld [vmem:[%s1 + $0xad8] sm:$0xff]
  %v370 = vld [vmem:[%s1 + $0xae0] sm:$0xff]
  %v371 = vld [vmem:[%s1 + $0xae8] sm:$0xff]
  %v372 = vld [vmem:[%s1 + $0xaf0] sm:$0xff]
  %v373 = vld [vmem:[%s1 + $0xaf8] sm:$0xff]
  %v374 = vld [vmem:[%s1 + $0xb00] sm:$0xff]
  %v375 = vld [vmem:[%s1 + $0xb08] sm:$0xff]
  %v376 = vld [vmem:[%s1 + $0xb10] sm:$0xff]
  %v377 = vld [vmem:[%s1 + $0xb18] sm:$0xff]
  %v378 = vld [vmem:[%s1 + $0xb20] sm:$0xff]
  %v379 = vld [vmem:[%s1 + $0xb28] sm:$0xff]
  %v380 = vld [vmem:[%s1 + $0xb30] sm:$0xff]
  %v381 = vld [vmem:[%s1 + $0xb38] sm:$0xff]
  %v382 = vld [vmem:[%s1 + $0xb40] sm:$0xff]
  %v383 = vld [vmem:[%s1 + $0xb48] sm:$0xff]
  %v384 = vld [vmem:[%s1 + $0xb50] sm:$0xff]
  %v385 = vld [vmem:[%s1 + $0xb58] sm:$0xff]
  %v386 = vld [vmem:[%s1 + $0xb60] sm:$0xff]
  %v387 = vld [vmem:[%s1 + $0xb68] sm:$0xff]
  %v388 = vld [vmem:[%s1 + $0xb70] sm:$0xff]
  %v389 = vld [vmem:[%s1 + $0xb78] sm:$0xff]
  %v390 = vld [vmem:[%s1 + $0xb80] sm:$0xff]
  %v391 = vld [vmem:[%s1 + $0xb88] sm:$0xff]
  %v392 = vld [vmem:[%s1 + $0xb90] sm:$0xff]
  %v393 = vld [vmem:[%s1 + $0xb98] sm:$0xff]
  %v394 = vld [vmem:[%s1 + $0xba0] sm:$0xff]
  %v395 = vld [vmem:[%s1 + $0xba8] sm:$0xff]
  %v396 = vld [vmem:[%s1 + $0xbb0] sm:$0xff]
  %v397 = vld [vmem:[%s1 + $0xbb8] sm:$0xff]
  %v398 = vld [vmem:[%s1 + $0xbc0] sm:$0xff]
  %v399 = vld [vmem:[%s1 + $0xbc8] sm:$0xff]
  %v400 = vld [vmem:[%s1 + $0xbd0] sm:$0xff]
  %v401 = vld [vmem:[%s1 + $0xbd8] sm:$0xff]
  %v402 = vld [vmem:[%s1 + $0xbe0] sm:$0xff]
  %v403 = vld [vmem:[%s1 + $0xbe8] sm:$0xff]
  %v404 = vld [vmem:[%s1 + $0xbf0] sm:$0xff]
  %v405 = vld [vmem:[%s1 + $0xbf8] sm:$0xff]
  %v406 = vld [vmem:[%s1 + $0xc00] sm:$0xff]
  %v407 = vld [vmem:[%s1 + $0xc08] sm:$0xff]
  %v408 = vld [vmem:[%s1 + $0xc10] sm:$0xff]
  %v409 = vld [vmem:[%s1 + $0xc18] sm:$0xff]
  %v410 = vld [vmem:[%s1 + $0xc20] sm:$0xff]
  %v411 = vld [vmem:[%s1 + $0xc28] sm:$0xff]
  %v412 = vld [vmem:[%s1 + $0xc30] sm:$0xff]
  %v413 = vld [vmem:[%s1 + $0xc38] sm:$0xff]
  %v414 = vld [vmem:[%s1 + $0xc40] sm:$0xff]
  %v415 = vld [vmem:[%s1 + $0xc48] sm:$0xff]
  %v416 = vld [vmem:[%s1 + $0xc50] sm:$0xff]
  %v417 = vld [vmem:[%s1 + $0xc58] sm:$0xff]
  %v418 = vld [vmem:[%s1 + $0xc60] sm:$0xff]
  %v419 = vld [vmem:[%s1 + $0xc68] sm:$0xff]
  %v420 = vld [vmem:[%s1 + $0xc70] sm:$0xff]
  %v421 = vld [vmem:[%s1 + $0xc78] sm:$0xff]
  %v422 = vld [vmem:[%s1 + $0xc80] sm:$0xff]
  %v423 = vld [vmem:[%s1 + $0xc88] sm:$0xff]
  %v424 = vld [vmem:[%s1 + $0xc90] sm:$0xff]
  %v425 = vld [vmem:[%s1 + $0xc98] sm:$0xff]
  %v426 = vld [vmem:[%s1 + $0xca0] sm:$0xff]
  %v427 = vld [vmem:[%s1 + $0xca8] sm:$0xff]
  %v428 = vld [vmem:[%s1 + $0xcb0] sm:$0xff]
  %v429 = vld [vmem:[%s1 + $0xcb8] sm:$0xff]
  %v430 = vld [vmem:[%s1 + $0xcc0] sm:$0xff]
  %v431 = vld [vmem:[%s1 + $0xcc8] sm:$0xff]
  %v432 = vld [vmem:[%s1 + $0xcd0] sm:$0xff]
  %v433 = vld [vmem:[%s1 + $0xcd8] sm:$0xff]
  %v434 = vld [vmem:[%s1 + $0xce0] sm:$0xff]
  %v435 = vld [vmem:[%s1 + $0xce8] sm:$0xff]
  %v436 = vld [vmem:[%s1 + $0xcf0] sm:$0xff]
  %v437 = vld [vmem:[%s1 + $0xcf8] sm:$0xff]
  %v438 = vld [vmem:[%s1 + $0xd00] sm:$0xff]
  %v439 = vld [vmem:[%s1 + $0xd08] sm:$0xff]
  %v440 = vld [vmem:[%s1 + $0xd10] sm:$0xff]
  %v441 = vld [vmem:[%s1 + $0xd18] sm:$0xff]
  %v442 = vld [vmem:[%s1 + $0xd20] sm:$0xff]
  %v443 = vld [vmem:[%s1 + $0xd28] sm:$0xff]
  %v444 = vld [vmem:[%s1 + $0xd30] sm:$0xff]
  %v445 = vld [vmem:[%s1 + $0xd38] sm:$0xff]
  %v446 = vld [vmem:[%s1 + $0xd40] sm:$0xff]
  %v447 = vld [vmem:[%s1 + $0xd48] sm:$0xff]
  %v448 = vld [vmem:[%s1 + $0xd50] sm:$0xff]
  %v449 = vld [vmem:[%s1 + $0xd58] sm:$0xff]
  %v450 = vld [vmem:[%s1 + $0xd60] sm:$0xff]
  %v451 = vld [vmem:[%s1 + $0xd68] sm:$0xff]
  %v452 = vld [vmem:[%s1 + $0xd70] sm:$0xff]
  %v453 = vld [vmem:[%s1 + $0xd78] sm:$0xff]
  %v454 = vld [vmem:[%s1 + $0xd80] sm:$0xff]
  %v455 = vld [vmem:[%s1 + $0xd88] sm:$0xff]
  %v456 = vld [vmem:[%s1 + $0xd90] sm:$0xff]
  %v457 = vld [vmem:[%s1 + $0xd98] sm:$0xff]
  %v458 = vld [vmem:[%s1 + $0xda0] sm:$0xff]
  %v459 = vld [vmem:[%s1 + $0xda8] sm:$0xff]
  %v460 = vld [vmem:[%s1 + $0xdb0] sm:$0xff]
  %v461 = vld [vmem:[%s1 + $0xdb8] sm:$0xff]
  %v462 = vld [vmem:[%s1 + $0xdc0] sm:$0xff]
  %v463 = vld [vmem:[%s1 + $0xdc8] sm:$0xff]
  %v464 = vld [vmem:[%s1 + $0xdd0] sm:$0xff]
  %v465 = vld [vmem:[%s1 + $0xdd8] sm:$0xff]
  %v466 = vld [vmem:[%s1 + $0xde0] sm:$0xff]
  %v467 = vld [vmem:[%s1 + $0xde8] sm:$0xff]
  %v468 = vld [vmem:[%s1 + $0xdf0] sm:$0xff]
  %v469 = vld [vmem:[%s1 + $0xdf8] sm:$0xff]
  %v470 = vld [vmem:[%s1 + $0xe00] sm:$0xff]
  %v471 = vld [vmem:[%s1 + $0xe08] sm:$0xff]
  %v472 = vld [vmem:[%s1 + $0xe10] sm:$0xff]
  %v473 = vld [vmem:[%s1 + $0xe18] sm:$0xff]
  %v474 = vld [vmem:[%s1 + $0xe20] sm:$0xff]
  %v475 = vld [vmem:[%s1 + $0xe28] sm:$0xff]
  %v476 = vld [vmem:[%s1 + $0xe30] sm:$0xff]
  %v477 = vld [vmem:[%s1 + $0xe38] sm:$0xff]
  %v478 = vld [vmem:[%s1 + $0xe40] sm:$0xff]
  %v479 = vld [vmem:[%s1 + $0xe48] sm:$0xff]
  %v480 = vld [vmem:[%s1 + $0xe50] sm:$0xff]
  %v481 = vld [vmem:[%s1 + $0xe58] sm:$0xff]
  %v482 = vld [vmem:[%s1 + $0xe60] sm:$0xff]
  %v483 = vld [vmem:[%s1 + $0xe68] sm:$0xff]
  %v484 = vld [vmem:[%s1 + $0xe70] sm:$0xff]
  %v485 = vld [vmem:[%s1 + $0xe78] sm:$0xff]
  %v486 = vld [vmem:[%s1 + $0xe80] sm:$0xff]
  %v487 = vld [vmem:[%s1 + $0xe88] sm:$0xff]
  %v488 = vld [vmem:[%s1 + $0xe90] sm:$0xff]
  %v489 = vld [vmem:[%s1 + $0xe98] sm:$0xff]
  %v490 = vld [vmem:[%s1 + $0xea0] sm:$0xff]
  %v491 = vld [vmem:[%s1 + $0xea8] sm:$0xff]
  %v492 = vld [vmem:[%s1 + $0xeb0] sm:$0xff]
  %v493 = vld [vmem:[%s1 + $0xeb8] sm:$0xff]
  %v494 = vld [vmem:[%s1 + $0xec0] sm:$0xff]
  %v495 = vld [vmem:[%s1 + $0xec8] sm:$0xff]
  %v496 = vld [vmem:[%s1 + $0xed0] sm:$0xff]
  %v497 = vld [vmem:[%s1 + $0xed8] sm:$0xff]
  %v498 = vld [vmem:[%s1 + $0xee0] sm:$0xff]
  %v499 = vld [vmem:[%s1 + $0xee8] sm:$0xff]
  %v500 = vld [vmem:[%s1 + $0xef0] sm:$0xff]
  %v501 = vld [vmem:[%s1 + $0xef8] sm:$0xff]
  %v502 = vld [vmem:[%s1 + $0xf00] sm:$0xff]
  %v503 = vld [vmem:[%s1 + $0xf08] sm:$0xff]
  %v504 = vld [vmem:[%s1 + $0xf10] sm:$0xff]
  %v505 = vld [vmem:[%s1 + $0xf18] sm:$0xff]
  %v506 = vld [vmem:[%s1 + $0xf20] sm:$0xff]
  %v507 = vld [vmem:[%s1 + $0xf28] sm:$0xff]
  %v508 = vld [vmem:[%s1 + $0xf30] sm:$0xff]
  %v509 = vld [vmem:[%s1 + $0xf38] sm:$0xff]
  %v510 = vld [vmem:[%s1 + $0xf40] sm:$0xff]
  %v511 = vld [vmem:[%s1 + $0xf48] sm:$0xff]
  %v512 = vld [vmem:[%s1 + $0xf50] sm:$0xff]
  %v513 = vld [vmem:[%s1 + $0xf58] sm:$0xff]
  %v514 = vld [vmem:[%s1 + $0xf60] sm:$0xff]
  %v515 = vld [vmem:[%s1 + $0xf68] sm:$0xff]
  %v516 = vld [vmem:[%s1 + $0xf70] sm:$0xff]
  %v517 = vld [vmem:[%s1 + $0xf78] sm:$0xff]
  %v518 = vld [vmem:[%s1 + $0xf80] sm:$0xff]
  %v519 = vld [vmem:[%s1 + $0xf88] sm:$0xff]
  %v520 = vld [vmem:[%s1 + $0xf90] sm:$0xff]
  %v521 = vld [vmem:[%s1 + $0xf98] sm:$0xff]
  %v522 = vld [vmem:[%s1 + $0xfa0] sm:$0xff]
  %v523 = vld [vmem:[%s1 + $0xfa8] sm:$0xff]
  %v524 = vld [vmem:[%s1 + $0xfb0] sm:$0xff]
  %v525 = vld [vmem:[%s1 + $0xfb8] sm:$0xff]
  %v526 = vld [vmem:[%s1 + $0xfc0] sm:$0xff]
  %v527 = vld [vmem:[%s1 + $0xfc8] sm:$0xff]
  %v528 = vld [vmem:[%s1 + $0xfd0] sm:$0xff]
  %v529 = vld [vmem:[%s1 + $0xfd8] sm:$0xff]
  %v530 = vld [vmem:[%s1 + $0xfe0] sm:$0xff]
  %v531 = vld [vmem:[%s1 + $0xfe8] sm:$0xff]
  %v532 = vld [vmem:[%s1 + $0xff0] sm:$0xff]
  %v533 = vld [vmem:[%s1 + $0xff8] sm:$0xff]
  %v534 = vld [vmem:[%s2] sm:$0xf]
  %v536 = vlaneseq
  %v537 = vshrl.u32 %v536, 7
  %v538 = vsub.s32 0, %v537
  %v539 = vrot.slane %v534, %v538
  %v540 = vlaneseq
  %v541 = vshrl.u32 %v540, 7
  %v542 = vsub.s32 1, %v541
  %v543 = vrot.slane %v534, %v542
  %v544 = vlaneseq
  %v545 = vshrl.u32 %v544, 7
  %v546 = vsub.s32 2, %v545
  %v547 = vrot.slane %v534, %v546
  %v548 = vlaneseq
  %v549 = vshrl.u32 %v548, 7
  %v550 = vsub.s32 3, %v549
  %v551 = vrot.slane %v534, %v550
  %v564 = vunpack.c.l.b16 %v14
  %v565 = vunpack.c.h.b16 %v14
  %v566 = vunpack.c.l.b16 %v15
  %v567 = vunpack.c.h.b16 %v15
  %v568 = vunpack.c.l.b16 %v16
  %v569 = vunpack.c.h.b16 %v16
  %v570 = vunpack.c.l.b16 %v17
  %v571 = vunpack.c.h.b16 %v17
  %v572 = vunpack.c.l.b16 %v18
  %v573 = vunpack.c.h.b16 %v18
  %v574 = vunpack.c.l.b16 %v19
  %v575 = vunpack.c.h.b16 %v19
  %v576 = vunpack.c.l.b16 %v20
  %v577 = vunpack.c.h.b16 %v20
  %v578 = vunpack.c.l.b16 %v21
  %v579 = vunpack.c.h.b16 %v21
  %v580 = vpack.c.b16 %v564, %v564
  %v581 = vpack.c.b16 %v565, %v565
  %v582 = vpack.c.b16 %v566, %v566
  %v583 = vpack.c.b16 %v567, %v567
  %v584 = vpack.c.b16 %v568, %v568
  %v585 = vpack.c.b16 %v569, %v569
  %v586 = vpack.c.b16 %v570, %v570
  %v587 = vpack.c.b16 %v571, %v571
  %v588 = vpack.c.b16 %v572, %v572
  %v589 = vpack.c.b16 %v573, %v573
  %v590 = vpack.c.b16 %v574, %v574
  %v591 = vpack.c.b16 %v575, %v575
  %v592 = vpack.c.b16 %v576, %v576
  %v593 = vpack.c.b16 %v577, %v577
  %v594 = vpack.c.b16 %v578, %v578
  %v595 = vpack.c.b16 %v579, %v579
  %v1124 = vunpack.c.l.b16 %v22
  %v1125 = vunpack.c.h.b16 %v22
  %v1126 = vunpack.c.l.b16 %v23
  %v1127 = vunpack.c.h.b16 %v23
  %v1128 = vunpack.c.l.b16 %v24
  %v1129 = vunpack.c.h.b16 %v24
  %v1130 = vunpack.c.l.b16 %v25
  %v1131 = vunpack.c.h.b16 %v25
  %v1132 = vunpack.c.l.b16 %v26
  %v1133 = vunpack.c.h.b16 %v26
  %v1134 = vunpack.c.l.b16 %v27
  %v1135 = vunpack.c.h.b16 %v27
  %v1136 = vunpack.c.l.b16 %v28
  %v1137 = vunpack.c.h.b16 %v28
  %v1138 = vunpack.c.l.b16 %v29
  %v1139 = vunpack.c.h.b16 %v29
  %v1140 = vunpack.c.l.b16 %v30
  %v1141 = vunpack.c.h.b16 %v30
  %v1142 = vunpack.c.l.b16 %v31
  %v1143 = vunpack.c.h.b16 %v31
  %v1144 = vunpack.c.l.b16 %v32
  %v1145 = vunpack.c.h.b16 %v32
  %v1146 = vunpack.c.l.b16 %v33
  %v1147 = vunpack.c.h.b16 %v33
  %v1148 = vunpack.c.l.b16 %v34
  %v1149 = vunpack.c.h.b16 %v34
  %v1150 = vunpack.c.l.b16 %v35
  %v1151 = vunpack.c.h.b16 %v35
  %v1152 = vunpack.c.l.b16 %v36
  %v1153 = vunpack.c.h.b16 %v36
  %v1154 = vunpack.c.l.b16 %v37
  %v1155 = vunpack.c.h.b16 %v37
  %v1156 = vunpack.c.l.b16 %v38
  %v1157 = vunpack.c.h.b16 %v38
  %v1158 = vunpack.c.l.b16 %v39
  %v1159 = vunpack.c.h.b16 %v39
  %v1160 = vunpack.c.l.b16 %v40
  %v1161 = vunpack.c.h.b16 %v40
  %v1162 = vunpack.c.l.b16 %v41
  %v1163 = vunpack.c.h.b16 %v41
  %v1164 = vunpack.c.l.b16 %v42
  %v1165 = vunpack.c.h.b16 %v42
  %v1166 = vunpack.c.l.b16 %v43
  %v1167 = vunpack.c.h.b16 %v43
  %v1168 = vunpack.c.l.b16 %v44
  %v1169 = vunpack.c.h.b16 %v44
  %v1170 = vunpack.c.l.b16 %v45
  %v1171 = vunpack.c.h.b16 %v45
  %v1172 = vunpack.c.l.b16 %v46
  %v1173 = vunpack.c.h.b16 %v46
  %v1174 = vunpack.c.l.b16 %v47
  %v1175 = vunpack.c.h.b16 %v47
  %v1176 = vunpack.c.l.b16 %v48
  %v1177 = vunpack.c.h.b16 %v48
  %v1178 = vunpack.c.l.b16 %v49
  %v1179 = vunpack.c.h.b16 %v49
  %v1180 = vunpack.c.l.b16 %v50
  %v1181 = vunpack.c.h.b16 %v50
  %v1182 = vunpack.c.l.b16 %v51
  %v1183 = vunpack.c.h.b16 %v51
  %v1184 = vunpack.c.l.b16 %v52
  %v1185 = vunpack.c.h.b16 %v52
  %v1186 = vunpack.c.l.b16 %v53
  %v1187 = vunpack.c.h.b16 %v53
  %v1188 = vunpack.c.l.b16 %v54
  %v1189 = vunpack.c.h.b16 %v54
  %v1190 = vunpack.c.l.b16 %v55
  %v1191 = vunpack.c.h.b16 %v55
  %v1192 = vunpack.c.l.b16 %v56
  %v1193 = vunpack.c.h.b16 %v56
  %v1194 = vunpack.c.l.b16 %v57
  %v1195 = vunpack.c.h.b16 %v57
  %v1196 = vunpack.c.l.b16 %v58
  %v1197 = vunpack.c.h.b16 %v58
  %v1198 = vunpack.c.l.b16 %v59
  %v1199 = vunpack.c.h.b16 %v59
  %v1200 = vunpack.c.l.b16 %v60
  %v1201 = vunpack.c.h.b16 %v60
  %v1202 = vunpack.c.l.b16 %v61
  %v1203 = vunpack.c.h.b16 %v61
  %v1204 = vunpack.c.l.b16 %v62
  %v1205 = vunpack.c.h.b16 %v62
  %v1206 = vunpack.c.l.b16 %v63
  %v1207 = vunpack.c.h.b16 %v63
  %v1208 = vunpack.c.l.b16 %v64
  %v1209 = vunpack.c.h.b16 %v64
  %v1210 = vunpack.c.l.b16 %v65
  %v1211 = vunpack.c.h.b16 %v65
  %v1212 = vunpack.c.l.b16 %v66
  %v1213 = vunpack.c.h.b16 %v66
  %v1214 = vunpack.c.l.b16 %v67
  %v1215 = vunpack.c.h.b16 %v67
  %v1216 = vunpack.c.l.b16 %v68
  %v1217 = vunpack.c.h.b16 %v68
  %v1218 = vunpack.c.l.b16 %v69
  %v1219 = vunpack.c.h.b16 %v69
  %v1220 = vunpack.c.l.b16 %v70
  %v1221 = vunpack.c.h.b16 %v70
  %v1222 = vunpack.c.l.b16 %v71
  %v1223 = vunpack.c.h.b16 %v71
  %v1224 = vunpack.c.l.b16 %v72
  %v1225 = vunpack.c.h.b16 %v72
  %v1226 = vunpack.c.l.b16 %v73
  %v1227 = vunpack.c.h.b16 %v73
  %v1228 = vunpack.c.l.b16 %v74
  %v1229 = vunpack.c.h.b16 %v74
  %v1230 = vunpack.c.l.b16 %v75
  %v1231 = vunpack.c.h.b16 %v75
  %v1232 = vunpack.c.l.b16 %v76
  %v1233 = vunpack.c.h.b16 %v76
  %v1234 = vunpack.c.l.b16 %v77
  %v1235 = vunpack.c.h.b16 %v77
  %v1236 = vunpack.c.l.b16 %v78
  %v1237 = vunpack.c.h.b16 %v78
  %v1238 = vunpack.c.l.b16 %v79
  %v1239 = vunpack.c.h.b16 %v79
  %v1240 = vunpack.c.l.b16 %v80
  %v1241 = vunpack.c.h.b16 %v80
  %v1242 = vunpack.c.l.b16 %v81
  %v1243 = vunpack.c.h.b16 %v81
  %v1244 = vunpack.c.l.b16 %v82
  %v1245 = vunpack.c.h.b16 %v82
  %v1246 = vunpack.c.l.b16 %v83
  %v1247 = vunpack.c.h.b16 %v83
  %v1248 = vunpack.c.l.b16 %v84
  %v1249 = vunpack.c.h.b16 %v84
  %v1250 = vunpack.c.l.b16 %v85
  %v1251 = vunpack.c.h.b16 %v85
  %v1252 = vunpack.c.l.b16 %v86
  %v1253 = vunpack.c.h.b16 %v86
  %v1254 = vunpack.c.l.b16 %v87
  %v1255 = vunpack.c.h.b16 %v87
  %v1256 = vunpack.c.l.b16 %v88
  %v1257 = vunpack.c.h.b16 %v88
  %v1258 = vunpack.c.l.b16 %v89
  %v1259 = vunpack.c.h.b16 %v89
  %v1260 = vunpack.c.l.b16 %v90
  %v1261 = vunpack.c.h.b16 %v90
  %v1262 = vunpack.c.l.b16 %v91
  %v1263 = vunpack.c.h.b16 %v91
  %v1264 = vunpack.c.l.b16 %v92
  %v1265 = vunpack.c.h.b16 %v92
  %v1266 = vunpack.c.l.b16 %v93
  %v1267 = vunpack.c.h.b16 %v93
  %v1268 = vunpack.c.l.b16 %v94
  %v1269 = vunpack.c.h.b16 %v94
  %v1270 = vunpack.c.l.b16 %v95
  %v1271 = vunpack.c.h.b16 %v95
  %v1272 = vunpack.c.l.b16 %v96
  %v1273 = vunpack.c.h.b16 %v96
  %v1274 = vunpack.c.l.b16 %v97
  %v1275 = vunpack.c.h.b16 %v97
  %v1276 = vunpack.c.l.b16 %v98
  %v1277 = vunpack.c.h.b16 %v98
  %v1278 = vunpack.c.l.b16 %v99
  %v1279 = vunpack.c.h.b16 %v99
  %v1280 = vunpack.c.l.b16 %v100
  %v1281 = vunpack.c.h.b16 %v100
  %v1282 = vunpack.c.l.b16 %v101
  %v1283 = vunpack.c.h.b16 %v101
  %v1284 = vunpack.c.l.b16 %v102
  %v1285 = vunpack.c.h.b16 %v102
  %v1286 = vunpack.c.l.b16 %v103
  %v1287 = vunpack.c.h.b16 %v103
  %v1288 = vunpack.c.l.b16 %v104
  %v1289 = vunpack.c.h.b16 %v104
  %v1290 = vunpack.c.l.b16 %v105
  %v1291 = vunpack.c.h.b16 %v105
  %v1292 = vunpack.c.l.b16 %v106
  %v1293 = vunpack.c.h.b16 %v106
  %v1294 = vunpack.c.l.b16 %v107
  %v1295 = vunpack.c.h.b16 %v107
  %v1296 = vunpack.c.l.b16 %v108
  %v1297 = vunpack.c.h.b16 %v108
  %v1298 = vunpack.c.l.b16 %v109
  %v1299 = vunpack.c.h.b16 %v109
  %v1300 = vunpack.c.l.b16 %v110
  %v1301 = vunpack.c.h.b16 %v110
  %v1302 = vunpack.c.l.b16 %v111
  %v1303 = vunpack.c.h.b16 %v111
  %v1304 = vunpack.c.l.b16 %v112
  %v1305 = vunpack.c.h.b16 %v112
  %v1306 = vunpack.c.l.b16 %v113
  %v1307 = vunpack.c.h.b16 %v113
  %v1308 = vunpack.c.l.b16 %v114
  %v1309 = vunpack.c.h.b16 %v114
  %v1310 = vunpack.c.l.b16 %v115
  %v1311 = vunpack.c.h.b16 %v115
  %v1312 = vunpack.c.l.b16 %v116
  %v1313 = vunpack.c.h.b16 %v116
  %v1314 = vunpack.c.l.b16 %v117
  %v1315 = vunpack.c.h.b16 %v117
  %v1316 = vunpack.c.l.b16 %v118
  %v1317 = vunpack.c.h.b16 %v118
  %v1318 = vunpack.c.l.b16 %v119
  %v1319 = vunpack.c.h.b16 %v119
  %v1320 = vunpack.c.l.b16 %v120
  %v1321 = vunpack.c.h.b16 %v120
  %v1322 = vunpack.c.l.b16 %v121
  %v1323 = vunpack.c.h.b16 %v121
  %v1324 = vunpack.c.l.b16 %v122
  %v1325 = vunpack.c.h.b16 %v122
  %v1326 = vunpack.c.l.b16 %v123
  %v1327 = vunpack.c.h.b16 %v123
  %v1328 = vunpack.c.l.b16 %v124
  %v1329 = vunpack.c.h.b16 %v124
  %v1330 = vunpack.c.l.b16 %v125
  %v1331 = vunpack.c.h.b16 %v125
  %v1332 = vunpack.c.l.b16 %v126
  %v1333 = vunpack.c.h.b16 %v126
  %v1334 = vunpack.c.l.b16 %v127
  %v1335 = vunpack.c.h.b16 %v127
  %v1336 = vunpack.c.l.b16 %v128
  %v1337 = vunpack.c.h.b16 %v128
  %v1338 = vunpack.c.l.b16 %v129
  %v1339 = vunpack.c.h.b16 %v129
  %v1340 = vunpack.c.l.b16 %v130
  %v1341 = vunpack.c.h.b16 %v130
  %v1342 = vunpack.c.l.b16 %v131
  %v1343 = vunpack.c.h.b16 %v131
  %v1344 = vunpack.c.l.b16 %v132
  %v1345 = vunpack.c.h.b16 %v132
  %v1346 = vunpack.c.l.b16 %v133
  %v1347 = vunpack.c.h.b16 %v133
  %v1348 = vunpack.c.l.b16 %v134
  %v1349 = vunpack.c.h.b16 %v134
  %v1350 = vunpack.c.l.b16 %v135
  %v1351 = vunpack.c.h.b16 %v135
  %v1352 = vunpack.c.l.b16 %v136
  %v1353 = vunpack.c.h.b16 %v136
  %v1354 = vunpack.c.l.b16 %v137
  %v1355 = vunpack.c.h.b16 %v137
  %v1356 = vunpack.c.l.b16 %v138
  %v1357 = vunpack.c.h.b16 %v138
  %v1358 = vunpack.c.l.b16 %v139
  %v1359 = vunpack.c.h.b16 %v139
  %v1360 = vunpack.c.l.b16 %v140
  %v1361 = vunpack.c.h.b16 %v140
  %v1362 = vunpack.c.l.b16 %v141
  %v1363 = vunpack.c.h.b16 %v141
  %v1364 = vunpack.c.l.b16 %v142
  %v1365 = vunpack.c.h.b16 %v142
  %v1366 = vunpack.c.l.b16 %v143
  %v1367 = vunpack.c.h.b16 %v143
  %v1368 = vunpack.c.l.b16 %v144
  %v1369 = vunpack.c.h.b16 %v144
  %v1370 = vunpack.c.l.b16 %v145
  %v1371 = vunpack.c.h.b16 %v145
  %v1372 = vunpack.c.l.b16 %v146
  %v1373 = vunpack.c.h.b16 %v146
  %v1374 = vunpack.c.l.b16 %v147
  %v1375 = vunpack.c.h.b16 %v147
  %v1376 = vunpack.c.l.b16 %v148
  %v1377 = vunpack.c.h.b16 %v148
  %v1378 = vunpack.c.l.b16 %v149
  %v1379 = vunpack.c.h.b16 %v149
  %v1380 = vunpack.c.l.b16 %v150
  %v1381 = vunpack.c.h.b16 %v150
  %v1382 = vunpack.c.l.b16 %v151
  %v1383 = vunpack.c.h.b16 %v151
  %v1384 = vunpack.c.l.b16 %v152
  %v1385 = vunpack.c.h.b16 %v152
  %v1386 = vunpack.c.l.b16 %v153
  %v1387 = vunpack.c.h.b16 %v153
  %v1388 = vunpack.c.l.b16 %v154
  %v1389 = vunpack.c.h.b16 %v154
  %v1390 = vunpack.c.l.b16 %v155
  %v1391 = vunpack.c.h.b16 %v155
  %v1392 = vunpack.c.l.b16 %v156
  %v1393 = vunpack.c.h.b16 %v156
  %v1394 = vunpack.c.l.b16 %v157
  %v1395 = vunpack.c.h.b16 %v157
  %v1396 = vunpack.c.l.b16 %v158
  %v1397 = vunpack.c.h.b16 %v158
  %v1398 = vunpack.c.l.b16 %v159
  %v1399 = vunpack.c.h.b16 %v159
  %v1400 = vunpack.c.l.b16 %v160
  %v1401 = vunpack.c.h.b16 %v160
  %v1402 = vunpack.c.l.b16 %v161
  %v1403 = vunpack.c.h.b16 %v161
  %v1404 = vunpack.c.l.b16 %v162
  %v1405 = vunpack.c.h.b16 %v162
  %v1406 = vunpack.c.l.b16 %v163
  %v1407 = vunpack.c.h.b16 %v163
  %v1408 = vunpack.c.l.b16 %v164
  %v1409 = vunpack.c.h.b16 %v164
  %v1410 = vunpack.c.l.b16 %v165
  %v1411 = vunpack.c.h.b16 %v165
  %v1412 = vunpack.c.l.b16 %v166
  %v1413 = vunpack.c.h.b16 %v166
  %v1414 = vunpack.c.l.b16 %v167
  %v1415 = vunpack.c.h.b16 %v167
  %v1416 = vunpack.c.l.b16 %v168
  %v1417 = vunpack.c.h.b16 %v168
  %v1418 = vunpack.c.l.b16 %v169
  %v1419 = vunpack.c.h.b16 %v169
  %v1420 = vunpack.c.l.b16 %v170
  %v1421 = vunpack.c.h.b16 %v170
  %v1422 = vunpack.c.l.b16 %v171
  %v1423 = vunpack.c.h.b16 %v171
  %v1424 = vunpack.c.l.b16 %v172
  %v1425 = vunpack.c.h.b16 %v172
  %v1426 = vunpack.c.l.b16 %v173
  %v1427 = vunpack.c.h.b16 %v173
  %v1428 = vunpack.c.l.b16 %v174
  %v1429 = vunpack.c.h.b16 %v174
  %v1430 = vunpack.c.l.b16 %v175
  %v1431 = vunpack.c.h.b16 %v175
  %v1432 = vunpack.c.l.b16 %v176
  %v1433 = vunpack.c.h.b16 %v176
  %v1434 = vunpack.c.l.b16 %v177
  %v1435 = vunpack.c.h.b16 %v177
  %v1436 = vunpack.c.l.b16 %v178
  %v1437 = vunpack.c.h.b16 %v178
  %v1438 = vunpack.c.l.b16 %v179
  %v1439 = vunpack.c.h.b16 %v179
  %v1440 = vunpack.c.l.b16 %v180
  %v1441 = vunpack.c.h.b16 %v180
  %v1442 = vunpack.c.l.b16 %v181
  %v1443 = vunpack.c.h.b16 %v181
  %v1444 = vunpack.c.l.b16 %v182
  %v1445 = vunpack.c.h.b16 %v182
  %v1446 = vunpack.c.l.b16 %v183
  %v1447 = vunpack.c.h.b16 %v183
  %v1448 = vunpack.c.l.b16 %v184
  %v1449 = vunpack.c.h.b16 %v184
  %v1450 = vunpack.c.l.b16 %v185
  %v1451 = vunpack.c.h.b16 %v185
  %v1452 = vunpack.c.l.b16 %v186
  %v1453 = vunpack.c.h.b16 %v186
  %v1454 = vunpack.c.l.b16 %v187
  %v1455 = vunpack.c.h.b16 %v187
  %v1456 = vunpack.c.l.b16 %v188
  %v1457 = vunpack.c.h.b16 %v188
  %v1458 = vunpack.c.l.b16 %v189
  %v1459 = vunpack.c.h.b16 %v189
  %v1460 = vunpack.c.l.b16 %v190
  %v1461 = vunpack.c.h.b16 %v190
  %v1462 = vunpack.c.l.b16 %v191
  %v1463 = vunpack.c.h.b16 %v191
  %v1464 = vunpack.c.l.b16 %v192
  %v1465 = vunpack.c.h.b16 %v192
  %v1466 = vunpack.c.l.b16 %v193
  %v1467 = vunpack.c.h.b16 %v193
  %v1468 = vunpack.c.l.b16 %v194
  %v1469 = vunpack.c.h.b16 %v194
  %v1470 = vunpack.c.l.b16 %v195
  %v1471 = vunpack.c.h.b16 %v195
  %v1472 = vunpack.c.l.b16 %v196
  %v1473 = vunpack.c.h.b16 %v196
  %v1474 = vunpack.c.l.b16 %v197
  %v1475 = vunpack.c.h.b16 %v197
  %v1476 = vunpack.c.l.b16 %v198
  %v1477 = vunpack.c.h.b16 %v198
  %v1478 = vunpack.c.l.b16 %v199
  %v1479 = vunpack.c.h.b16 %v199
  %v1480 = vunpack.c.l.b16 %v200
  %v1481 = vunpack.c.h.b16 %v200
  %v1482 = vunpack.c.l.b16 %v201
  %v1483 = vunpack.c.h.b16 %v201
  %v1484 = vunpack.c.l.b16 %v202
  %v1485 = vunpack.c.h.b16 %v202
  %v1486 = vunpack.c.l.b16 %v203
  %v1487 = vunpack.c.h.b16 %v203
  %v1488 = vunpack.c.l.b16 %v204
  %v1489 = vunpack.c.h.b16 %v204
  %v1490 = vunpack.c.l.b16 %v205
  %v1491 = vunpack.c.h.b16 %v205
  %v1492 = vunpack.c.l.b16 %v206
  %v1493 = vunpack.c.h.b16 %v206
  %v1494 = vunpack.c.l.b16 %v207
  %v1495 = vunpack.c.h.b16 %v207
  %v1496 = vunpack.c.l.b16 %v208
  %v1497 = vunpack.c.h.b16 %v208
  %v1498 = vunpack.c.l.b16 %v209
  %v1499 = vunpack.c.h.b16 %v209
  %v1500 = vunpack.c.l.b16 %v210
  %v1501 = vunpack.c.h.b16 %v210
  %v1502 = vunpack.c.l.b16 %v211
  %v1503 = vunpack.c.h.b16 %v211
  %v1504 = vunpack.c.l.b16 %v212
  %v1505 = vunpack.c.h.b16 %v212
  %v1506 = vunpack.c.l.b16 %v213
  %v1507 = vunpack.c.h.b16 %v213
  %v1508 = vunpack.c.l.b16 %v214
  %v1509 = vunpack.c.h.b16 %v214
  %v1510 = vunpack.c.l.b16 %v215
  %v1511 = vunpack.c.h.b16 %v215
  %v1512 = vunpack.c.l.b16 %v216
  %v1513 = vunpack.c.h.b16 %v216
  %v1514 = vunpack.c.l.b16 %v217
  %v1515 = vunpack.c.h.b16 %v217
  %v1516 = vunpack.c.l.b16 %v218
  %v1517 = vunpack.c.h.b16 %v218
  %v1518 = vunpack.c.l.b16 %v219
  %v1519 = vunpack.c.h.b16 %v219
  %v1520 = vunpack.c.l.b16 %v220
  %v1521 = vunpack.c.h.b16 %v220
  %v1522 = vunpack.c.l.b16 %v221
  %v1523 = vunpack.c.h.b16 %v221
  %v1524 = vunpack.c.l.b16 %v222
  %v1525 = vunpack.c.h.b16 %v222
  %v1526 = vunpack.c.l.b16 %v223
  %v1527 = vunpack.c.h.b16 %v223
  %v1528 = vunpack.c.l.b16 %v224
  %v1529 = vunpack.c.h.b16 %v224
  %v1530 = vunpack.c.l.b16 %v225
  %v1531 = vunpack.c.h.b16 %v225
  %v1532 = vunpack.c.l.b16 %v226
  %v1533 = vunpack.c.h.b16 %v226
  %v1534 = vunpack.c.l.b16 %v227
  %v1535 = vunpack.c.h.b16 %v227
  %v1536 = vunpack.c.l.b16 %v228
  %v1537 = vunpack.c.h.b16 %v228
  %v1538 = vunpack.c.l.b16 %v229
  %v1539 = vunpack.c.h.b16 %v229
  %v1540 = vunpack.c.l.b16 %v230
  %v1541 = vunpack.c.h.b16 %v230
  %v1542 = vunpack.c.l.b16 %v231
  %v1543 = vunpack.c.h.b16 %v231
  %v1544 = vunpack.c.l.b16 %v232
  %v1545 = vunpack.c.h.b16 %v232
  %v1546 = vunpack.c.l.b16 %v233
  %v1547 = vunpack.c.h.b16 %v233
  %v1548 = vunpack.c.l.b16 %v234
  %v1549 = vunpack.c.h.b16 %v234
  %v1550 = vunpack.c.l.b16 %v235
  %v1551 = vunpack.c.h.b16 %v235
  %v1552 = vunpack.c.l.b16 %v236
  %v1553 = vunpack.c.h.b16 %v236
  %v1554 = vunpack.c.l.b16 %v237
  %v1555 = vunpack.c.h.b16 %v237
  %v1556 = vunpack.c.l.b16 %v238
  %v1557 = vunpack.c.h.b16 %v238
  %v1558 = vunpack.c.l.b16 %v239
  %v1559 = vunpack.c.h.b16 %v239
  %v1560 = vunpack.c.l.b16 %v240
  %v1561 = vunpack.c.h.b16 %v240
  %v1562 = vunpack.c.l.b16 %v241
  %v1563 = vunpack.c.h.b16 %v241
  %v1564 = vunpack.c.l.b16 %v242
  %v1565 = vunpack.c.h.b16 %v242
  %v1566 = vunpack.c.l.b16 %v243
  %v1567 = vunpack.c.h.b16 %v243
  %v1568 = vunpack.c.l.b16 %v244
  %v1569 = vunpack.c.h.b16 %v244
  %v1570 = vunpack.c.l.b16 %v245
  %v1571 = vunpack.c.h.b16 %v245
  %v1572 = vunpack.c.l.b16 %v246
  %v1573 = vunpack.c.h.b16 %v246
  %v1574 = vunpack.c.l.b16 %v247
  %v1575 = vunpack.c.h.b16 %v247
  %v1576 = vunpack.c.l.b16 %v248
  %v1577 = vunpack.c.h.b16 %v248
  %v1578 = vunpack.c.l.b16 %v249
  %v1579 = vunpack.c.h.b16 %v249
  %v1580 = vunpack.c.l.b16 %v250
  %v1581 = vunpack.c.h.b16 %v250
  %v1582 = vunpack.c.l.b16 %v251
  %v1583 = vunpack.c.h.b16 %v251
  %v1584 = vunpack.c.l.b16 %v252
  %v1585 = vunpack.c.h.b16 %v252
  %v1586 = vunpack.c.l.b16 %v253
  %v1587 = vunpack.c.h.b16 %v253
  %v1588 = vunpack.c.l.b16 %v254
  %v1589 = vunpack.c.h.b16 %v254
  %v1590 = vunpack.c.l.b16 %v255
  %v1591 = vunpack.c.h.b16 %v255
  %v1592 = vunpack.c.l.b16 %v256
  %v1593 = vunpack.c.h.b16 %v256
  %v1594 = vunpack.c.l.b16 %v257
  %v1595 = vunpack.c.h.b16 %v257
  %v1596 = vunpack.c.l.b16 %v258
  %v1597 = vunpack.c.h.b16 %v258
  %v1598 = vunpack.c.l.b16 %v259
  %v1599 = vunpack.c.h.b16 %v259
  %v1600 = vunpack.c.l.b16 %v260
  %v1601 = vunpack.c.h.b16 %v260
  %v1602 = vunpack.c.l.b16 %v261
  %v1603 = vunpack.c.h.b16 %v261
  %v1604 = vunpack.c.l.b16 %v262
  %v1605 = vunpack.c.h.b16 %v262
  %v1606 = vunpack.c.l.b16 %v263
  %v1607 = vunpack.c.h.b16 %v263
  %v1608 = vunpack.c.l.b16 %v264
  %v1609 = vunpack.c.h.b16 %v264
  %v1610 = vunpack.c.l.b16 %v265
  %v1611 = vunpack.c.h.b16 %v265
  %v1612 = vunpack.c.l.b16 %v266
  %v1613 = vunpack.c.h.b16 %v266
  %v1614 = vunpack.c.l.b16 %v267
  %v1615 = vunpack.c.h.b16 %v267
  %v1616 = vunpack.c.l.b16 %v268
  %v1617 = vunpack.c.h.b16 %v268
  %v1618 = vunpack.c.l.b16 %v269
  %v1619 = vunpack.c.h.b16 %v269
  %v1620 = vunpack.c.l.b16 %v270
  %v1621 = vunpack.c.h.b16 %v270
  %v1622 = vunpack.c.l.b16 %v271
  %v1623 = vunpack.c.h.b16 %v271
  %v1624 = vunpack.c.l.b16 %v272
  %v1625 = vunpack.c.h.b16 %v272
  %v1626 = vunpack.c.l.b16 %v273
  %v1627 = vunpack.c.h.b16 %v273
  %v1628 = vunpack.c.l.b16 %v274
  %v1629 = vunpack.c.h.b16 %v274
  %v1630 = vunpack.c.l.b16 %v275
  %v1631 = vunpack.c.h.b16 %v275
  %v1632 = vunpack.c.l.b16 %v276
  %v1633 = vunpack.c.h.b16 %v276
  %v1634 = vunpack.c.l.b16 %v277
  %v1635 = vunpack.c.h.b16 %v277
  %v1636 = vunpack.c.l.b16 %v278
  %v1637 = vunpack.c.h.b16 %v278
  %v1638 = vunpack.c.l.b16 %v279
  %v1639 = vunpack.c.h.b16 %v279
  %v1640 = vunpack.c.l.b16 %v280
  %v1641 = vunpack.c.h.b16 %v280
  %v1642 = vunpack.c.l.b16 %v281
  %v1643 = vunpack.c.h.b16 %v281
  %v1644 = vunpack.c.l.b16 %v282
  %v1645 = vunpack.c.h.b16 %v282
  %v1646 = vunpack.c.l.b16 %v283
  %v1647 = vunpack.c.h.b16 %v283
  %v1648 = vunpack.c.l.b16 %v284
  %v1649 = vunpack.c.h.b16 %v284
  %v1650 = vunpack.c.l.b16 %v285
  %v1651 = vunpack.c.h.b16 %v285
  %v1652 = vunpack.c.l.b16 %v286
  %v1653 = vunpack.c.h.b16 %v286
  %v1654 = vunpack.c.l.b16 %v287
  %v1655 = vunpack.c.h.b16 %v287
  %v1656 = vunpack.c.l.b16 %v288
  %v1657 = vunpack.c.h.b16 %v288
  %v1658 = vunpack.c.l.b16 %v289
  %v1659 = vunpack.c.h.b16 %v289
  %v1660 = vunpack.c.l.b16 %v290
  %v1661 = vunpack.c.h.b16 %v290
  %v1662 = vunpack.c.l.b16 %v291
  %v1663 = vunpack.c.h.b16 %v291
  %v1664 = vunpack.c.l.b16 %v292
  %v1665 = vunpack.c.h.b16 %v292
  %v1666 = vunpack.c.l.b16 %v293
  %v1667 = vunpack.c.h.b16 %v293
  %v1668 = vunpack.c.l.b16 %v294
  %v1669 = vunpack.c.h.b16 %v294
  %v1670 = vunpack.c.l.b16 %v295
  %v1671 = vunpack.c.h.b16 %v295
  %v1672 = vunpack.c.l.b16 %v296
  %v1673 = vunpack.c.h.b16 %v296
  %v1674 = vunpack.c.l.b16 %v297
  %v1675 = vunpack.c.h.b16 %v297
  %v1676 = vunpack.c.l.b16 %v298
  %v1677 = vunpack.c.h.b16 %v298
  %v1678 = vunpack.c.l.b16 %v299
  %v1679 = vunpack.c.h.b16 %v299
  %v1680 = vunpack.c.l.b16 %v300
  %v1681 = vunpack.c.h.b16 %v300
  %v1682 = vunpack.c.l.b16 %v301
  %v1683 = vunpack.c.h.b16 %v301
  %v1684 = vunpack.c.l.b16 %v302
  %v1685 = vunpack.c.h.b16 %v302
  %v1686 = vunpack.c.l.b16 %v303
  %v1687 = vunpack.c.h.b16 %v303
  %v1688 = vunpack.c.l.b16 %v304
  %v1689 = vunpack.c.h.b16 %v304
  %v1690 = vunpack.c.l.b16 %v305
  %v1691 = vunpack.c.h.b16 %v305
  %v1692 = vunpack.c.l.b16 %v306
  %v1693 = vunpack.c.h.b16 %v306
  %v1694 = vunpack.c.l.b16 %v307
  %v1695 = vunpack.c.h.b16 %v307
  %v1696 = vunpack.c.l.b16 %v308
  %v1697 = vunpack.c.h.b16 %v308
  %v1698 = vunpack.c.l.b16 %v309
  %v1699 = vunpack.c.h.b16 %v309
  %v1700 = vunpack.c.l.b16 %v310
  %v1701 = vunpack.c.h.b16 %v310
  %v1702 = vunpack.c.l.b16 %v311
  %v1703 = vunpack.c.h.b16 %v311
  %v1704 = vunpack.c.l.b16 %v312
  %v1705 = vunpack.c.h.b16 %v312
  %v1706 = vunpack.c.l.b16 %v313
  %v1707 = vunpack.c.h.b16 %v313
  %v1708 = vunpack.c.l.b16 %v314
  %v1709 = vunpack.c.h.b16 %v314
  %v1710 = vunpack.c.l.b16 %v315
  %v1711 = vunpack.c.h.b16 %v315
  %v1712 = vunpack.c.l.b16 %v316
  %v1713 = vunpack.c.h.b16 %v316
  %v1714 = vunpack.c.l.b16 %v317
  %v1715 = vunpack.c.h.b16 %v317
  %v1716 = vunpack.c.l.b16 %v318
  %v1717 = vunpack.c.h.b16 %v318
  %v1718 = vunpack.c.l.b16 %v319
  %v1719 = vunpack.c.h.b16 %v319
  %v1720 = vunpack.c.l.b16 %v320
  %v1721 = vunpack.c.h.b16 %v320
  %v1722 = vunpack.c.l.b16 %v321
  %v1723 = vunpack.c.h.b16 %v321
  %v1724 = vunpack.c.l.b16 %v322
  %v1725 = vunpack.c.h.b16 %v322
  %v1726 = vunpack.c.l.b16 %v323
  %v1727 = vunpack.c.h.b16 %v323
  %v1728 = vunpack.c.l.b16 %v324
  %v1729 = vunpack.c.h.b16 %v324
  %v1730 = vunpack.c.l.b16 %v325
  %v1731 = vunpack.c.h.b16 %v325
  %v1732 = vunpack.c.l.b16 %v326
  %v1733 = vunpack.c.h.b16 %v326
  %v1734 = vunpack.c.l.b16 %v327
  %v1735 = vunpack.c.h.b16 %v327
  %v1736 = vunpack.c.l.b16 %v328
  %v1737 = vunpack.c.h.b16 %v328
  %v1738 = vunpack.c.l.b16 %v329
  %v1739 = vunpack.c.h.b16 %v329
  %v1740 = vunpack.c.l.b16 %v330
  %v1741 = vunpack.c.h.b16 %v330
  %v1742 = vunpack.c.l.b16 %v331
  %v1743 = vunpack.c.h.b16 %v331
  %v1744 = vunpack.c.l.b16 %v332
  %v1745 = vunpack.c.h.b16 %v332
  %v1746 = vunpack.c.l.b16 %v333
  %v1747 = vunpack.c.h.b16 %v333
  %v1748 = vunpack.c.l.b16 %v334
  %v1749 = vunpack.c.h.b16 %v334
  %v1750 = vunpack.c.l.b16 %v335
  %v1751 = vunpack.c.h.b16 %v335
  %v1752 = vunpack.c.l.b16 %v336
  %v1753 = vunpack.c.h.b16 %v336
  %v1754 = vunpack.c.l.b16 %v337
  %v1755 = vunpack.c.h.b16 %v337
  %v1756 = vunpack.c.l.b16 %v338
  %v1757 = vunpack.c.h.b16 %v338
  %v1758 = vunpack.c.l.b16 %v339
  %v1759 = vunpack.c.h.b16 %v339
  %v1760 = vunpack.c.l.b16 %v340
  %v1761 = vunpack.c.h.b16 %v340
  %v1762 = vunpack.c.l.b16 %v341
  %v1763 = vunpack.c.h.b16 %v341
  %v1764 = vunpack.c.l.b16 %v342
  %v1765 = vunpack.c.h.b16 %v342
  %v1766 = vunpack.c.l.b16 %v343
  %v1767 = vunpack.c.h.b16 %v343
  %v1768 = vunpack.c.l.b16 %v344
  %v1769 = vunpack.c.h.b16 %v344
  %v1770 = vunpack.c.l.b16 %v345
  %v1771 = vunpack.c.h.b16 %v345
  %v1772 = vunpack.c.l.b16 %v346
  %v1773 = vunpack.c.h.b16 %v346
  %v1774 = vunpack.c.l.b16 %v347
  %v1775 = vunpack.c.h.b16 %v347
  %v1776 = vunpack.c.l.b16 %v348
  %v1777 = vunpack.c.h.b16 %v348
  %v1778 = vunpack.c.l.b16 %v349
  %v1779 = vunpack.c.h.b16 %v349
  %v1780 = vunpack.c.l.b16 %v350
  %v1781 = vunpack.c.h.b16 %v350
  %v1782 = vunpack.c.l.b16 %v351
  %v1783 = vunpack.c.h.b16 %v351
  %v1784 = vunpack.c.l.b16 %v352
  %v1785 = vunpack.c.h.b16 %v352
  %v1786 = vunpack.c.l.b16 %v353
  %v1787 = vunpack.c.h.b16 %v353
  %v1788 = vunpack.c.l.b16 %v354
  %v1789 = vunpack.c.h.b16 %v354
  %v1790 = vunpack.c.l.b16 %v355
  %v1791 = vunpack.c.h.b16 %v355
  %v1792 = vunpack.c.l.b16 %v356
  %v1793 = vunpack.c.h.b16 %v356
  %v1794 = vunpack.c.l.b16 %v357
  %v1795 = vunpack.c.h.b16 %v357
  %v1796 = vunpack.c.l.b16 %v358
  %v1797 = vunpack.c.h.b16 %v358
  %v1798 = vunpack.c.l.b16 %v359
  %v1799 = vunpack.c.h.b16 %v359
  %v1800 = vunpack.c.l.b16 %v360
  %v1801 = vunpack.c.h.b16 %v360
  %v1802 = vunpack.c.l.b16 %v361
  %v1803 = vunpack.c.h.b16 %v361
  %v1804 = vunpack.c.l.b16 %v362
  %v1805 = vunpack.c.h.b16 %v362
  %v1806 = vunpack.c.l.b16 %v363
  %v1807 = vunpack.c.h.b16 %v363
  %v1808 = vunpack.c.l.b16 %v364
  %v1809 = vunpack.c.h.b16 %v364
  %v1810 = vunpack.c.l.b16 %v365
  %v1811 = vunpack.c.h.b16 %v365
  %v1812 = vunpack.c.l.b16 %v366
  %v1813 = vunpack.c.h.b16 %v366
  %v1814 = vunpack.c.l.b16 %v367
  %v1815 = vunpack.c.h.b16 %v367
  %v1816 = vunpack.c.l.b16 %v368
  %v1817 = vunpack.c.h.b16 %v368
  %v1818 = vunpack.c.l.b16 %v369
  %v1819 = vunpack.c.h.b16 %v369
  %v1820 = vunpack.c.l.b16 %v370
  %v1821 = vunpack.c.h.b16 %v370
  %v1822 = vunpack.c.l.b16 %v371
  %v1823 = vunpack.c.h.b16 %v371
  %v1824 = vunpack.c.l.b16 %v372
  %v1825 = vunpack.c.h.b16 %v372
  %v1826 = vunpack.c.l.b16 %v373
  %v1827 = vunpack.c.h.b16 %v373
  %v1828 = vunpack.c.l.b16 %v374
  %v1829 = vunpack.c.h.b16 %v374
  %v1830 = vunpack.c.l.b16 %v375
  %v1831 = vunpack.c.h.b16 %v375
  %v1832 = vunpack.c.l.b16 %v376
  %v1833 = vunpack.c.h.b16 %v376
  %v1834 = vunpack.c.l.b16 %v377
  %v1835 = vunpack.c.h.b16 %v377
  %v1836 = vunpack.c.l.b16 %v378
  %v1837 = vunpack.c.h.b16 %v378
  %v1838 = vunpack.c.l.b16 %v379
  %v1839 = vunpack.c.h.b16 %v379
  %v1840 = vunpack.c.l.b16 %v380
  %v1841 = vunpack.c.h.b16 %v380
  %v1842 = vunpack.c.l.b16 %v381
  %v1843 = vunpack.c.h.b16 %v381
  %v1844 = vunpack.c.l.b16 %v382
  %v1845 = vunpack.c.h.b16 %v382
  %v1846 = vunpack.c.l.b16 %v383
  %v1847 = vunpack.c.h.b16 %v383
  %v1848 = vunpack.c.l.b16 %v384
  %v1849 = vunpack.c.h.b16 %v384
  %v1850 = vunpack.c.l.b16 %v385
  %v1851 = vunpack.c.h.b16 %v385
  %v1852 = vunpack.c.l.b16 %v386
  %v1853 = vunpack.c.h.b16 %v386
  %v1854 = vunpack.c.l.b16 %v387
  %v1855 = vunpack.c.h.b16 %v387
  %v1856 = vunpack.c.l.b16 %v388
  %v1857 = vunpack.c.h.b16 %v388
  %v1858 = vunpack.c.l.b16 %v389
  %v1859 = vunpack.c.h.b16 %v389
  %v1860 = vunpack.c.l.b16 %v390
  %v1861 = vunpack.c.h.b16 %v390
  %v1862 = vunpack.c.l.b16 %v391
  %v1863 = vunpack.c.h.b16 %v391
  %v1864 = vunpack.c.l.b16 %v392
  %v1865 = vunpack.c.h.b16 %v392
  %v1866 = vunpack.c.l.b16 %v393
  %v1867 = vunpack.c.h.b16 %v393
  %v1868 = vunpack.c.l.b16 %v394
  %v1869 = vunpack.c.h.b16 %v394
  %v1870 = vunpack.c.l.b16 %v395
  %v1871 = vunpack.c.h.b16 %v395
  %v1872 = vunpack.c.l.b16 %v396
  %v1873 = vunpack.c.h.b16 %v396
  %v1874 = vunpack.c.l.b16 %v397
  %v1875 = vunpack.c.h.b16 %v397
  %v1876 = vunpack.c.l.b16 %v398
  %v1877 = vunpack.c.h.b16 %v398
  %v1878 = vunpack.c.l.b16 %v399
  %v1879 = vunpack.c.h.b16 %v399
  %v1880 = vunpack.c.l.b16 %v400
  %v1881 = vunpack.c.h.b16 %v400
  %v1882 = vunpack.c.l.b16 %v401
  %v1883 = vunpack.c.h.b16 %v401
  %v1884 = vunpack.c.l.b16 %v402
  %v1885 = vunpack.c.h.b16 %v402
  %v1886 = vunpack.c.l.b16 %v403
  %v1887 = vunpack.c.h.b16 %v403
  %v1888 = vunpack.c.l.b16 %v404
  %v1889 = vunpack.c.h.b16 %v404
  %v1890 = vunpack.c.l.b16 %v405
  %v1891 = vunpack.c.h.b16 %v405
  %v1892 = vunpack.c.l.b16 %v406
  %v1893 = vunpack.c.h.b16 %v406
  %v1894 = vunpack.c.l.b16 %v407
  %v1895 = vunpack.c.h.b16 %v407
  %v1896 = vunpack.c.l.b16 %v408
  %v1897 = vunpack.c.h.b16 %v408
  %v1898 = vunpack.c.l.b16 %v409
  %v1899 = vunpack.c.h.b16 %v409
  %v1900 = vunpack.c.l.b16 %v410
  %v1901 = vunpack.c.h.b16 %v410
  %v1902 = vunpack.c.l.b16 %v411
  %v1903 = vunpack.c.h.b16 %v411
  %v1904 = vunpack.c.l.b16 %v412
  %v1905 = vunpack.c.h.b16 %v412
  %v1906 = vunpack.c.l.b16 %v413
  %v1907 = vunpack.c.h.b16 %v413
  %v1908 = vunpack.c.l.b16 %v414
  %v1909 = vunpack.c.h.b16 %v414
  %v1910 = vunpack.c.l.b16 %v415
  %v1911 = vunpack.c.h.b16 %v415
  %v1912 = vunpack.c.l.b16 %v416
  %v1913 = vunpack.c.h.b16 %v416
  %v1914 = vunpack.c.l.b16 %v417
  %v1915 = vunpack.c.h.b16 %v417
  %v1916 = vunpack.c.l.b16 %v418
  %v1917 = vunpack.c.h.b16 %v418
  %v1918 = vunpack.c.l.b16 %v419
  %v1919 = vunpack.c.h.b16 %v419
  %v1920 = vunpack.c.l.b16 %v420
  %v1921 = vunpack.c.h.b16 %v420
  %v1922 = vunpack.c.l.b16 %v421
  %v1923 = vunpack.c.h.b16 %v421
  %v1924 = vunpack.c.l.b16 %v422
  %v1925 = vunpack.c.h.b16 %v422
  %v1926 = vunpack.c.l.b16 %v423
  %v1927 = vunpack.c.h.b16 %v423
  %v1928 = vunpack.c.l.b16 %v424
  %v1929 = vunpack.c.h.b16 %v424
  %v1930 = vunpack.c.l.b16 %v425
  %v1931 = vunpack.c.h.b16 %v425
  %v1932 = vunpack.c.l.b16 %v426
  %v1933 = vunpack.c.h.b16 %v426
  %v1934 = vunpack.c.l.b16 %v427
  %v1935 = vunpack.c.h.b16 %v427
  %v1936 = vunpack.c.l.b16 %v428
  %v1937 = vunpack.c.h.b16 %v428
  %v1938 = vunpack.c.l.b16 %v429
  %v1939 = vunpack.c.h.b16 %v429
  %v1940 = vunpack.c.l.b16 %v430
  %v1941 = vunpack.c.h.b16 %v430
  %v1942 = vunpack.c.l.b16 %v431
  %v1943 = vunpack.c.h.b16 %v431
  %v1944 = vunpack.c.l.b16 %v432
  %v1945 = vunpack.c.h.b16 %v432
  %v1946 = vunpack.c.l.b16 %v433
  %v1947 = vunpack.c.h.b16 %v433
  %v1948 = vunpack.c.l.b16 %v434
  %v1949 = vunpack.c.h.b16 %v434
  %v1950 = vunpack.c.l.b16 %v435
  %v1951 = vunpack.c.h.b16 %v435
  %v1952 = vunpack.c.l.b16 %v436
  %v1953 = vunpack.c.h.b16 %v436
  %v1954 = vunpack.c.l.b16 %v437
  %v1955 = vunpack.c.h.b16 %v437
  %v1956 = vunpack.c.l.b16 %v438
  %v1957 = vunpack.c.h.b16 %v438
  %v1958 = vunpack.c.l.b16 %v439
  %v1959 = vunpack.c.h.b16 %v439
  %v1960 = vunpack.c.l.b16 %v440
  %v1961 = vunpack.c.h.b16 %v440
  %v1962 = vunpack.c.l.b16 %v441
  %v1963 = vunpack.c.h.b16 %v441
  %v1964 = vunpack.c.l.b16 %v442
  %v1965 = vunpack.c.h.b16 %v442
  %v1966 = vunpack.c.l.b16 %v443
  %v1967 = vunpack.c.h.b16 %v443
  %v1968 = vunpack.c.l.b16 %v444
  %v1969 = vunpack.c.h.b16 %v444
  %v1970 = vunpack.c.l.b16 %v445
  %v1971 = vunpack.c.h.b16 %v445
  %v1972 = vunpack.c.l.b16 %v446
  %v1973 = vunpack.c.h.b16 %v446
  %v1974 = vunpack.c.l.b16 %v447
  %v1975 = vunpack.c.h.b16 %v447
  %v1976 = vunpack.c.l.b16 %v448
  %v1977 = vunpack.c.h.b16 %v448
  %v1978 = vunpack.c.l.b16 %v449
  %v1979 = vunpack.c.h.b16 %v449
  %v1980 = vunpack.c.l.b16 %v450
  %v1981 = vunpack.c.h.b16 %v450
  %v1982 = vunpack.c.l.b16 %v451
  %v1983 = vunpack.c.h.b16 %v451
  %v1984 = vunpack.c.l.b16 %v452
  %v1985 = vunpack.c.h.b16 %v452
  %v1986 = vunpack.c.l.b16 %v453
  %v1987 = vunpack.c.h.b16 %v453
  %v1988 = vunpack.c.l.b16 %v454
  %v1989 = vunpack.c.h.b16 %v454
  %v1990 = vunpack.c.l.b16 %v455
  %v1991 = vunpack.c.h.b16 %v455
  %v1992 = vunpack.c.l.b16 %v456
  %v1993 = vunpack.c.h.b16 %v456
  %v1994 = vunpack.c.l.b16 %v457
  %v1995 = vunpack.c.h.b16 %v457
  %v1996 = vunpack.c.l.b16 %v458
  %v1997 = vunpack.c.h.b16 %v458
  %v1998 = vunpack.c.l.b16 %v459
  %v1999 = vunpack.c.h.b16 %v459
  %v2000 = vunpack.c.l.b16 %v460
  %v2001 = vunpack.c.h.b16 %v460
  %v2002 = vunpack.c.l.b16 %v461
  %v2003 = vunpack.c.h.b16 %v461
  %v2004 = vunpack.c.l.b16 %v462
  %v2005 = vunpack.c.h.b16 %v462
  %v2006 = vunpack.c.l.b16 %v463
  %v2007 = vunpack.c.h.b16 %v463
  %v2008 = vunpack.c.l.b16 %v464
  %v2009 = vunpack.c.h.b16 %v464
  %v2010 = vunpack.c.l.b16 %v465
  %v2011 = vunpack.c.h.b16 %v465
  %v2012 = vunpack.c.l.b16 %v466
  %v2013 = vunpack.c.h.b16 %v466
  %v2014 = vunpack.c.l.b16 %v467
  %v2015 = vunpack.c.h.b16 %v467
  %v2016 = vunpack.c.l.b16 %v468
  %v2017 = vunpack.c.h.b16 %v468
  %v2018 = vunpack.c.l.b16 %v469
  %v2019 = vunpack.c.h.b16 %v469
  %v2020 = vunpack.c.l.b16 %v470
  %v2021 = vunpack.c.h.b16 %v470
  %v2022 = vunpack.c.l.b16 %v471
  %v2023 = vunpack.c.h.b16 %v471
  %v2024 = vunpack.c.l.b16 %v472
  %v2025 = vunpack.c.h.b16 %v472
  %v2026 = vunpack.c.l.b16 %v473
  %v2027 = vunpack.c.h.b16 %v473
  %v2028 = vunpack.c.l.b16 %v474
  %v2029 = vunpack.c.h.b16 %v474
  %v2030 = vunpack.c.l.b16 %v475
  %v2031 = vunpack.c.h.b16 %v475
  %v2032 = vunpack.c.l.b16 %v476
  %v2033 = vunpack.c.h.b16 %v476
  %v2034 = vunpack.c.l.b16 %v477
  %v2035 = vunpack.c.h.b16 %v477
  %v2036 = vunpack.c.l.b16 %v478
  %v2037 = vunpack.c.h.b16 %v478
  %v2038 = vunpack.c.l.b16 %v479
  %v2039 = vunpack.c.h.b16 %v479
  %v2040 = vunpack.c.l.b16 %v480
  %v2041 = vunpack.c.h.b16 %v480
  %v2042 = vunpack.c.l.b16 %v481
  %v2043 = vunpack.c.h.b16 %v481
  %v2044 = vunpack.c.l.b16 %v482
  %v2045 = vunpack.c.h.b16 %v482
  %v2046 = vunpack.c.l.b16 %v483
  %v2047 = vunpack.c.h.b16 %v483
  %v2048 = vunpack.c.l.b16 %v484
  %v2049 = vunpack.c.h.b16 %v484
  %v2050 = vunpack.c.l.b16 %v485
  %v2051 = vunpack.c.h.b16 %v485
  %v2052 = vunpack.c.l.b16 %v486
  %v2053 = vunpack.c.h.b16 %v486
  %v2054 = vunpack.c.l.b16 %v487
  %v2055 = vunpack.c.h.b16 %v487
  %v2056 = vunpack.c.l.b16 %v488
  %v2057 = vunpack.c.h.b16 %v488
  %v2058 = vunpack.c.l.b16 %v489
  %v2059 = vunpack.c.h.b16 %v489
  %v2060 = vunpack.c.l.b16 %v490
  %v2061 = vunpack.c.h.b16 %v490
  %v2062 = vunpack.c.l.b16 %v491
  %v2063 = vunpack.c.h.b16 %v491
  %v2064 = vunpack.c.l.b16 %v492
  %v2065 = vunpack.c.h.b16 %v492
  %v2066 = vunpack.c.l.b16 %v493
  %v2067 = vunpack.c.h.b16 %v493
  %v2068 = vunpack.c.l.b16 %v494
  %v2069 = vunpack.c.h.b16 %v494
  %v2070 = vunpack.c.l.b16 %v495
  %v2071 = vunpack.c.h.b16 %v495
  %v2072 = vunpack.c.l.b16 %v496
  %v2073 = vunpack.c.h.b16 %v496
  %v2074 = vunpack.c.l.b16 %v497
  %v2075 = vunpack.c.h.b16 %v497
  %v2076 = vunpack.c.l.b16 %v498
  %v2077 = vunpack.c.h.b16 %v498
  %v2078 = vunpack.c.l.b16 %v499
  %v2079 = vunpack.c.h.b16 %v499
  %v2080 = vunpack.c.l.b16 %v500
  %v2081 = vunpack.c.h.b16 %v500
  %v2082 = vunpack.c.l.b16 %v501
  %v2083 = vunpack.c.h.b16 %v501
  %v2084 = vunpack.c.l.b16 %v502
  %v2085 = vunpack.c.h.b16 %v502
  %v2086 = vunpack.c.l.b16 %v503
  %v2087 = vunpack.c.h.b16 %v503
  %v2088 = vunpack.c.l.b16 %v504
  %v2089 = vunpack.c.h.b16 %v504
  %v2090 = vunpack.c.l.b16 %v505
  %v2091 = vunpack.c.h.b16 %v505
  %v2092 = vunpack.c.l.b16 %v506
  %v2093 = vunpack.c.h.b16 %v506
  %v2094 = vunpack.c.l.b16 %v507
  %v2095 = vunpack.c.h.b16 %v507
  %v2096 = vunpack.c.l.b16 %v508
  %v2097 = vunpack.c.h.b16 %v508
  %v2098 = vunpack.c.l.b16 %v509
  %v2099 = vunpack.c.h.b16 %v509
  %v2100 = vunpack.c.l.b16 %v510
  %v2101 = vunpack.c.h.b16 %v510
  %v2102 = vunpack.c.l.b16 %v511
  %v2103 = vunpack.c.h.b16 %v511
  %v2104 = vunpack.c.l.b16 %v512
  %v2105 = vunpack.c.h.b16 %v512
  %v2106 = vunpack.c.l.b16 %v513
  %v2107 = vunpack.c.h.b16 %v513
  %v2108 = vunpack.c.l.b16 %v514
  %v2109 = vunpack.c.h.b16 %v514
  %v2110 = vunpack.c.l.b16 %v515
  %v2111 = vunpack.c.h.b16 %v515
  %v2112 = vunpack.c.l.b16 %v516
  %v2113 = vunpack.c.h.b16 %v516
  %v2114 = vunpack.c.l.b16 %v517
  %v2115 = vunpack.c.h.b16 %v517
  %v2116 = vunpack.c.l.b16 %v518
  %v2117 = vunpack.c.h.b16 %v518
  %v2118 = vunpack.c.l.b16 %v519
  %v2119 = vunpack.c.h.b16 %v519
  %v2120 = vunpack.c.l.b16 %v520
  %v2121 = vunpack.c.h.b16 %v520
  %v2122 = vunpack.c.l.b16 %v521
  %v2123 = vunpack.c.h.b16 %v521
  %v2124 = vunpack.c.l.b16 %v522
  %v2125 = vunpack.c.h.b16 %v522
  %v2126 = vunpack.c.l.b16 %v523
  %v2127 = vunpack.c.h.b16 %v523
  %v2128 = vunpack.c.l.b16 %v524
  %v2129 = vunpack.c.h.b16 %v524
  %v2130 = vunpack.c.l.b16 %v525
  %v2131 = vunpack.c.h.b16 %v525
  %v2132 = vunpack.c.l.b16 %v526
  %v2133 = vunpack.c.h.b16 %v526
  %v2134 = vunpack.c.l.b16 %v527
  %v2135 = vunpack.c.h.b16 %v527
  %v2136 = vunpack.c.l.b16 %v528
  %v2137 = vunpack.c.h.b16 %v528
  %v2138 = vunpack.c.l.b16 %v529
  %v2139 = vunpack.c.h.b16 %v529
  %v2140 = vunpack.c.l.b16 %v530
  %v2141 = vunpack.c.h.b16 %v530
  %v2142 = vunpack.c.l.b16 %v531
  %v2143 = vunpack.c.h.b16 %v531
  %v2144 = vunpack.c.l.b16 %v532
  %v2145 = vunpack.c.h.b16 %v532
  %v2146 = vunpack.c.l.b16 %v533
  %v2147 = vunpack.c.h.b16 %v533
  %v2148 = vpack.c.b16 %v1128, %v1124
  %v2149 = vpack.c.b16 %v1129, %v1125
  %v2150 = vpack.c.b16 %v1130, %v1126
  %v2151 = vpack.c.b16 %v1131, %v1127
  %v2152 = vpack.c.b16 %v1136, %v1132
  %v2153 = vpack.c.b16 %v1137, %v1133
  %v2154 = vpack.c.b16 %v1138, %v1134
  %v2155 = vpack.c.b16 %v1139, %v1135
  %v2156 = vpack.c.b16 %v1144, %v1140
  %v2157 = vpack.c.b16 %v1145, %v1141
  %v2158 = vpack.c.b16 %v1146, %v1142
  %v2159 = vpack.c.b16 %v1147, %v1143
  %v2160 = vpack.c.b16 %v1152, %v1148
  %v2161 = vpack.c.b16 %v1153, %v1149
  %v2162 = vpack.c.b16 %v1154, %v1150
  %v2163 = vpack.c.b16 %v1155, %v1151
  %v2164 = vpack.c.b16 %v1160, %v1156
  %v2165 = vpack.c.b16 %v1161, %v1157
  %v2166 = vpack.c.b16 %v1162, %v1158
  %v2167 = vpack.c.b16 %v1163, %v1159
  %v2168 = vpack.c.b16 %v1168, %v1164
  %v2169 = vpack.c.b16 %v1169, %v1165
  %v2170 = vpack.c.b16 %v1170, %v1166
  %v2171 = vpack.c.b16 %v1171, %v1167
  %v2172 = vpack.c.b16 %v1176, %v1172
  %v2173 = vpack.c.b16 %v1177, %v1173
  %v2174 = vpack.c.b16 %v1178, %v1174
  %v2175 = vpack.c.b16 %v1179, %v1175
  %v2176 = vpack.c.b16 %v1184, %v1180
  %v2177 = vpack.c.b16 %v1185, %v1181
  %v2178 = vpack.c.b16 %v1186, %v1182
  %v2179 = vpack.c.b16 %v1187, %v1183
  %v2180 = vpack.c.b16 %v1192, %v1188
  %v2181 = vpack.c.b16 %v1193, %v1189
  %v2182 = vpack.c.b16 %v1194, %v1190
  %v2183 = vpack.c.b16 %v1195, %v1191
  %v2184 = vpack.c.b16 %v1200, %v1196
  %v2185 = vpack.c.b16 %v1201, %v1197
  %v2186 = vpack.c.b16 %v1202, %v1198
  %v2187 = vpack.c.b16 %v1203, %v1199
  %v2188 = vpack.c.b16 %v1208, %v1204
  %v2189 = vpack.c.b16 %v1209, %v1205
  %v2190 = vpack.c.b16 %v1210, %v1206
  %v2191 = vpack.c.b16 %v1211, %v1207
  %v2192 = vpack.c.b16 %v1216, %v1212
  %v2193 = vpack.c.b16 %v1217, %v1213
  %v2194 = vpack.c.b16 %v1218, %v1214
  %v2195 = vpack.c.b16 %v1219, %v1215
  %v2196 = vpack.c.b16 %v1224, %v1220
  %v2197 = vpack.c.b16 %v1225, %v1221
  %v2198 = vpack.c.b16 %v1226, %v1222
  %v2199 = vpack.c.b16 %v1227, %v1223
  %v2200 = vpack.c.b16 %v1232, %v1228
  %v2201 = vpack.c.b16 %v1233, %v1229
  %v2202 = vpack.c.b16 %v1234, %v1230
  %v2203 = vpack.c.b16 %v1235, %v1231
  %v2204 = vpack.c.b16 %v1240, %v1236
  %v2205 = vpack.c.b16 %v1241, %v1237
  %v2206 = vpack.c.b16 %v1242, %v1238
  %v2207 = vpack.c.b16 %v1243, %v1239
  %v2208 = vpack.c.b16 %v1248, %v1244
  %v2209 = vpack.c.b16 %v1249, %v1245
  %v2210 = vpack.c.b16 %v1250, %v1246
  %v2211 = vpack.c.b16 %v1251, %v1247
  %v2212 = vpack.c.b16 %v1256, %v1252
  %v2213 = vpack.c.b16 %v1257, %v1253
  %v2214 = vpack.c.b16 %v1258, %v1254
  %v2215 = vpack.c.b16 %v1259, %v1255
  %v2216 = vpack.c.b16 %v1264, %v1260
  %v2217 = vpack.c.b16 %v1265, %v1261
  %v2218 = vpack.c.b16 %v1266, %v1262
  %v2219 = vpack.c.b16 %v1267, %v1263
  %v2220 = vpack.c.b16 %v1272, %v1268
  %v2221 = vpack.c.b16 %v1273, %v1269
  %v2222 = vpack.c.b16 %v1274, %v1270
  %v2223 = vpack.c.b16 %v1275, %v1271
  %v2224 = vpack.c.b16 %v1280, %v1276
  %v2225 = vpack.c.b16 %v1281, %v1277
  %v2226 = vpack.c.b16 %v1282, %v1278
  %v2227 = vpack.c.b16 %v1283, %v1279
  %v2228 = vpack.c.b16 %v1288, %v1284
  %v2229 = vpack.c.b16 %v1289, %v1285
  %v2230 = vpack.c.b16 %v1290, %v1286
  %v2231 = vpack.c.b16 %v1291, %v1287
  %v2232 = vpack.c.b16 %v1296, %v1292
  %v2233 = vpack.c.b16 %v1297, %v1293
  %v2234 = vpack.c.b16 %v1298, %v1294
  %v2235 = vpack.c.b16 %v1299, %v1295
  %v2236 = vpack.c.b16 %v1304, %v1300
  %v2237 = vpack.c.b16 %v1305, %v1301
  %v2238 = vpack.c.b16 %v1306, %v1302
  %v2239 = vpack.c.b16 %v1307, %v1303
  %v2240 = vpack.c.b16 %v1312, %v1308
  %v2241 = vpack.c.b16 %v1313, %v1309
  %v2242 = vpack.c.b16 %v1314, %v1310
  %v2243 = vpack.c.b16 %v1315, %v1311
  %v2244 = vpack.c.b16 %v1320, %v1316
  %v2245 = vpack.c.b16 %v1321, %v1317
  %v2246 = vpack.c.b16 %v1322, %v1318
  %v2247 = vpack.c.b16 %v1323, %v1319
  %v2248 = vpack.c.b16 %v1328, %v1324
  %v2249 = vpack.c.b16 %v1329, %v1325
  %v2250 = vpack.c.b16 %v1330, %v1326
  %v2251 = vpack.c.b16 %v1331, %v1327
  %v2252 = vpack.c.b16 %v1336, %v1332
  %v2253 = vpack.c.b16 %v1337, %v1333
  %v2254 = vpack.c.b16 %v1338, %v1334
  %v2255 = vpack.c.b16 %v1339, %v1335
  %v2256 = vpack.c.b16 %v1344, %v1340
  %v2257 = vpack.c.b16 %v1345, %v1341
  %v2258 = vpack.c.b16 %v1346, %v1342
  %v2259 = vpack.c.b16 %v1347, %v1343
  %v2260 = vpack.c.b16 %v1352, %v1348
  %v2261 = vpack.c.b16 %v1353, %v1349
  %v2262 = vpack.c.b16 %v1354, %v1350
  %v2263 = vpack.c.b16 %v1355, %v1351
  %v2264 = vpack.c.b16 %v1360, %v1356
  %v2265 = vpack.c.b16 %v1361, %v1357
  %v2266 = vpack.c.b16 %v1362, %v1358
  %v2267 = vpack.c.b16 %v1363, %v1359
  %v2268 = vpack.c.b16 %v1368, %v1364
  %v2269 = vpack.c.b16 %v1369, %v1365
  %v2270 = vpack.c.b16 %v1370, %v1366
  %v2271 = vpack.c.b16 %v1371, %v1367
  %v2272 = vpack.c.b16 %v1376, %v1372
  %v2273 = vpack.c.b16 %v1377, %v1373
  %v2274 = vpack.c.b16 %v1378, %v1374
  %v2275 = vpack.c.b16 %v1379, %v1375
  %v2276 = vpack.c.b16 %v1384, %v1380
  %v2277 = vpack.c.b16 %v1385, %v1381
  %v2278 = vpack.c.b16 %v1386, %v1382
  %v2279 = vpack.c.b16 %v1387, %v1383
  %v2280 = vpack.c.b16 %v1392, %v1388
  %v2281 = vpack.c.b16 %v1393, %v1389
  %v2282 = vpack.c.b16 %v1394, %v1390
  %v2283 = vpack.c.b16 %v1395, %v1391
  %v2284 = vpack.c.b16 %v1400, %v1396
  %v2285 = vpack.c.b16 %v1401, %v1397
  %v2286 = vpack.c.b16 %v1402, %v1398
  %v2287 = vpack.c.b16 %v1403, %v1399
  %v2288 = vpack.c.b16 %v1408, %v1404
  %v2289 = vpack.c.b16 %v1409, %v1405
  %v2290 = vpack.c.b16 %v1410, %v1406
  %v2291 = vpack.c.b16 %v1411, %v1407
  %v2292 = vpack.c.b16 %v1416, %v1412
  %v2293 = vpack.c.b16 %v1417, %v1413
  %v2294 = vpack.c.b16 %v1418, %v1414
  %v2295 = vpack.c.b16 %v1419, %v1415
  %v2296 = vpack.c.b16 %v1424, %v1420
  %v2297 = vpack.c.b16 %v1425, %v1421
  %v2298 = vpack.c.b16 %v1426, %v1422
  %v2299 = vpack.c.b16 %v1427, %v1423
  %v2300 = vpack.c.b16 %v1432, %v1428
  %v2301 = vpack.c.b16 %v1433, %v1429
  %v2302 = vpack.c.b16 %v1434, %v1430
  %v2303 = vpack.c.b16 %v1435, %v1431
  %v2304 = vpack.c.b16 %v1440, %v1436
  %v2305 = vpack.c.b16 %v1441, %v1437
  %v2306 = vpack.c.b16 %v1442, %v1438
  %v2307 = vpack.c.b16 %v1443, %v1439
  %v2308 = vpack.c.b16 %v1448, %v1444
  %v2309 = vpack.c.b16 %v1449, %v1445
  %v2310 = vpack.c.b16 %v1450, %v1446
  %v2311 = vpack.c.b16 %v1451, %v1447
  %v2312 = vpack.c.b16 %v1456, %v1452
  %v2313 = vpack.c.b16 %v1457, %v1453
  %v2314 = vpack.c.b16 %v1458, %v1454
  %v2315 = vpack.c.b16 %v1459, %v1455
  %v2316 = vpack.c.b16 %v1464, %v1460
  %v2317 = vpack.c.b16 %v1465, %v1461
  %v2318 = vpack.c.b16 %v1466, %v1462
  %v2319 = vpack.c.b16 %v1467, %v1463
  %v2320 = vpack.c.b16 %v1472, %v1468
  %v2321 = vpack.c.b16 %v1473, %v1469
  %v2322 = vpack.c.b16 %v1474, %v1470
  %v2323 = vpack.c.b16 %v1475, %v1471
  %v2324 = vpack.c.b16 %v1480, %v1476
  %v2325 = vpack.c.b16 %v1481, %v1477
  %v2326 = vpack.c.b16 %v1482, %v1478
  %v2327 = vpack.c.b16 %v1483, %v1479
  %v2328 = vpack.c.b16 %v1488, %v1484
  %v2329 = vpack.c.b16 %v1489, %v1485
  %v2330 = vpack.c.b16 %v1490, %v1486
  %v2331 = vpack.c.b16 %v1491, %v1487
  %v2332 = vpack.c.b16 %v1496, %v1492
  %v2333 = vpack.c.b16 %v1497, %v1493
  %v2334 = vpack.c.b16 %v1498, %v1494
  %v2335 = vpack.c.b16 %v1499, %v1495
  %v2336 = vpack.c.b16 %v1504, %v1500
  %v2337 = vpack.c.b16 %v1505, %v1501
  %v2338 = vpack.c.b16 %v1506, %v1502
  %v2339 = vpack.c.b16 %v1507, %v1503
  %v2340 = vpack.c.b16 %v1512, %v1508
  %v2341 = vpack.c.b16 %v1513, %v1509
  %v2342 = vpack.c.b16 %v1514, %v1510
  %v2343 = vpack.c.b16 %v1515, %v1511
  %v2344 = vpack.c.b16 %v1520, %v1516
  %v2345 = vpack.c.b16 %v1521, %v1517
  %v2346 = vpack.c.b16 %v1522, %v1518
  %v2347 = vpack.c.b16 %v1523, %v1519
  %v2348 = vpack.c.b16 %v1528, %v1524
  %v2349 = vpack.c.b16 %v1529, %v1525
  %v2350 = vpack.c.b16 %v1530, %v1526
  %v2351 = vpack.c.b16 %v1531, %v1527
  %v2352 = vpack.c.b16 %v1536, %v1532
  %v2353 = vpack.c.b16 %v1537, %v1533
  %v2354 = vpack.c.b16 %v1538, %v1534
  %v2355 = vpack.c.b16 %v1539, %v1535
  %v2356 = vpack.c.b16 %v1544, %v1540
  %v2357 = vpack.c.b16 %v1545, %v1541
  %v2358 = vpack.c.b16 %v1546, %v1542
  %v2359 = vpack.c.b16 %v1547, %v1543
  %v2360 = vpack.c.b16 %v1552, %v1548
  %v2361 = vpack.c.b16 %v1553, %v1549
  %v2362 = vpack.c.b16 %v1554, %v1550
  %v2363 = vpack.c.b16 %v1555, %v1551
  %v2364 = vpack.c.b16 %v1560, %v1556
  %v2365 = vpack.c.b16 %v1561, %v1557
  %v2366 = vpack.c.b16 %v1562, %v1558
  %v2367 = vpack.c.b16 %v1563, %v1559
  %v2368 = vpack.c.b16 %v1568, %v1564
  %v2369 = vpack.c.b16 %v1569, %v1565
  %v2370 = vpack.c.b16 %v1570, %v1566
  %v2371 = vpack.c.b16 %v1571, %v1567
  %v2372 = vpack.c.b16 %v1576, %v1572
  %v2373 = vpack.c.b16 %v1577, %v1573
  %v2374 = vpack.c.b16 %v1578, %v1574
  %v2375 = vpack.c.b16 %v1579, %v1575
  %v2376 = vpack.c.b16 %v1584, %v1580
  %v2377 = vpack.c.b16 %v1585, %v1581
  %v2378 = vpack.c.b16 %v1586, %v1582
  %v2379 = vpack.c.b16 %v1587, %v1583
  %v2380 = vpack.c.b16 %v1592, %v1588
  %v2381 = vpack.c.b16 %v1593, %v1589
  %v2382 = vpack.c.b16 %v1594, %v1590
  %v2383 = vpack.c.b16 %v1595, %v1591
  %v2384 = vpack.c.b16 %v1600, %v1596
  %v2385 = vpack.c.b16 %v1601, %v1597
  %v2386 = vpack.c.b16 %v1602, %v1598
  %v2387 = vpack.c.b16 %v1603, %v1599
  %v2388 = vpack.c.b16 %v1608, %v1604
  %v2389 = vpack.c.b16 %v1609, %v1605
  %v2390 = vpack.c.b16 %v1610, %v1606
  %v2391 = vpack.c.b16 %v1611, %v1607
  %v2392 = vpack.c.b16 %v1616, %v1612
  %v2393 = vpack.c.b16 %v1617, %v1613
  %v2394 = vpack.c.b16 %v1618, %v1614
  %v2395 = vpack.c.b16 %v1619, %v1615
  %v2396 = vpack.c.b16 %v1624, %v1620
  %v2397 = vpack.c.b16 %v1625, %v1621
  %v2398 = vpack.c.b16 %v1626, %v1622
  %v2399 = vpack.c.b16 %v1627, %v1623
  %v2400 = vpack.c.b16 %v1632, %v1628
  %v2401 = vpack.c.b16 %v1633, %v1629
  %v2402 = vpack.c.b16 %v1634, %v1630
  %v2403 = vpack.c.b16 %v1635, %v1631
  %v2404 = vpack.c.b16 %v1640, %v1636
  %v2405 = vpack.c.b16 %v1641, %v1637
  %v2406 = vpack.c.b16 %v1642, %v1638
  %v2407 = vpack.c.b16 %v1643, %v1639
  %v2408 = vpack.c.b16 %v1648, %v1644
  %v2409 = vpack.c.b16 %v1649, %v1645
  %v2410 = vpack.c.b16 %v1650, %v1646
  %v2411 = vpack.c.b16 %v1651, %v1647
  %v2412 = vpack.c.b16 %v1656, %v1652
  %v2413 = vpack.c.b16 %v1657, %v1653
  %v2414 = vpack.c.b16 %v1658, %v1654
  %v2415 = vpack.c.b16 %v1659, %v1655
  %v2416 = vpack.c.b16 %v1664, %v1660
  %v2417 = vpack.c.b16 %v1665, %v1661
  %v2418 = vpack.c.b16 %v1666, %v1662
  %v2419 = vpack.c.b16 %v1667, %v1663
  %v2420 = vpack.c.b16 %v1672, %v1668
  %v2421 = vpack.c.b16 %v1673, %v1669
  %v2422 = vpack.c.b16 %v1674, %v1670
  %v2423 = vpack.c.b16 %v1675, %v1671
  %v2424 = vpack.c.b16 %v1680, %v1676
  %v2425 = vpack.c.b16 %v1681, %v1677
  %v2426 = vpack.c.b16 %v1682, %v1678
  %v2427 = vpack.c.b16 %v1683, %v1679
  %v2428 = vpack.c.b16 %v1688, %v1684
  %v2429 = vpack.c.b16 %v1689, %v1685
  %v2430 = vpack.c.b16 %v1690, %v1686
  %v2431 = vpack.c.b16 %v1691, %v1687
  %v2432 = vpack.c.b16 %v1696, %v1692
  %v2433 = vpack.c.b16 %v1697, %v1693
  %v2434 = vpack.c.b16 %v1698, %v1694
  %v2435 = vpack.c.b16 %v1699, %v1695
  %v2436 = vpack.c.b16 %v1704, %v1700
  %v2437 = vpack.c.b16 %v1705, %v1701
  %v2438 = vpack.c.b16 %v1706, %v1702
  %v2439 = vpack.c.b16 %v1707, %v1703
  %v2440 = vpack.c.b16 %v1712, %v1708
  %v2441 = vpack.c.b16 %v1713, %v1709
  %v2442 = vpack.c.b16 %v1714, %v1710
  %v2443 = vpack.c.b16 %v1715, %v1711
  %v2444 = vpack.c.b16 %v1720, %v1716
  %v2445 = vpack.c.b16 %v1721, %v1717
  %v2446 = vpack.c.b16 %v1722, %v1718
  %v2447 = vpack.c.b16 %v1723, %v1719
  %v2448 = vpack.c.b16 %v1728, %v1724
  %v2449 = vpack.c.b16 %v1729, %v1725
  %v2450 = vpack.c.b16 %v1730, %v1726
  %v2451 = vpack.c.b16 %v1731, %v1727
  %v2452 = vpack.c.b16 %v1736, %v1732
  %v2453 = vpack.c.b16 %v1737, %v1733
  %v2454 = vpack.c.b16 %v1738, %v1734
  %v2455 = vpack.c.b16 %v1739, %v1735
  %v2456 = vpack.c.b16 %v1744, %v1740
  %v2457 = vpack.c.b16 %v1745, %v1741
  %v2458 = vpack.c.b16 %v1746, %v1742
  %v2459 = vpack.c.b16 %v1747, %v1743
  %v2460 = vpack.c.b16 %v1752, %v1748
  %v2461 = vpack.c.b16 %v1753, %v1749
  %v2462 = vpack.c.b16 %v1754, %v1750
  %v2463 = vpack.c.b16 %v1755, %v1751
  %v2464 = vpack.c.b16 %v1760, %v1756
  %v2465 = vpack.c.b16 %v1761, %v1757
  %v2466 = vpack.c.b16 %v1762, %v1758
  %v2467 = vpack.c.b16 %v1763, %v1759
  %v2468 = vpack.c.b16 %v1768, %v1764
  %v2469 = vpack.c.b16 %v1769, %v1765
  %v2470 = vpack.c.b16 %v1770, %v1766
  %v2471 = vpack.c.b16 %v1771, %v1767
  %v2472 = vpack.c.b16 %v1776, %v1772
  %v2473 = vpack.c.b16 %v1777, %v1773
  %v2474 = vpack.c.b16 %v1778, %v1774
  %v2475 = vpack.c.b16 %v1779, %v1775
  %v2476 = vpack.c.b16 %v1784, %v1780
  %v2477 = vpack.c.b16 %v1785, %v1781
  %v2478 = vpack.c.b16 %v1786, %v1782
  %v2479 = vpack.c.b16 %v1787, %v1783
  %v2480 = vpack.c.b16 %v1792, %v1788
  %v2481 = vpack.c.b16 %v1793, %v1789
  %v2482 = vpack.c.b16 %v1794, %v1790
  %v2483 = vpack.c.b16 %v1795, %v1791
  %v2484 = vpack.c.b16 %v1800, %v1796
  %v2485 = vpack.c.b16 %v1801, %v1797
  %v2486 = vpack.c.b16 %v1802, %v1798
  %v2487 = vpack.c.b16 %v1803, %v1799
  %v2488 = vpack.c.b16 %v1808, %v1804
  %v2489 = vpack.c.b16 %v1809, %v1805
  %v2490 = vpack.c.b16 %v1810, %v1806
  %v2491 = vpack.c.b16 %v1811, %v1807
  %v2492 = vpack.c.b16 %v1816, %v1812
  %v2493 = vpack.c.b16 %v1817, %v1813
  %v2494 = vpack.c.b16 %v1818, %v1814
  %v2495 = vpack.c.b16 %v1819, %v1815
  %v2496 = vpack.c.b16 %v1824, %v1820
  %v2497 = vpack.c.b16 %v1825, %v1821
  %v2498 = vpack.c.b16 %v1826, %v1822
  %v2499 = vpack.c.b16 %v1827, %v1823
  %v2500 = vpack.c.b16 %v1832, %v1828
  %v2501 = vpack.c.b16 %v1833, %v1829
  %v2502 = vpack.c.b16 %v1834, %v1830
  %v2503 = vpack.c.b16 %v1835, %v1831
  %v2504 = vpack.c.b16 %v1840, %v1836
  %v2505 = vpack.c.b16 %v1841, %v1837
  %v2506 = vpack.c.b16 %v1842, %v1838
  %v2507 = vpack.c.b16 %v1843, %v1839
  %v2508 = vpack.c.b16 %v1848, %v1844
  %v2509 = vpack.c.b16 %v1849, %v1845
  %v2510 = vpack.c.b16 %v1850, %v1846
  %v2511 = vpack.c.b16 %v1851, %v1847
  %v2512 = vpack.c.b16 %v1856, %v1852
  %v2513 = vpack.c.b16 %v1857, %v1853
  %v2514 = vpack.c.b16 %v1858, %v1854
  %v2515 = vpack.c.b16 %v1859, %v1855
  %v2516 = vpack.c.b16 %v1864, %v1860
  %v2517 = vpack.c.b16 %v1865, %v1861
  %v2518 = vpack.c.b16 %v1866, %v1862
  %v2519 = vpack.c.b16 %v1867, %v1863
  %v2520 = vpack.c.b16 %v1872, %v1868
  %v2521 = vpack.c.b16 %v1873, %v1869
  %v2522 = vpack.c.b16 %v1874, %v1870
  %v2523 = vpack.c.b16 %v1875, %v1871
  %v2524 = vpack.c.b16 %v1880, %v1876
  %v2525 = vpack.c.b16 %v1881, %v1877
  %v2526 = vpack.c.b16 %v1882, %v1878
  %v2527 = vpack.c.b16 %v1883, %v1879
  %v2528 = vpack.c.b16 %v1888, %v1884
  %v2529 = vpack.c.b16 %v1889, %v1885
  %v2530 = vpack.c.b16 %v1890, %v1886
  %v2531 = vpack.c.b16 %v1891, %v1887
  %v2532 = vpack.c.b16 %v1896, %v1892
  %v2533 = vpack.c.b16 %v1897, %v1893
  %v2534 = vpack.c.b16 %v1898, %v1894
  %v2535 = vpack.c.b16 %v1899, %v1895
  %v2536 = vpack.c.b16 %v1904, %v1900
  %v2537 = vpack.c.b16 %v1905, %v1901
  %v2538 = vpack.c.b16 %v1906, %v1902
  %v2539 = vpack.c.b16 %v1907, %v1903
  %v2540 = vpack.c.b16 %v1912, %v1908
  %v2541 = vpack.c.b16 %v1913, %v1909
  %v2542 = vpack.c.b16 %v1914, %v1910
  %v2543 = vpack.c.b16 %v1915, %v1911
  %v2544 = vpack.c.b16 %v1920, %v1916
  %v2545 = vpack.c.b16 %v1921, %v1917
  %v2546 = vpack.c.b16 %v1922, %v1918
  %v2547 = vpack.c.b16 %v1923, %v1919
  %v2548 = vpack.c.b16 %v1928, %v1924
  %v2549 = vpack.c.b16 %v1929, %v1925
  %v2550 = vpack.c.b16 %v1930, %v1926
  %v2551 = vpack.c.b16 %v1931, %v1927
  %v2552 = vpack.c.b16 %v1936, %v1932
  %v2553 = vpack.c.b16 %v1937, %v1933
  %v2554 = vpack.c.b16 %v1938, %v1934
  %v2555 = vpack.c.b16 %v1939, %v1935
  %v2556 = vpack.c.b16 %v1944, %v1940
  %v2557 = vpack.c.b16 %v1945, %v1941
  %v2558 = vpack.c.b16 %v1946, %v1942
  %v2559 = vpack.c.b16 %v1947, %v1943
  %v2560 = vpack.c.b16 %v1952, %v1948
  %v2561 = vpack.c.b16 %v1953, %v1949
  %v2562 = vpack.c.b16 %v1954, %v1950
  %v2563 = vpack.c.b16 %v1955, %v1951
  %v2564 = vpack.c.b16 %v1960, %v1956
  %v2565 = vpack.c.b16 %v1961, %v1957
  %v2566 = vpack.c.b16 %v1962, %v1958
  %v2567 = vpack.c.b16 %v1963, %v1959
  %v2568 = vpack.c.b16 %v1968, %v1964
  %v2569 = vpack.c.b16 %v1969, %v1965
  %v2570 = vpack.c.b16 %v1970, %v1966
  %v2571 = vpack.c.b16 %v1971, %v1967
  %v2572 = vpack.c.b16 %v1976, %v1972
  %v2573 = vpack.c.b16 %v1977, %v1973
  %v2574 = vpack.c.b16 %v1978, %v1974
  %v2575 = vpack.c.b16 %v1979, %v1975
  %v2576 = vpack.c.b16 %v1984, %v1980
  %v2577 = vpack.c.b16 %v1985, %v1981
  %v2578 = vpack.c.b16 %v1986, %v1982
  %v2579 = vpack.c.b16 %v1987, %v1983
  %v2580 = vpack.c.b16 %v1992, %v1988
  %v2581 = vpack.c.b16 %v1993, %v1989
  %v2582 = vpack.c.b16 %v1994, %v1990
  %v2583 = vpack.c.b16 %v1995, %v1991
  %v2584 = vpack.c.b16 %v2000, %v1996
  %v2585 = vpack.c.b16 %v2001, %v1997
  %v2586 = vpack.c.b16 %v2002, %v1998
  %v2587 = vpack.c.b16 %v2003, %v1999
  %v2588 = vpack.c.b16 %v2008, %v2004
  %v2589 = vpack.c.b16 %v2009, %v2005
  %v2590 = vpack.c.b16 %v2010, %v2006
  %v2591 = vpack.c.b16 %v2011, %v2007
  %v2592 = vpack.c.b16 %v2016, %v2012
  %v2593 = vpack.c.b16 %v2017, %v2013
  %v2594 = vpack.c.b16 %v2018, %v2014
  %v2595 = vpack.c.b16 %v2019, %v2015
  %v2596 = vpack.c.b16 %v2024, %v2020
  %v2597 = vpack.c.b16 %v2025, %v2021
  %v2598 = vpack.c.b16 %v2026, %v2022
  %v2599 = vpack.c.b16 %v2027, %v2023
  %v2600 = vpack.c.b16 %v2032, %v2028
  %v2601 = vpack.c.b16 %v2033, %v2029
  %v2602 = vpack.c.b16 %v2034, %v2030
  %v2603 = vpack.c.b16 %v2035, %v2031
  %v2604 = vpack.c.b16 %v2040, %v2036
  %v2605 = vpack.c.b16 %v2041, %v2037
  %v2606 = vpack.c.b16 %v2042, %v2038
  %v2607 = vpack.c.b16 %v2043, %v2039
  %v2608 = vpack.c.b16 %v2048, %v2044
  %v2609 = vpack.c.b16 %v2049, %v2045
  %v2610 = vpack.c.b16 %v2050, %v2046
  %v2611 = vpack.c.b16 %v2051, %v2047
  %v2612 = vpack.c.b16 %v2056, %v2052
  %v2613 = vpack.c.b16 %v2057, %v2053
  %v2614 = vpack.c.b16 %v2058, %v2054
  %v2615 = vpack.c.b16 %v2059, %v2055
  %v2616 = vpack.c.b16 %v2064, %v2060
  %v2617 = vpack.c.b16 %v2065, %v2061
  %v2618 = vpack.c.b16 %v2066, %v2062
  %v2619 = vpack.c.b16 %v2067, %v2063
  %v2620 = vpack.c.b16 %v2072, %v2068
  %v2621 = vpack.c.b16 %v2073, %v2069
  %v2622 = vpack.c.b16 %v2074, %v2070
  %v2623 = vpack.c.b16 %v2075, %v2071
  %v2624 = vpack.c.b16 %v2080, %v2076
  %v2625 = vpack.c.b16 %v2081, %v2077
  %v2626 = vpack.c.b16 %v2082, %v2078
  %v2627 = vpack.c.b16 %v2083, %v2079
  %v2628 = vpack.c.b16 %v2088, %v2084
  %v2629 = vpack.c.b16 %v2089, %v2085
  %v2630 = vpack.c.b16 %v2090, %v2086
  %v2631 = vpack.c.b16 %v2091, %v2087
  %v2632 = vpack.c.b16 %v2096, %v2092
  %v2633 = vpack.c.b16 %v2097, %v2093
  %v2634 = vpack.c.b16 %v2098, %v2094
  %v2635 = vpack.c.b16 %v2099, %v2095
  %v2636 = vpack.c.b16 %v2104, %v2100
  %v2637 = vpack.c.b16 %v2105, %v2101
  %v2638 = vpack.c.b16 %v2106, %v2102
  %v2639 = vpack.c.b16 %v2107, %v2103
  %v2640 = vpack.c.b16 %v2112, %v2108
  %v2641 = vpack.c.b16 %v2113, %v2109
  %v2642 = vpack.c.b16 %v2114, %v2110
  %v2643 = vpack.c.b16 %v2115, %v2111
  %v2644 = vpack.c.b16 %v2120, %v2116
  %v2645 = vpack.c.b16 %v2121, %v2117
  %v2646 = vpack.c.b16 %v2122, %v2118
  %v2647 = vpack.c.b16 %v2123, %v2119
  %v2648 = vpack.c.b16 %v2128, %v2124
  %v2649 = vpack.c.b16 %v2129, %v2125
  %v2650 = vpack.c.b16 %v2130, %v2126
  %v2651 = vpack.c.b16 %v2131, %v2127
  %v2652 = vpack.c.b16 %v2136, %v2132
  %v2653 = vpack.c.b16 %v2137, %v2133
  %v2654 = vpack.c.b16 %v2138, %v2134
  %v2655 = vpack.c.b16 %v2139, %v2135
  %v2656 = vpack.c.b16 %v2144, %v2140
  %v2657 = vpack.c.b16 %v2145, %v2141
  %v2658 = vpack.c.b16 %v2146, %v2142
  %v2659 = vpack.c.b16 %v2147, %v2143
  %3172 = vmatprep.subr.bf16.mxu0 %v2149
  %3173 = vmatpush1.bf16.msra.mxu0 %v2148
  %3174 = vmatprep.subr.bf16.mxu0 %v2153
  %3175 = vmatpush1.bf16.msra.mxu0 %v2152
  %3176 = vmatprep.subr.bf16.mxu0 %v2157
  %3177 = vmatpush1.bf16.msra.mxu0 %v2156
  %3178 = vmatprep.subr.bf16.mxu0 %v2161
  %3179 = vmatpush1.bf16.msra.mxu0 %v2160
  %3180 = vmatprep.subr.bf16.mxu0 %v2165
  %3181 = vmatpush1.bf16.msra.mxu0 %v2164
  %3182 = vmatprep.subr.bf16.mxu0 %v2169
  %3183 = vmatpush1.bf16.msra.mxu0 %v2168
  %3184 = vmatprep.subr.bf16.mxu0 %v2173
  %3185 = vmatpush1.bf16.msra.mxu0 %v2172
  %3186 = vmatprep.subr.bf16.mxu0 %v2177
  %3187 = vmatpush1.bf16.msra.mxu0 %v2176
  %3188 = vmatprep.subr.bf16.mxu0 %v2181
  %3189 = vmatpush1.bf16.msra.mxu0 %v2180
  %3190 = vmatprep.subr.bf16.mxu0 %v2185
  %3191 = vmatpush1.bf16.msra.mxu0 %v2184
  %3192 = vmatprep.subr.bf16.mxu0 %v2189
  %3193 = vmatpush1.bf16.msra.mxu0 %v2188
  %3194 = vmatprep.subr.bf16.mxu0 %v2193
  %3195 = vmatpush1.bf16.msra.mxu0 %v2192
  %3196 = vmatprep.subr.bf16.mxu0 %v2197
  %3197 = vmatpush1.bf16.msra.mxu0 %v2196
  %3198 = vmatprep.subr.bf16.mxu0 %v2201
  %3199 = vmatpush1.bf16.msra.mxu0 %v2200
  %3200 = vmatprep.subr.bf16.mxu0 %v2205
  %3201 = vmatpush1.bf16.msra.mxu0 %v2204
  %3202 = vmatprep.subr.bf16.mxu0 %v2209
  %3203 = vmatpush1.bf16.msra.mxu0 %v2208
  %3204 = vmatprep.mubr.bf16.mxu0 %v581
  %3205 = vmatmul.mubr.bf16.gmra.mrb[0].mxu0 %v580
  %v3206 = vpop.f32.mrb[0].mxu0
  %v3207 = vadd.f32 %v539, %v3206
  %v3208 = vpop.f32.mrb[0].mxu0
  %v3209 = vadd.f32 %v543, %v3208
  %v3210 = vpop.f32.mrb[0].mxu0
  %v3211 = vpop.f32.mrb[0].mxu0
  %3212 = vdwg.mxu0
  %3213 = vmatprep.subr.bf16.mxu0 %v2213
  %3214 = vmatpush1.bf16.msra.mxu0 %v2212
  %3215 = vmatprep.subr.bf16.mxu0 %v2217
  %3216 = vmatpush1.bf16.msra.mxu0 %v2216
  %3217 = vmatprep.subr.bf16.mxu0 %v2221
  %3218 = vmatpush1.bf16.msra.mxu0 %v2220
  %3219 = vmatprep.subr.bf16.mxu0 %v2225
  %3220 = vmatpush1.bf16.msra.mxu0 %v2224
  %3221 = vmatprep.subr.bf16.mxu0 %v2229
  %3222 = vmatpush1.bf16.msra.mxu0 %v2228
  %3223 = vmatprep.subr.bf16.mxu0 %v2233
  %3224 = vmatpush1.bf16.msra.mxu0 %v2232
  %3225 = vmatprep.subr.bf16.mxu0 %v2237
  %3226 = vmatpush1.bf16.msra.mxu0 %v2236
  %3227 = vmatprep.subr.bf16.mxu0 %v2241
  %3228 = vmatpush1.bf16.msra.mxu0 %v2240
  %3229 = vmatprep.subr.bf16.mxu0 %v2245
  %3230 = vmatpush1.bf16.msra.mxu0 %v2244
  %3231 = vmatprep.subr.bf16.mxu0 %v2249
  %3232 = vmatpush1.bf16.msra.mxu0 %v2248
  %3233 = vmatprep.subr.bf16.mxu0 %v2253
  %3234 = vmatpush1.bf16.msra.mxu0 %v2252
  %3235 = vmatprep.subr.bf16.mxu0 %v2257
  %3236 = vmatpush1.bf16.msra.mxu0 %v2256
  %3237 = vmatprep.subr.bf16.mxu0 %v2261
  %3238 = vmatpush1.bf16.msra.mxu0 %v2260
  %3239 = vmatprep.subr.bf16.mxu0 %v2265
  %3240 = vmatpush1.bf16.msra.mxu0 %v2264
  %3241 = vmatprep.subr.bf16.mxu0 %v2269
  %3242 = vmatpush1.bf16.msra.mxu0 %v2268
  %3243 = vmatprep.subr.bf16.mxu0 %v2273
  %3244 = vmatpush1.bf16.msra.mxu0 %v2272
  %3245 = vmatprep.mubr.bf16.mxu0 %v583
  %3246 = vmatmul.mubr.bf16.gmra.mrb[0].mxu0 %v582
  %v3247 = vpop.f32.mrb[0].mxu0
  %v3248 = vadd.f32 %v3207, %v3247
  %v3249 = vpop.f32.mrb[0].mxu0
  %v3250 = vadd.f32 %v3209, %v3249
  %v3251 = vpop.f32.mrb[0].mxu0
  %v3252 = vpop.f32.mrb[0].mxu0
  %3253 = vdwg.mxu0
  %3254 = vmatprep.subr.bf16.mxu0 %v2277
  %3255 = vmatpush1.bf16.msra.mxu0 %v2276
  %3256 = vmatprep.subr.bf16.mxu0 %v2281
  %3257 = vmatpush1.bf16.msra.mxu0 %v2280
  %3258 = vmatprep.subr.bf16.mxu0 %v2285
  %3259 = vmatpush1.bf16.msra.mxu0 %v2284
  %3260 = vmatprep.subr.bf16.mxu0 %v2289
  %3261 = vmatpush1.bf16.msra.mxu0 %v2288
  %3262 = vmatprep.subr.bf16.mxu0 %v2293
  %3263 = vmatpush1.bf16.msra.mxu0 %v2292
  %3264 = vmatprep.subr.bf16.mxu0 %v2297
  %3265 = vmatpush1.bf16.msra.mxu0 %v2296
  %3266 = vmatprep.subr.bf16.mxu0 %v2301
  %3267 = vmatpush1.bf16.msra.mxu0 %v2300
  %3268 = vmatprep.subr.bf16.mxu0 %v2305
  %3269 = vmatpush1.bf16.msra.mxu0 %v2304
  %3270 = vmatprep.subr.bf16.mxu0 %v2309
  %3271 = vmatpush1.bf16.msra.mxu0 %v2308
  %3272 = vmatprep.subr.bf16.mxu0 %v2313
  %3273 = vmatpush1.bf16.msra.mxu0 %v2312
  %3274 = vmatprep.subr.bf16.mxu0 %v2317
  %3275 = vmatpush1.bf16.msra.mxu0 %v2316
  %3276 = vmatprep.subr.bf16.mxu0 %v2321
  %3277 = vmatpush1.bf16.msra.mxu0 %v2320
  %3278 = vmatprep.subr.bf16.mxu0 %v2325
  %3279 = vmatpush1.bf16.msra.mxu0 %v2324
  %3280 = vmatprep.subr.bf16.mxu0 %v2329
  %3281 = vmatpush1.bf16.msra.mxu0 %v2328
  %3282 = vmatprep.subr.bf16.mxu0 %v2333
  %3283 = vmatpush1.bf16.msra.mxu0 %v2332
  %3284 = vmatprep.subr.bf16.mxu0 %v2337
  %3285 = vmatpush1.bf16.msra.mxu0 %v2336
  %3286 = vmatprep.mubr.bf16.mxu0 %v585
  %3287 = vmatmul.mubr.bf16.gmra.mrb[0].mxu0 %v584
  %v3288 = vpop.f32.mrb[0].mxu0
  %v3289 = vadd.f32 %v3248, %v3288
  %v3290 = vpop.f32.mrb[0].mxu0
  %v3291 = vadd.f32 %v3250, %v3290
  %v3292 = vpop.f32.mrb[0].mxu0
  %v3293 = vpop.f32.mrb[0].mxu0
  %3294 = vdwg.mxu0
  %3295 = vmatprep.subr.bf16.mxu0 %v2341
  %3296 = vmatpush1.bf16.msra.mxu0 %v2340
  %3297 = vmatprep.subr.bf16.mxu0 %v2345
  %3298 = vmatpush1.bf16.msra.mxu0 %v2344
  %3299 = vmatprep.subr.bf16.mxu0 %v2349
  %3300 = vmatpush1.bf16.msra.mxu0 %v2348
  %3301 = vmatprep.subr.bf16.mxu0 %v2353
  %3302 = vmatpush1.bf16.msra.mxu0 %v2352
  %3303 = vmatprep.subr.bf16.mxu0 %v2357
  %3304 = vmatpush1.bf16.msra.mxu0 %v2356
  %3305 = vmatprep.subr.bf16.mxu0 %v2361
  %3306 = vmatpush1.bf16.msra.mxu0 %v2360
  %3307 = vmatprep.subr.bf16.mxu0 %v2365
  %3308 = vmatpush1.bf16.msra.mxu0 %v2364
  %3309 = vmatprep.subr.bf16.mxu0 %v2369
  %3310 = vmatpush1.bf16.msra.mxu0 %v2368
  %3311 = vmatprep.subr.bf16.mxu0 %v2373
  %3312 = vmatpush1.bf16.msra.mxu0 %v2372
  %3313 = vmatprep.subr.bf16.mxu0 %v2377
  %3314 = vmatpush1.bf16.msra.mxu0 %v2376
  %3315 = vmatprep.subr.bf16.mxu0 %v2381
  %3316 = vmatpush1.bf16.msra.mxu0 %v2380
  %3317 = vmatprep.subr.bf16.mxu0 %v2385
  %3318 = vmatpush1.bf16.msra.mxu0 %v2384
  %3319 = vmatprep.subr.bf16.mxu0 %v2389
  %3320 = vmatpush1.bf16.msra.mxu0 %v2388
  %3321 = vmatprep.subr.bf16.mxu0 %v2393
  %3322 = vmatpush1.bf16.msra.mxu0 %v2392
  %3323 = vmatprep.subr.bf16.mxu0 %v2397
  %3324 = vmatpush1.bf16.msra.mxu0 %v2396
  %3325 = vmatprep.subr.bf16.mxu0 %v2401
  %3326 = vmatpush1.bf16.msra.mxu0 %v2400
  %3327 = vmatprep.mubr.bf16.mxu0 %v587
  %3328 = vmatmul.mubr.bf16.gmra.mrb[0].mxu0 %v586
  %v3329 = vpop.f32.mrb[0].mxu0
  %v3330 = vadd.f32 %v3289, %v3329
  %v3331 = vpop.f32.mrb[0].mxu0
  %v3332 = vadd.f32 %v3291, %v3331
  %v3333 = vpop.f32.mrb[0].mxu0
  %v3334 = vpop.f32.mrb[0].mxu0
  %3335 = vdwg.mxu0
  %3336 = vmatprep.subr.bf16.mxu0 %v2405
  %3337 = vmatpush1.bf16.msra.mxu0 %v2404
  %3338 = vmatprep.subr.bf16.mxu0 %v2409
  %3339 = vmatpush1.bf16.msra.mxu0 %v2408
  %3340 = vmatprep.subr.bf16.mxu0 %v2413
  %3341 = vmatpush1.bf16.msra.mxu0 %v2412
  %3342 = vmatprep.subr.bf16.mxu0 %v2417
  %3343 = vmatpush1.bf16.msra.mxu0 %v2416
  %3344 = vmatprep.subr.bf16.mxu0 %v2421
  %3345 = vmatpush1.bf16.msra.mxu0 %v2420
  %3346 = vmatprep.subr.bf16.mxu0 %v2425
  %3347 = vmatpush1.bf16.msra.mxu0 %v2424
  %3348 = vmatprep.subr.bf16.mxu0 %v2429
  %3349 = vmatpush1.bf16.msra.mxu0 %v2428
  %3350 = vmatprep.subr.bf16.mxu0 %v2433
  %3351 = vmatpush1.bf16.msra.mxu0 %v2432
  %3352 = vmatprep.subr.bf16.mxu0 %v2437
  %3353 = vmatpush1.bf16.msra.mxu0 %v2436
  %3354 = vmatprep.subr.bf16.mxu0 %v2441
  %3355 = vmatpush1.bf16.msra.mxu0 %v2440
  %3356 = vmatprep.subr.bf16.mxu0 %v2445
  %3357 = vmatpush1.bf16.msra.mxu0 %v2444
  %3358 = vmatprep.subr.bf16.mxu0 %v2449
  %3359 = vmatpush1.bf16.msra.mxu0 %v2448
  %3360 = vmatprep.subr.bf16.mxu0 %v2453
  %3361 = vmatpush1.bf16.msra.mxu0 %v2452
  %3362 = vmatprep.subr.bf16.mxu0 %v2457
  %3363 = vmatpush1.bf16.msra.mxu0 %v2456
  %3364 = vmatprep.subr.bf16.mxu0 %v2461
  %3365 = vmatpush1.bf16.msra.mxu0 %v2460
  %3366 = vmatprep.subr.bf16.mxu0 %v2465
  %3367 = vmatpush1.bf16.msra.mxu0 %v2464
  %3368 = vmatprep.mubr.bf16.mxu0 %v589
  %3369 = vmatmul.mubr.bf16.gmra.mrb[0].mxu0 %v588
  %v3370 = vpop.f32.mrb[0].mxu0
  %v3371 = vadd.f32 %v3330, %v3370
  %v3372 = vpop.f32.mrb[0].mxu0
  %v3373 = vadd.f32 %v3332, %v3372
  %v3374 = vpop.f32.mrb[0].mxu0
  %v3375 = vpop.f32.mrb[0].mxu0
  %3376 = vdwg.mxu0
  %3377 = vmatprep.subr.bf16.mxu0 %v2469
  %3378 = vmatpush1.bf16.msra.mxu0 %v2468
  %3379 = vmatprep.subr.bf16.mxu0 %v2473
  %3380 = vmatpush1.bf16.msra.mxu0 %v2472
  %3381 = vmatprep.subr.bf16.mxu0 %v2477
  %3382 = vmatpush1.bf16.msra.mxu0 %v2476
  %3383 = vmatprep.subr.bf16.mxu0 %v2481
  %3384 = vmatpush1.bf16.msra.mxu0 %v2480
  %3385 = vmatprep.subr.bf16.mxu0 %v2485
  %3386 = vmatpush1.bf16.msra.mxu0 %v2484
  %3387 = vmatprep.subr.bf16.mxu0 %v2489
  %3388 = vmatpush1.bf16.msra.mxu0 %v2488
  %3389 = vmatprep.subr.bf16.mxu0 %v2493
  %3390 = vmatpush1.bf16.msra.mxu0 %v2492
  %3391 = vmatprep.subr.bf16.mxu0 %v2497
  %3392 = vmatpush1.bf16.msra.mxu0 %v2496
  %3393 = vmatprep.subr.bf16.mxu0 %v2501
  %3394 = vmatpush1.bf16.msra.mxu0 %v2500
  %3395 = vmatprep.subr.bf16.mxu0 %v2505
  %3396 = vmatpush1.bf16.msra.mxu0 %v2504
  %3397 = vmatprep.subr.bf16.mxu0 %v2509
  %3398 = vmatpush1.bf16.msra.mxu0 %v2508
  %3399 = vmatprep.subr.bf16.mxu0 %v2513
  %3400 = vmatpush1.bf16.msra.mxu0 %v2512
  %3401 = vmatprep.subr.bf16.mxu0 %v2517
  %3402 = vmatpush1.bf16.msra.mxu0 %v2516
  %3403 = vmatprep.subr.bf16.mxu0 %v2521
  %3404 = vmatpush1.bf16.msra.mxu0 %v2520
  %3405 = vmatprep.subr.bf16.mxu0 %v2525
  %3406 = vmatpush1.bf16.msra.mxu0 %v2524
  %3407 = vmatprep.subr.bf16.mxu0 %v2529
  %3408 = vmatpush1.bf16.msra.mxu0 %v2528
  %3409 = vmatprep.mubr.bf16.mxu0 %v591
  %3410 = vmatmul.mubr.bf16.gmra.mrb[0].mxu0 %v590
  %v3411 = vpop.f32.mrb[0].mxu0
  %v3412 = vadd.f32 %v3371, %v3411
  %v3413 = vpop.f32.mrb[0].mxu0
  %v3414 = vadd.f32 %v3373, %v3413
  %v3415 = vpop.f32.mrb[0].mxu0
  %v3416 = vpop.f32.mrb[0].mxu0
  %3417 = vdwg.mxu0
  %3418 = vmatprep.subr.bf16.mxu0 %v2533
  %3419 = vmatpush1.bf16.msra.mxu0 %v2532
  %3420 = vmatprep.subr.bf16.mxu0 %v2537
  %3421 = vmatpush1.bf16.msra.mxu0 %v2536
  %3422 = vmatprep.subr.bf16.mxu0 %v2541
  %3423 = vmatpush1.bf16.msra.mxu0 %v2540
  %3424 = vmatprep.subr.bf16.mxu0 %v2545
  %3425 = vmatpush1.bf16.msra.mxu0 %v2544
  %3426 = vmatprep.subr.bf16.mxu0 %v2549
  %3427 = vmatpush1.bf16.msra.mxu0 %v2548
  %3428 = vmatprep.subr.bf16.mxu0 %v2553
  %3429 = vmatpush1.bf16.msra.mxu0 %v2552
  %3430 = vmatprep.subr.bf16.mxu0 %v2557
  %3431 = vmatpush1.bf16.msra.mxu0 %v2556
  %3432 = vmatprep.subr.bf16.mxu0 %v2561
  %3433 = vmatpush1.bf16.msra.mxu0 %v2560
  %3434 = vmatprep.subr.bf16.mxu0 %v2565
  %3435 = vmatpush1.bf16.msra.mxu0 %v2564
  %3436 = vmatprep.subr.bf16.mxu0 %v2569
  %3437 = vmatpush1.bf16.msra.mxu0 %v2568
  %3438 = vmatprep.subr.bf16.mxu0 %v2573
  %3439 = vmatpush1.bf16.msra.mxu0 %v2572
  %3440 = vmatprep.subr.bf16.mxu0 %v2577
  %3441 = vmatpush1.bf16.msra.mxu0 %v2576
  %3442 = vmatprep.subr.bf16.mxu0 %v2581
  %3443 = vmatpush1.bf16.msra.mxu0 %v2580
  %3444 = vmatprep.subr.bf16.mxu0 %v2585
  %3445 = vmatpush1.bf16.msra.mxu0 %v2584
  %3446 = vmatprep.subr.bf16.mxu0 %v2589
  %3447 = vmatpush1.bf16.msra.mxu0 %v2588
  %3448 = vmatprep.subr.bf16.mxu0 %v2593
  %3449 = vmatpush1.bf16.msra.mxu0 %v2592
  %3450 = vmatprep.mubr.bf16.mxu0 %v593
  %3451 = vmatmul.mubr.bf16.gmra.mrb[0].mxu0 %v592
  %v3452 = vpop.f32.mrb[0].mxu0
  %v3453 = vadd.f32 %v3412, %v3452
  %v3454 = vpop.f32.mrb[0].mxu0
  %v3455 = vadd.f32 %v3414, %v3454
  %v3456 = vpop.f32.mrb[0].mxu0
  %v3457 = vpop.f32.mrb[0].mxu0
  %3458 = vdwg.mxu0
  %3459 = vmatprep.subr.bf16.mxu0 %v2597
  %3460 = vmatpush1.bf16.msra.mxu0 %v2596
  %3461 = vmatprep.subr.bf16.mxu0 %v2601
  %3462 = vmatpush1.bf16.msra.mxu0 %v2600
  %3463 = vmatprep.subr.bf16.mxu0 %v2605
  %3464 = vmatpush1.bf16.msra.mxu0 %v2604
  %3465 = vmatprep.subr.bf16.mxu0 %v2609
  %3466 = vmatpush1.bf16.msra.mxu0 %v2608
  %3467 = vmatprep.subr.bf16.mxu0 %v2613
  %3468 = vmatpush1.bf16.msra.mxu0 %v2612
  %3469 = vmatprep.subr.bf16.mxu0 %v2617
  %3470 = vmatpush1.bf16.msra.mxu0 %v2616
  %3471 = vmatprep.subr.bf16.mxu0 %v2621
  %3472 = vmatpush1.bf16.msra.mxu0 %v2620
  %3473 = vmatprep.subr.bf16.mxu0 %v2625
  %3474 = vmatpush1.bf16.msra.mxu0 %v2624
  %3475 = vmatprep.subr.bf16.mxu0 %v2629
  %3476 = vmatpush1.bf16.msra.mxu0 %v2628
  %3477 = vmatprep.subr.bf16.mxu0 %v2633
  %3478 = vmatpush1.bf16.msra.mxu0 %v2632
  %3479 = vmatprep.subr.bf16.mxu0 %v2637
  %3480 = vmatpush1.bf16.msra.mxu0 %v2636
  %3481 = vmatprep.subr.bf16.mxu0 %v2641
  %3482 = vmatpush1.bf16.msra.mxu0 %v2640
  %3483 = vmatprep.subr.bf16.mxu0 %v2645
  %3484 = vmatpush1.bf16.msra.mxu0 %v2644
  %3485 = vmatprep.subr.bf16.mxu0 %v2649
  %3486 = vmatpush1.bf16.msra.mxu0 %v2648
  %3487 = vmatprep.subr.bf16.mxu0 %v2653
  %3488 = vmatpush1.bf16.msra.mxu0 %v2652
  %3489 = vmatprep.subr.bf16.mxu0 %v2657
  %3490 = vmatpush1.bf16.msra.mxu0 %v2656
  %3491 = vmatprep.mubr.bf16.mxu0 %v595
  %3492 = vmatmul.mubr.bf16.gmra.mrb[0].mxu0 %v594
  %v3493 = vpop.f32.mrb[0].mxu0
  %v3494 = vadd.f32 %v3453, %v3493
  %v3495 = vpop.f32.mrb[0].mxu0
  %v3496 = vadd.f32 %v3455, %v3495
  %v3497 = vpop.f32.mrb[0].mxu0
  %v3498 = vpop.f32.mrb[0].mxu0
  %3499 = vdwg.mxu0
  %3500 = vmatprep.subr.bf16.mxu0 %v2151
  %3501 = vmatpush1.bf16.msra.mxu0 %v2150
  %3502 = vmatprep.subr.bf16.mxu0 %v2155
  %3503 = vmatpush1.bf16.msra.mxu0 %v2154
  %3504 = vmatprep.subr.bf16.mxu0 %v2159
  %3505 = vmatpush1.bf16.msra.mxu0 %v2158
  %3506 = vmatprep.subr.bf16.mxu0 %v2163
  %3507 = vmatpush1.bf16.msra.mxu0 %v2162
  %3508 = vmatprep.subr.bf16.mxu0 %v2167
  %3509 = vmatpush1.bf16.msra.mxu0 %v2166
  %3510 = vmatprep.subr.bf16.mxu0 %v2171
  %3511 = vmatpush1.bf16.msra.mxu0 %v2170
  %3512 = vmatprep.subr.bf16.mxu0 %v2175
  %3513 = vmatpush1.bf16.msra.mxu0 %v2174
  %3514 = vmatprep.subr.bf16.mxu0 %v2179
  %3515 = vmatpush1.bf16.msra.mxu0 %v2178
  %3516 = vmatprep.subr.bf16.mxu0 %v2183
  %3517 = vmatpush1.bf16.msra.mxu0 %v2182
  %3518 = vmatprep.subr.bf16.mxu0 %v2187
  %3519 = vmatpush1.bf16.msra.mxu0 %v2186
  %3520 = vmatprep.subr.bf16.mxu0 %v2191
  %3521 = vmatpush1.bf16.msra.mxu0 %v2190
  %3522 = vmatprep.subr.bf16.mxu0 %v2195
  %3523 = vmatpush1.bf16.msra.mxu0 %v2194
  %3524 = vmatprep.subr.bf16.mxu0 %v2199
  %3525 = vmatpush1.bf16.msra.mxu0 %v2198
  %3526 = vmatprep.subr.bf16.mxu0 %v2203
  %3527 = vmatpush1.bf16.msra.mxu0 %v2202
  %3528 = vmatprep.subr.bf16.mxu0 %v2207
  %3529 = vmatpush1.bf16.msra.mxu0 %v2206
  %3530 = vmatprep.subr.bf16.mxu0 %v2211
  %3531 = vmatpush1.bf16.msra.mxu0 %v2210
  %3532 = vmatprep.mubr.bf16.mxu0 %v581
  %3533 = vmatmul.mubr.bf16.gmra.mrb[0].mxu0 %v580
  %v3534 = vpop.f32.mrb[0].mxu0
  %v3535 = vadd.f32 %v547, %v3534
  %v3536 = vpop.f32.mrb[0].mxu0
  %v3537 = vadd.f32 %v551, %v3536
  %v3538 = vpop.f32.mrb[0].mxu0
  %v3539 = vpop.f32.mrb[0].mxu0
  %3540 = vdwg.mxu0
  %3541 = vmatprep.subr.bf16.mxu0 %v2215
  %3542 = vmatpush1.bf16.msra.mxu0 %v2214
  %3543 = vmatprep.subr.bf16.mxu0 %v2219
  %3544 = vmatpush1.bf16.msra.mxu0 %v2218
  %3545 = vmatprep.subr.bf16.mxu0 %v2223
  %3546 = vmatpush1.bf16.msra.mxu0 %v2222
  %3547 = vmatprep.subr.bf16.mxu0 %v2227
  %3548 = vmatpush1.bf16.msra.mxu0 %v2226
  %3549 = vmatprep.subr.bf16.mxu0 %v2231
  %3550 = vmatpush1.bf16.msra.mxu0 %v2230
  %3551 = vmatprep.subr.bf16.mxu0 %v2235
  %3552 = vmatpush1.bf16.msra.mxu0 %v2234
  %3553 = vmatprep.subr.bf16.mxu0 %v2239
  %3554 = vmatpush1.bf16.msra.mxu0 %v2238
  %3555 = vmatprep.subr.bf16.mxu0 %v2243
  %3556 = vmatpush1.bf16.msra.mxu0 %v2242
  %3557 = vmatprep.subr.bf16.mxu0 %v2247
  %3558 = vmatpush1.bf16.msra.mxu0 %v2246
  %3559 = vmatprep.subr.bf16.mxu0 %v2251
  %3560 = vmatpush1.bf16.msra.mxu0 %v2250
  %3561 = vmatprep.subr.bf16.mxu0 %v2255
  %3562 = vmatpush1.bf16.msra.mxu0 %v2254
  %3563 = vmatprep.subr.bf16.mxu0 %v2259
  %3564 = vmatpush1.bf16.msra.mxu0 %v2258
  %3565 = vmatprep.subr.bf16.mxu0 %v2263
  %3566 = vmatpush1.bf16.msra.mxu0 %v2262
  %3567 = vmatprep.subr.bf16.mxu0 %v2267
  %3568 = vmatpush1.bf16.msra.mxu0 %v2266
  %3569 = vmatprep.subr.bf16.mxu0 %v2271
  %3570 = vmatpush1.bf16.msra.mxu0 %v2270
  %3571 = vmatprep.subr.bf16.mxu0 %v2275
  %3572 = vmatpush1.bf16.msra.mxu0 %v2274
  %3573 = vmatprep.mubr.bf16.mxu0 %v583
  %3574 = vmatmul.mubr.bf16.gmra.mrb[0].mxu0 %v582
  %v3575 = vpop.f32.mrb[0].mxu0
  %v3576 = vadd.f32 %v3535, %v3575
  %v3577 = vpop.f32.mrb[0].mxu0
  %v3578 = vadd.f32 %v3537, %v3577
  %v3579 = vpop.f32.mrb[0].mxu0
  %v3580 = vpop.f32.mrb[0].mxu0
  %3581 = vdwg.mxu0
  %3582 = vmatprep.subr.bf16.mxu0 %v2279
  %3583 = vmatpush1.bf16.msra.mxu0 %v2278
  %3584 = vmatprep.subr.bf16.mxu0 %v2283
  %3585 = vmatpush1.bf16.msra.mxu0 %v2282
  %3586 = vmatprep.subr.bf16.mxu0 %v2287
  %3587 = vmatpush1.bf16.msra.mxu0 %v2286
  %3588 = vmatprep.subr.bf16.mxu0 %v2291
  %3589 = vmatpush1.bf16.msra.mxu0 %v2290
  %3590 = vmatprep.subr.bf16.mxu0 %v2295
  %3591 = vmatpush1.bf16.msra.mxu0 %v2294
  %3592 = vmatprep.subr.bf16.mxu0 %v2299
  %3593 = vmatpush1.bf16.msra.mxu0 %v2298
  %3594 = vmatprep.subr.bf16.mxu0 %v2303
  %3595 = vmatpush1.bf16.msra.mxu0 %v2302
  %3596 = vmatprep.subr.bf16.mxu0 %v2307
  %3597 = vmatpush1.bf16.msra.mxu0 %v2306
  %3598 = vmatprep.subr.bf16.mxu0 %v2311
  %3599 = vmatpush1.bf16.msra.mxu0 %v2310
  %3600 = vmatprep.subr.bf16.mxu0 %v2315
  %3601 = vmatpush1.bf16.msra.mxu0 %v2314
  %3602 = vmatprep.subr.bf16.mxu0 %v2319
  %3603 = vmatpush1.bf16.msra.mxu0 %v2318
  %3604 = vmatprep.subr.bf16.mxu0 %v2323
  %3605 = vmatpush1.bf16.msra.mxu0 %v2322
  %3606 = vmatprep.subr.bf16.mxu0 %v2327
  %3607 = vmatpush1.bf16.msra.mxu0 %v2326
  %3608 = vmatprep.subr.bf16.mxu0 %v2331
  %3609 = vmatpush1.bf16.msra.mxu0 %v2330
  %3610 = vmatprep.subr.bf16.mxu0 %v2335
  %3611 = vmatpush1.bf16.msra.mxu0 %v2334
  %3612 = vmatprep.subr.bf16.mxu0 %v2339
  %3613 = vmatpush1.bf16.msra.mxu0 %v2338
  %3614 = vmatprep.mubr.bf16.mxu0 %v585
  %3615 = vmatmul.mubr.bf16.gmra.mrb[0].mxu0 %v584
  %v3616 = vpop.f32.mrb[0].mxu0
  %v3617 = vadd.f32 %v3576, %v3616
  %v3618 = vpop.f32.mrb[0].mxu0
  %v3619 = vadd.f32 %v3578, %v3618
  %v3620 = vpop.f32.mrb[0].mxu0
  %v3621 = vpop.f32.mrb[0].mxu0
  %3622 = vdwg.mxu0
  %3623 = vmatprep.subr.bf16.mxu0 %v2343
  %3624 = vmatpush1.bf16.msra.mxu0 %v2342
  %3625 = vmatprep.subr.bf16.mxu0 %v2347
  %3626 = vmatpush1.bf16.msra.mxu0 %v2346
  %3627 = vmatprep.subr.bf16.mxu0 %v2351
  %3628 = vmatpush1.bf16.msra.mxu0 %v2350
  %3629 = vmatprep.subr.bf16.mxu0 %v2355
  %3630 = vmatpush1.bf16.msra.mxu0 %v2354
  %3631 = vmatprep.subr.bf16.mxu0 %v2359
  %3632 = vmatpush1.bf16.msra.mxu0 %v2358
  %3633 = vmatprep.subr.bf16.mxu0 %v2363
  %3634 = vmatpush1.bf16.msra.mxu0 %v2362
  %3635 = vmatprep.subr.bf16.mxu0 %v2367
  %3636 = vmatpush1.bf16.msra.mxu0 %v2366
  %3637 = vmatprep.subr.bf16.mxu0 %v2371
  %3638 = vmatpush1.bf16.msra.mxu0 %v2370
  %3639 = vmatprep.subr.bf16.mxu0 %v2375
  %3640 = vmatpush1.bf16.msra.mxu0 %v2374
  %3641 = vmatprep.subr.bf16.mxu0 %v2379
  %3642 = vmatpush1.bf16.msra.mxu0 %v2378
  %3643 = vmatprep.subr.bf16.mxu0 %v2383
  %3644 = vmatpush1.bf16.msra.mxu0 %v2382
  %3645 = vmatprep.subr.bf16.mxu0 %v2387
  %3646 = vmatpush1.bf16.msra.mxu0 %v2386
  %3647 = vmatprep.subr.bf16.mxu0 %v2391
  %3648 = vmatpush1.bf16.msra.mxu0 %v2390
  %3649 = vmatprep.subr.bf16.mxu0 %v2395
  %3650 = vmatpush1.bf16.msra.mxu0 %v2394
  %3651 = vmatprep.subr.bf16.mxu0 %v2399
  %3652 = vmatpush1.bf16.msra.mxu0 %v2398
  %3653 = vmatprep.subr.bf16.mxu0 %v2403
  %3654 = vmatpush1.bf16.msra.mxu0 %v2402
  %3655 = vmatprep.mubr.bf16.mxu0 %v587
  %3656 = vmatmul.mubr.bf16.gmra.mrb[0].mxu0 %v586
  %v3657 = vpop.f32.mrb[0].mxu0
  %v3658 = vadd.f32 %v3617, %v3657
  %v3659 = vpop.f32.mrb[0].mxu0
  %v3660 = vadd.f32 %v3619, %v3659
  %v3661 = vpop.f32.mrb[0].mxu0
  %v3662 = vpop.f32.mrb[0].mxu0
  %3663 = vdwg.mxu0
  %3664 = vmatprep.subr.bf16.mxu0 %v2407
  %3665 = vmatpush1.bf16.msra.mxu0 %v2406
  %3666 = vmatprep.subr.bf16.mxu0 %v2411
  %3667 = vmatpush1.bf16.msra.mxu0 %v2410
  %3668 = vmatprep.subr.bf16.mxu0 %v2415
  %3669 = vmatpush1.bf16.msra.mxu0 %v2414
  %3670 = vmatprep.subr.bf16.mxu0 %v2419
  %3671 = vmatpush1.bf16.msra.mxu0 %v2418
  %3672 = vmatprep.subr.bf16.mxu0 %v2423
  %3673 = vmatpush1.bf16.msra.mxu0 %v2422
  %3674 = vmatprep.subr.bf16.mxu0 %v2427
  %3675 = vmatpush1.bf16.msra.mxu0 %v2426
  %3676 = vmatprep.subr.bf16.mxu0 %v2431
  %3677 = vmatpush1.bf16.msra.mxu0 %v2430
  %3678 = vmatprep.subr.bf16.mxu0 %v2435
  %3679 = vmatpush1.bf16.msra.mxu0 %v2434
  %3680 = vmatprep.subr.bf16.mxu0 %v2439
  %3681 = vmatpush1.bf16.msra.mxu0 %v2438
  %3682 = vmatprep.subr.bf16.mxu0 %v2443
  %3683 = vmatpush1.bf16.msra.mxu0 %v2442
  %3684 = vmatprep.subr.bf16.mxu0 %v2447
  %3685 = vmatpush1.bf16.msra.mxu0 %v2446
  %3686 = vmatprep.subr.bf16.mxu0 %v2451
  %3687 = vmatpush1.bf16.msra.mxu0 %v2450
  %3688 = vmatprep.subr.bf16.mxu0 %v2455
  %3689 = vmatpush1.bf16.msra.mxu0 %v2454
  %3690 = vmatprep.subr.bf16.mxu0 %v2459
  %3691 = vmatpush1.bf16.msra.mxu0 %v2458
  %3692 = vmatprep.subr.bf16.mxu0 %v2463
  %3693 = vmatpush1.bf16.msra.mxu0 %v2462
  %3694 = vmatprep.subr.bf16.mxu0 %v2467
  %3695 = vmatpush1.bf16.msra.mxu0 %v2466
  %3696 = vmatprep.mubr.bf16.mxu0 %v589
  %3697 = vmatmul.mubr.bf16.gmra.mrb[0].mxu0 %v588
  %v3698 = vpop.f32.mrb[0].mxu0
  %v3699 = vadd.f32 %v3658, %v3698
  %v3700 = vpop.f32.mrb[0].mxu0
  %v3701 = vadd.f32 %v3660, %v3700
  %v3702 = vpop.f32.mrb[0].mxu0
  %v3703 = vpop.f32.mrb[0].mxu0
  %3704 = vdwg.mxu0
  %3705 = vmatprep.subr.bf16.mxu0 %v2471
  %3706 = vmatpush1.bf16.msra.mxu0 %v2470
  %3707 = vmatprep.subr.bf16.mxu0 %v2475
  %3708 = vmatpush1.bf16.msra.mxu0 %v2474
  %3709 = vmatprep.subr.bf16.mxu0 %v2479
  %3710 = vmatpush1.bf16.msra.mxu0 %v2478
  %3711 = vmatprep.subr.bf16.mxu0 %v2483
  %3712 = vmatpush1.bf16.msra.mxu0 %v2482
  %3713 = vmatprep.subr.bf16.mxu0 %v2487
  %3714 = vmatpush1.bf16.msra.mxu0 %v2486
  %3715 = vmatprep.subr.bf16.mxu0 %v2491
  %3716 = vmatpush1.bf16.msra.mxu0 %v2490
  %3717 = vmatprep.subr.bf16.mxu0 %v2495
  %3718 = vmatpush1.bf16.msra.mxu0 %v2494
  %3719 = vmatprep.subr.bf16.mxu0 %v2499
  %3720 = vmatpush1.bf16.msra.mxu0 %v2498
  %3721 = vmatprep.subr.bf16.mxu0 %v2503
  %3722 = vmatpush1.bf16.msra.mxu0 %v2502
  %3723 = vmatprep.subr.bf16.mxu0 %v2507
  %3724 = vmatpush1.bf16.msra.mxu0 %v2506
  %3725 = vmatprep.subr.bf16.mxu0 %v2511
  %3726 = vmatpush1.bf16.msra.mxu0 %v2510
  %3727 = vmatprep.subr.bf16.mxu0 %v2515
  %3728 = vmatpush1.bf16.msra.mxu0 %v2514
  %3729 = vmatprep.subr.bf16.mxu0 %v2519
  %3730 = vmatpush1.bf16.msra.mxu0 %v2518
  %3731 = vmatprep.subr.bf16.mxu0 %v2523
  %3732 = vmatpush1.bf16.msra.mxu0 %v2522
  %3733 = vmatprep.subr.bf16.mxu0 %v2527
  %3734 = vmatpush1.bf16.msra.mxu0 %v2526
  %3735 = vmatprep.subr.bf16.mxu0 %v2531
  %3736 = vmatpush1.bf16.msra.mxu0 %v2530
  %3737 = vmatprep.mubr.bf16.mxu0 %v591
  %3738 = vmatmul.mubr.bf16.gmra.mrb[0].mxu0 %v590
  %v3739 = vpop.f32.mrb[0].mxu0
  %v3740 = vadd.f32 %v3699, %v3739
  %v3741 = vpop.f32.mrb[0].mxu0
  %v3742 = vadd.f32 %v3701, %v3741
  %v3743 = vpop.f32.mrb[0].mxu0
  %v3744 = vpop.f32.mrb[0].mxu0
  %3745 = vdwg.mxu0
  %3746 = vmatprep.subr.bf16.mxu0 %v2535
  %3747 = vmatpush1.bf16.msra.mxu0 %v2534
  %3748 = vmatprep.subr.bf16.mxu0 %v2539
  %3749 = vmatpush1.bf16.msra.mxu0 %v2538
  %3750 = vmatprep.subr.bf16.mxu0 %v2543
  %3751 = vmatpush1.bf16.msra.mxu0 %v2542
  %3752 = vmatprep.subr.bf16.mxu0 %v2547
  %3753 = vmatpush1.bf16.msra.mxu0 %v2546
  %3754 = vmatprep.subr.bf16.mxu0 %v2551
  %3755 = vmatpush1.bf16.msra.mxu0 %v2550
  %3756 = vmatprep.subr.bf16.mxu0 %v2555
  %3757 = vmatpush1.bf16.msra.mxu0 %v2554
  %3758 = vmatprep.subr.bf16.mxu0 %v2559
  %3759 = vmatpush1.bf16.msra.mxu0 %v2558
  %3760 = vmatprep.subr.bf16.mxu0 %v2563
  %3761 = vmatpush1.bf16.msra.mxu0 %v2562
  %3762 = vmatprep.subr.bf16.mxu0 %v2567
  %3763 = vmatpush1.bf16.msra.mxu0 %v2566
  %3764 = vmatprep.subr.bf16.mxu0 %v2571
  %3765 = vmatpush1.bf16.msra.mxu0 %v2570
  %3766 = vmatprep.subr.bf16.mxu0 %v2575
  %3767 = vmatpush1.bf16.msra.mxu0 %v2574
  %3768 = vmatprep.subr.bf16.mxu0 %v2579
  %3769 = vmatpush1.bf16.msra.mxu0 %v2578
  %3770 = vmatprep.subr.bf16.mxu0 %v2583
  %3771 = vmatpush1.bf16.msra.mxu0 %v2582
  %3772 = vmatprep.subr.bf16.mxu0 %v2587
  %3773 = vmatpush1.bf16.msra.mxu0 %v2586
  %3774 = vmatprep.subr.bf16.mxu0 %v2591
  %3775 = vmatpush1.bf16.msra.mxu0 %v2590
  %3776 = vmatprep.subr.bf16.mxu0 %v2595
  %3777 = vmatpush1.bf16.msra.mxu0 %v2594
  %3778 = vmatprep.mubr.bf16.mxu0 %v593
  %3779 = vmatmul.mubr.bf16.gmra.mrb[0].mxu0 %v592
  %v3780 = vpop.f32.mrb[0].mxu0
  %v3781 = vadd.f32 %v3740, %v3780
  %v3782 = vpop.f32.mrb[0].mxu0
  %v3783 = vadd.f32 %v3742, %v3782
  %v3784 = vpop.f32.mrb[0].mxu0
  %v3785 = vpop.f32.mrb[0].mxu0
  %3786 = vdwg.mxu0
  %3787 = vmatprep.subr.bf16.mxu0 %v2599
  %3788 = vmatpush1.bf16.msra.mxu0 %v2598
  %3789 = vmatprep.subr.bf16.mxu0 %v2603
  %3790 = vmatpush1.bf16.msra.mxu0 %v2602
  %3791 = vmatprep.subr.bf16.mxu0 %v2607
  %3792 = vmatpush1.bf16.msra.mxu0 %v2606
  %3793 = vmatprep.subr.bf16.mxu0 %v2611
  %3794 = vmatpush1.bf16.msra.mxu0 %v2610
  %3795 = vmatprep.subr.bf16.mxu0 %v2615
  %3796 = vmatpush1.bf16.msra.mxu0 %v2614
  %3797 = vmatprep.subr.bf16.mxu0 %v2619
  %3798 = vmatpush1.bf16.msra.mxu0 %v2618
  %3799 = vmatprep.subr.bf16.mxu0 %v2623
  %3800 = vmatpush1.bf16.msra.mxu0 %v2622
  %3801 = vmatprep.subr.bf16.mxu0 %v2627
  %3802 = vmatpush1.bf16.msra.mxu0 %v2626
  %3803 = vmatprep.subr.bf16.mxu0 %v2631
  %3804 = vmatpush1.bf16.msra.mxu0 %v2630
  %3805 = vmatprep.subr.bf16.mxu0 %v2635
  %3806 = vmatpush1.bf16.msra.mxu0 %v2634
  %3807 = vmatprep.subr.bf16.mxu0 %v2639
  %3808 = vmatpush1.bf16.msra.mxu0 %v2638
  %3809 = vmatprep.subr.bf16.mxu0 %v2643
  %3810 = vmatpush1.bf16.msra.mxu0 %v2642
  %3811 = vmatprep.subr.bf16.mxu0 %v2647
  %3812 = vmatpush1.bf16.msra.mxu0 %v2646
  %3813 = vmatprep.subr.bf16.mxu0 %v2651
  %3814 = vmatpush1.bf16.msra.mxu0 %v2650
  %3815 = vmatprep.subr.bf16.mxu0 %v2655
  %3816 = vmatpush1.bf16.msra.mxu0 %v2654
  %3817 = vmatprep.subr.bf16.mxu0 %v2659
  %3818 = vmatpush1.bf16.msra.mxu0 %v2658
  %3819 = vmatprep.mubr.bf16.mxu0 %v595
  %3820 = vmatmul.mubr.bf16.gmra.mrb[0].mxu0 %v594
  %v3821 = vpop.f32.mrb[0].mxu0
  %v3822 = vadd.f32 %v3781, %v3821
  %v3823 = vpop.f32.mrb[0].mxu0
  %v3824 = vadd.f32 %v3783, %v3823
  %v3825 = vpop.f32.mrb[0].mxu0
  %v3826 = vpop.f32.mrb[0].mxu0
  %3827 = vdwg.mxu0
  %v3828 = vmax.f32 %v3494, 0.0
  %v3829 = vmax.f32 %v3496, 0.0
  %v3830 = vmax.f32 %v3822, 0.0
  %v3831 = vmax.f32 %v3824, 0.0
  %v3832 = vpack.c.bf16 %v3828, %v3828
  %v3833 = vpack.c.bf16 %v3829, %v3829
  %v3834 = vpack.c.bf16 %v3830, %v3830
  %v3835 = vpack.c.bf16 %v3831, %v3831
  %v3840 = vunpack.c.l.b16 %v3832
  %v3841 = vunpack.c.l.b16 %v3833
  %v3842 = vunpack.c.l.b16 %v3834
  %v3843 = vunpack.c.l.b16 %v3835
  %v3844 = vpack.c.b16 %v3841, %v3840
  %v3845 = vpack.c.b16 %v3843, %v3842
  %3848 = vst [vmem:[%s3] sm:$0xff] %v3844
  %3849 = vst [vmem:[%s3 + $0x8] sm:$0xff] %v3845
  // Predicated region
  $region14: #{lenet5_forward.10} parent=0 // pred_check
    _
  $region15: #{lenet5_forward.10} parent=0 // pred_check_branch
    %3851 = sbr.rel (0) target = $region17
  $region16: #{lenet5_forward.10} parent=0 // pred_region
    _
  $region17: #{lenet5_forward.10} parent=0 // pred_fallthru
    _
  // Predicated region
  $region18: #{lenet5_forward.10} parent=0 // pred_check
    _
  $region19: #{lenet5_forward.10} parent=0 // pred_check_branch
    %3853 = sbr.rel (0) target = $region21
  $region20: #{lenet5_forward.10} parent=0 // pred_region
    _
  $region21: #{lenet5_forward.10} parent=0 // pred_fallthru
    _

</llo_original>
